<compile_context>
chip_gen: v6e
topology: v6e:2x2x1
jax: 0.10.0
libtpu: 0.0.40
codegen_flags: <defaults>
</compile_context>

<pallas_src>
import jax
import jax.numpy as jnp
import numpy as np
from jax.experimental import pallas as pl
from jax.experimental.pallas import tpu as pltpu

EPS = 1e-5
_OUT_PAD = 128          # lane-dense padded output width (true output width is 2)


def mlp_teacher_kernel(feats_ref, labels_ref,
                       w1a_ref, w1bf_ref, b1_ref, g1_ref, be1_ref,
                       w2_ref, b2_ref, g2_ref, be2_ref,
                       w3_ref, b3_ref,
                       out_ref):
    B = feats_ref.shape[0]
    n_classes = w1bf_ref.shape[0]
    inv_b = jnp.float32(1.0 / B)

    # ---- label one-hot (embedding table pre-folded into w1bf) --------------
    lbl = labels_ref[...]                                           # (B, 1) i32
    class_ids = jax.lax.broadcasted_iota(jnp.int32, (B, n_classes), 1)
    onehot = (class_ids == lbl).astype(jnp.float32)                 # (B, C)

    # ---- fc1 + ReLU (default MXU precision, f32 accumulation) --------------
    h1 = jnp.dot(feats_ref[...], w1a_ref[...], preferred_element_type=jnp.float32)
    h1 = h1 + jnp.dot(onehot, w1bf_ref[...], preferred_element_type=jnp.float32)
    h1 = jnp.maximum(h1 + b1_ref[...], 0.0)

    # ---- BN1: one-pass sum / sum-of-squares, fused scale/shift -------------
    mu1 = jnp.sum(h1, axis=0, keepdims=True) * inv_b
    ms1 = jnp.sum(h1 * h1, axis=0, keepdims=True) * inv_b
    var1 = ms1 - mu1 * mu1                                          # biased var
    scale1 = jax.lax.rsqrt(var1 + EPS) * g1_ref[...]
    shift1 = be1_ref[...] - mu1 * scale1
    h1 = h1 * scale1 + shift1

    # ---- fc2 + ReLU + BN2 ---------------------------------------------------
    h2 = jnp.dot(h1, w2_ref[...], preferred_element_type=jnp.float32) + b2_ref[...]
    h2 = jnp.maximum(h2, 0.0)
    mu2 = jnp.sum(h2, axis=0, keepdims=True) * inv_b
    ms2 = jnp.sum(h2 * h2, axis=0, keepdims=True) * inv_b
    var2 = ms2 - mu2 * mu2
    scale2 = jax.lax.rsqrt(var2 + EPS) * g2_ref[...]
    shift2 = be2_ref[...] - mu2 * scale2
    h2 = h2 * scale2 + shift2

    # ---- fc3 + ReLU (lane-dense: weights zero-padded to 128 columns) -------
    out = jnp.dot(h2, w3_ref[...], preferred_element_type=jnp.float32) + b3_ref[...]
    out_ref[...] = jnp.maximum(out, 0.0)


def mlp_teacher_forward(x, params):
    """x: (B, 1 + input_size); column 0 holds the energy-class label."""
    B = x.shape[0]
    input_size = x.shape[1] - 1
    feats = x[:, 1:].astype(jnp.float32)                     # (B, input_size)
    labels = x[:, 0].astype(jnp.int32).reshape(B, 1)         # (B, 1)

    # Fold the embedding table into fc1's embedding half once (exact algebra,
    # done at high precision since it is tiny param preprocessing):
    #   emd(label) @ W1b == onehot(label) @ (emd @ W1b)
    w1bf = jnp.dot(params["emd"], params["w1b"],
                   precision=jax.lax.Precision.HIGHEST)       # (C, hidden)
    n_classes = w1bf.shape[0]

    # Lane-dense output: pad fc3 to 128 output columns (zeros); slice outside.
    h1_dim = params["w1a"].shape[1]
    h2_dim = params["w2"].shape[1]
    w3p = jnp.zeros((h2_dim, _OUT_PAD), jnp.float32).at[:, :2].set(params["w3"])
    b3p = jnp.zeros((1, _OUT_PAD), jnp.float32).at[:, :2].set(params["b3"])

    args = (feats, labels,
            params["w1a"], w1bf, params["b1"], params["g1"], params["be1"],
            params["w2"], params["b2"], params["g2"], params["be2"],
            w3p, b3p)

    # VMEM budget: all operands + whole-batch activations must be resident
    # (BatchNorm needs full-batch statistics in this monolithic kernel).
    in_elems = sum(int(np.prod(a.shape)) for a in args)
    act_elems = B * (h1_dim + h2_dim + _OUT_PAD)              # h1, h2, out
    need_bytes = 4 * (in_elems + act_elems)
    limit = int(min(56 * 1024 * 1024, max(3 * need_bytes, 16 * 1024 * 1024)))
    if 3 * need_bytes > 56 * 1024 * 1024:
        raise ValueError(
            "Batch too large for the monolithic MLP_teacher kernel; "
            "see TODO(synk) about a batch-tiled two-phase-BN grid.")

    # Advisory cost hint for XLA's scheduler around the custom call.
    flops = 2 * B * (input_size * h1_dim + n_classes * h1_dim
                     + h1_dim * h2_dim + h2_dim * _OUT_PAD)
    cost = pl.CostEstimate(
        flops=int(flops),
        transcendentals=int(h1_dim + h2_dim),                 # one rsqrt / BN feature
        bytes_accessed=int(4 * (in_elems + B * _OUT_PAD)))

    out = pl.pallas_call(
        mlp_teacher_kernel,
        out_shape=jax.ShapeDtypeStruct((B, _OUT_PAD), jnp.float32),
        in_specs=[pl.BlockSpec(memory_space=pltpu.MemorySpace.VMEM)] * len(args),
        out_specs=pl.BlockSpec(memory_space=pltpu.MemorySpace.VMEM),
        compiler_params=pltpu.CompilerParams(vmem_limit_bytes=limit),
        cost_estimate=cost,
    )(*args)

    out2 = out[:, :2]
    return out2, out2                                         # module returns (output, output)


def init_params(key, input_size=6, hidden_size=512, embed_size=6, energy_classes=3):
    """Deterministic synthetic init (PyTorch-style uniform(+-1/sqrt(fan_in)))."""
    k_emd, k1, k2, k3 = jax.random.split(key, 4)

    def linear(k, fan_in, fan_out):
        kw, kb = jax.random.split(k)
        bound = float(fan_in) ** -0.5
        w = jax.random.uniform(kw, (fan_in, fan_out), jnp.float32, -bound, bound)
        b = jax.random.uniform(kb, (1, fan_out), jnp.float32, -bound, bound)
        return w, b

    emd = jax.random.normal(k_emd, (energy_classes, embed_size), jnp.float32)
    w1, b1 = linear(k1, input_size + embed_size, hidden_size)
    w2, b2 = linear(k2, hidden_size, hidden_size * 2)
    w3, b3 = linear(k3, hidden_size * 2, 2)

    return {
        "emd": emd,
        "w1a": w1[:input_size], "w1b": w1[input_size:], "b1": b1,
        "g1": jnp.ones((1, hidden_size), jnp.float32),
        "be1": jnp.zeros((1, hidden_size), jnp.float32),
        "w2": w2, "b2": b2,
        "g2": jnp.ones((1, hidden_size * 2), jnp.float32),
        "be2": jnp.zeros((1, hidden_size * 2), jnp.float32),
        "w3": w3, "b3": b3,
    }


def ref_forward(x, p):
    """Pure-JAX reference mirroring the PyTorch forward (training-mode BN)."""
    lbl = x[:, 0].astype(jnp.int32)
    feats = x[:, 1:]
    label_fea = p["emd"][lbl]
    inp = jnp.concatenate([feats, label_fea], axis=1)
    w1 = jnp.concatenate([p["w1a"], p["w1b"]], axis=0)

    def bn(h, g, b):
        mu = h.mean(0, keepdims=True)
        var = ((h - mu) ** 2).mean(0, keepdims=True)
        return (h - mu) * jax.lax.rsqrt(var + EPS) * g + b

    h1 = bn(jnp.maximum(inp @ w1 + p["b1"], 0.0), p["g1"], p["be1"])
    h2 = bn(jnp.maximum(h1 @ p["w2"] + p["b2"], 0.0), p["g2"], p["be2"])
    return jnp.maximum(h2 @ p["w3"] + p["b3"], 0.0)


if __name__ == "__main__":
    key = jax.random.PRNGKey(0)
    kx, kl, kp = jax.random.split(key, 3)

    # Batch is a multiple of 8 (and >= 128) to fill MXU sublanes / M dimension.
    B, input_size, energy_classes = 128, 6, 3
    feats = jax.random.normal(kx, (B, input_size), jnp.float32)
    labels = jax.random.randint(kl, (B,), 0, energy_classes).astype(jnp.float32)
    x = jnp.concatenate([labels[:, None], feats], axis=1)     # (B, 7): [label, 6 features]

    params = init_params(kp)

    out1, out2 = mlp_teacher_forward(x, params)
    jax.block_until_ready(out1)

    # Tolerance reflects default (single-pass bf16) MXU precision amplified
    # through two training-mode BatchNorm stages.
    ref = ref_forward(x, params)
    np.testing.assert_allclose(np.asarray(out1), np.asarray(ref), rtol=3e-2, atol=3e-2)
    assert out1.shape == (B, 2) and out2.shape == (B, 2)

    print("KERNEL_OK")
</pallas_src>

<mosaic_0001>
module attributes {stable_mosaic.version = 11 : i64} {
  func.func @mlp_teacher_kernel(%arg0: memref<128x6xf32, #tpu.memory_space<vmem>>, %arg1: memref<128x1xi32, #tpu.memory_space<vmem>>, %arg2: memref<6x512xf32, #tpu.memory_space<vmem>>, %arg3: memref<3x512xf32, #tpu.memory_space<vmem>>, %arg4: memref<1x512xf32, #tpu.memory_space<vmem>>, %arg5: memref<1x512xf32, #tpu.memory_space<vmem>>, %arg6: memref<1x512xf32, #tpu.memory_space<vmem>>, %arg7: memref<512x1024xf32, #tpu.memory_space<vmem>>, %arg8: memref<1x1024xf32, #tpu.memory_space<vmem>>, %arg9: memref<1x1024xf32, #tpu.memory_space<vmem>>, %arg10: memref<1x1024xf32, #tpu.memory_space<vmem>>, %arg11: memref<1024x128xf32, #tpu.memory_space<vmem>>, %arg12: memref<1x128xf32, #tpu.memory_space<vmem>>, %arg13: memref<128x128xf32, #tpu.memory_space<vmem>>) attributes {dimension_semantics = [], scalar_prefetch = 0 : i64, scratch_operands = 0 : i64, tpu.core_type = #tpu.core_type<tc>} {
    %c0 = arith.constant 0 : index
    %c0_0 = arith.constant 0 : index
    %0 = vector.load %arg1[%c0, %c0_0] : memref<128x1xi32, #tpu.memory_space<vmem>>, vector<128x1xi32>
    %1 = tpu.iota {dimensions = array<i32: 1>} : vector<128x3xi32>
    %2 = vector.broadcast %0 : vector<128x1xi32> to vector<128x3xi32>
    %3 = arith.cmpi eq, %1, %2 : vector<128x3xi32>
    %4 = arith.extui %3 : vector<128x3xi1> to vector<128x3xi32>
    %5 = arith.sitofp %4 : vector<128x3xi32> to vector<128x3xf32>
    %c0_1 = arith.constant 0 : index
    %c0_2 = arith.constant 0 : index
    %6 = vector.load %arg0[%c0_1, %c0_2] : memref<128x6xf32, #tpu.memory_space<vmem>>, vector<128x6xf32>
    %c0_3 = arith.constant 0 : index
    %c0_4 = arith.constant 0 : index
    %7 = vector.load %arg2[%c0_3, %c0_4] : memref<6x512xf32, #tpu.memory_space<vmem>>, vector<6x512xf32>
    %cst = arith.constant dense<0.000000e+00> : vector<128x512xf32>
    %8 = tpu.matmul %6, %7, %cst {dimension_numbers = #tpu.dot_dimension_numbers<[1], [0], [0], [1], [0, 0, 1, 1], [], []>} : vector<128x6xf32>, vector<6x512xf32>, vector<128x512xf32> -> vector<128x512xf32>
    %c0_5 = arith.constant 0 : index
    %c0_6 = arith.constant 0 : index
    %9 = vector.load %arg3[%c0_5, %c0_6] : memref<3x512xf32, #tpu.memory_space<vmem>>, vector<3x512xf32>
    %cst_7 = arith.constant dense<0.000000e+00> : vector<128x512xf32>
    %10 = tpu.matmul %5, %9, %cst_7 {dimension_numbers = #tpu.dot_dimension_numbers<[1], [0], [0], [1], [0, 0, 1, 1], [], []>} : vector<128x3xf32>, vector<3x512xf32>, vector<128x512xf32> -> vector<128x512xf32>
    %11 = arith.addf %8, %10 : vector<128x512xf32>
    %c0_8 = arith.constant 0 : index
    %c0_9 = arith.constant 0 : index
    %12 = vector.load %arg4[%c0_8, %c0_9] : memref<1x512xf32, #tpu.memory_space<vmem>>, vector<1x512xf32>
    %13 = vector.broadcast %12 : vector<1x512xf32> to vector<128x512xf32>
    %14 = arith.addf %11, %13 : vector<128x512xf32>
    %cst_10 = arith.constant 0.000000e+00 : f32
    %15 = vector.broadcast %cst_10 : f32 to vector<128x512xf32>
    %16 = arith.maximumf %14, %15 : vector<128x512xf32>
    %cst_11 = arith.constant dense<0.000000e+00> : vector<512xf32>
    %17 = vector.multi_reduction <add>, %16, %cst_11 [0] : vector<128x512xf32> to vector<512xf32>
    %18 = vector.shape_cast %17 : vector<512xf32> to vector<1x512xf32>
    %cst_12 = arith.constant 7.812500e-03 : f32
    %19 = vector.broadcast %cst_12 : f32 to vector<1x512xf32>
    %20 = arith.mulf %18, %19 : vector<1x512xf32>
    %21 = arith.mulf %16, %16 : vector<128x512xf32>
    %cst_13 = arith.constant dense<0.000000e+00> : vector<512xf32>
    %22 = vector.multi_reduction <add>, %21, %cst_13 [0] : vector<128x512xf32> to vector<512xf32>
    %23 = vector.shape_cast %22 : vector<512xf32> to vector<1x512xf32>
    %cst_14 = arith.constant 7.812500e-03 : f32
    %24 = vector.broadcast %cst_14 : f32 to vector<1x512xf32>
    %25 = arith.mulf %23, %24 : vector<1x512xf32>
    %26 = arith.mulf %20, %20 : vector<1x512xf32>
    %27 = arith.subf %25, %26 : vector<1x512xf32>
    %cst_15 = arith.constant 9.99999974E-6 : f32
    %28 = vector.broadcast %cst_15 : f32 to vector<1x512xf32>
    %29 = arith.addf %27, %28 : vector<1x512xf32>
    %30 = math.rsqrt %29 : vector<1x512xf32>
    %c0_16 = arith.constant 0 : index
    %c0_17 = arith.constant 0 : index
    %31 = vector.load %arg5[%c0_16, %c0_17] : memref<1x512xf32, #tpu.memory_space<vmem>>, vector<1x512xf32>
    %32 = arith.mulf %30, %31 : vector<1x512xf32>
    %c0_18 = arith.constant 0 : index
    %c0_19 = arith.constant 0 : index
    %33 = vector.load %arg6[%c0_18, %c0_19] : memref<1x512xf32, #tpu.memory_space<vmem>>, vector<1x512xf32>
    %34 = arith.mulf %20, %32 : vector<1x512xf32>
    %35 = arith.subf %33, %34 : vector<1x512xf32>
    %36 = vector.broadcast %32 : vector<1x512xf32> to vector<128x512xf32>
    %37 = arith.mulf %16, %36 : vector<128x512xf32>
    %38 = vector.broadcast %35 : vector<1x512xf32> to vector<128x512xf32>
    %39 = arith.addf %37, %38 : vector<128x512xf32>
    %c0_20 = arith.constant 0 : index
    %c0_21 = arith.constant 0 : index
    %40 = vector.load %arg7[%c0_20, %c0_21] : memref<512x1024xf32, #tpu.memory_space<vmem>>, vector<512x1024xf32>
    %cst_22 = arith.constant dense<0.000000e+00> : vector<128x1024xf32>
    %41 = tpu.matmul %39, %40, %cst_22 {dimension_numbers = #tpu.dot_dimension_numbers<[1], [0], [0], [1], [0, 0, 1, 1], [], []>} : vector<128x512xf32>, vector<512x1024xf32>, vector<128x1024xf32> -> vector<128x1024xf32>
    %c0_23 = arith.constant 0 : index
    %c0_24 = arith.constant 0 : index
    %42 = vector.load %arg8[%c0_23, %c0_24] : memref<1x1024xf32, #tpu.memory_space<vmem>>, vector<1x1024xf32>
    %43 = vector.broadcast %42 : vector<1x1024xf32> to vector<128x1024xf32>
    %44 = arith.addf %41, %43 : vector<128x1024xf32>
    %cst_25 = arith.constant 0.000000e+00 : f32
    %45 = vector.broadcast %cst_25 : f32 to vector<128x1024xf32>
    %46 = arith.maximumf %44, %45 : vector<128x1024xf32>
    %cst_26 = arith.constant dense<0.000000e+00> : vector<1024xf32>
    %47 = vector.multi_reduction <add>, %46, %cst_26 [0] : vector<128x1024xf32> to vector<1024xf32>
    %48 = vector.shape_cast %47 : vector<1024xf32> to vector<1x1024xf32>
    %cst_27 = arith.constant 7.812500e-03 : f32
    %49 = vector.broadcast %cst_27 : f32 to vector<1x1024xf32>
    %50 = arith.mulf %48, %49 : vector<1x1024xf32>
    %51 = arith.mulf %46, %46 : vector<128x1024xf32>
    %cst_28 = arith.constant dense<0.000000e+00> : vector<1024xf32>
    %52 = vector.multi_reduction <add>, %51, %cst_28 [0] : vector<128x1024xf32> to vector<1024xf32>
    %53 = vector.shape_cast %52 : vector<1024xf32> to vector<1x1024xf32>
    %cst_29 = arith.constant 7.812500e-03 : f32
    %54 = vector.broadcast %cst_29 : f32 to vector<1x1024xf32>
    %55 = arith.mulf %53, %54 : vector<1x1024xf32>
    %56 = arith.mulf %50, %50 : vector<1x1024xf32>
    %57 = arith.subf %55, %56 : vector<1x1024xf32>
    %cst_30 = arith.constant 9.99999974E-6 : f32
    %58 = vector.broadcast %cst_30 : f32 to vector<1x1024xf32>
    %59 = arith.addf %57, %58 : vector<1x1024xf32>
    %60 = math.rsqrt %59 : vector<1x1024xf32>
    %c0_31 = arith.constant 0 : index
    %c0_32 = arith.constant 0 : index
    %61 = vector.load %arg9[%c0_31, %c0_32] : memref<1x1024xf32, #tpu.memory_space<vmem>>, vector<1x1024xf32>
    %62 = arith.mulf %60, %61 : vector<1x1024xf32>
    %c0_33 = arith.constant 0 : index
    %c0_34 = arith.constant 0 : index
    %63 = vector.load %arg10[%c0_33, %c0_34] : memref<1x1024xf32, #tpu.memory_space<vmem>>, vector<1x1024xf32>
    %64 = arith.mulf %50, %62 : vector<1x1024xf32>
    %65 = arith.subf %63, %64 : vector<1x1024xf32>
    %66 = vector.broadcast %62 : vector<1x1024xf32> to vector<128x1024xf32>
    %67 = arith.mulf %46, %66 : vector<128x1024xf32>
    %68 = vector.broadcast %65 : vector<1x1024xf32> to vector<128x1024xf32>
    %69 = arith.addf %67, %68 : vector<128x1024xf32>
    %c0_35 = arith.constant 0 : index
    %c0_36 = arith.constant 0 : index
    %70 = vector.load %arg11[%c0_35, %c0_36] : memref<1024x128xf32, #tpu.memory_space<vmem>>, vector<1024x128xf32>
    %cst_37 = arith.constant dense<0.000000e+00> : vector<128x128xf32>
    %71 = tpu.matmul %69, %70, %cst_37 {dimension_numbers = #tpu.dot_dimension_numbers<[1], [0], [0], [1], [0, 0, 1, 1], [], []>} : vector<128x1024xf32>, vector<1024x128xf32>, vector<128x128xf32> -> vector<128x128xf32>
    %c0_38 = arith.constant 0 : index
    %c0_39 = arith.constant 0 : index
    %72 = vector.load %arg12[%c0_38, %c0_39] : memref<1x128xf32, #tpu.memory_space<vmem>>, vector<1x128xf32>
    %73 = vector.broadcast %72 : vector<1x128xf32> to vector<128x128xf32>
    %74 = arith.addf %71, %73 : vector<128x128xf32>
    %cst_40 = arith.constant 0.000000e+00 : f32
    %75 = vector.broadcast %cst_40 : f32 to vector<128x128xf32>
    %76 = arith.maximumf %74, %75 : vector<128x128xf32>
    %c0_41 = arith.constant 0 : index
    %c0_42 = arith.constant 0 : index
    %77 = vector.load %arg13[%c0_41, %c0_42] : memref<128x128xf32, #tpu.memory_space<vmem>>, vector<128x128xf32>
    tpu.vector_store %arg13[%c0_41, %c0_42], %76 {strides = array<i32>} : memref<128x128xf32, #tpu.memory_space<vmem>>, vector<128x128xf32>,
    return
  }
}

</mosaic_0001>

<llo_original>
// kernel: tpu_custom_call.1
$region0: #{tpu_custom_call.1}
  #allocation0 [shape = 'u32[]', space=smem, size = 0x4, offset = 0x4, fixed_abs, tag = 'smem constant byte address 0x4 - core index']
  #allocation1 [shape = 'u32[144,128]{1,0:T(1,128)}', space=vmem, size = 0x12000, scoped, tag = 'internal scratch']
  %s0 = inlined_call_operand.vmem [shape: f32[128,6], index: 0, kind: input, shape index: {}]
  %s1 = inlined_call_operand.vmem [shape: s32[128,1], index: 1, kind: input, shape index: {}]
  %s2 = inlined_call_operand.hbm [shape: f32[6,512], index: 2, kind: input, shape index: {}]
  %s3 = inlined_call_operand.hbm [shape: f32[3,512], index: 3, kind: input, shape index: {}]
  %s4 = inlined_call_operand.hbm [shape: f32[1,512], index: 4, kind: input, shape index: {}]
  %s5 = inlined_call_operand.hbm [shape: f32[1,512], index: 5, kind: input, shape index: {}]
  %s6 = inlined_call_operand.hbm [shape: f32[1,512], index: 6, kind: input, shape index: {}]
  %s7 = inlined_call_operand.hbm [shape: f32[512,1024], index: 7, kind: input, shape index: {}]
  %s8 = inlined_call_operand.hbm [shape: f32[1,1024], index: 8, kind: input, shape index: {}]
  %s9 = inlined_call_operand.hbm [shape: f32[1,1024], index: 9, kind: input, shape index: {}]
  %s10 = inlined_call_operand.hbm [shape: f32[1,1024], index: 10, kind: input, shape index: {}]
  %s11 = inlined_call_operand.hbm [shape: f32[1024,128], index: 11, kind: input, shape index: {}]
  %s12 = inlined_call_operand.hbm [shape: f32[1,128], index: 12, kind: input, shape index: {}]
  %s13 = inlined_call_operand.hbm [shape: f32[128,128], index: 13, kind: output, shape index: {}]
  %s14 = sld [smem:[#allocation0]]
  $region106: #{tpu_custom_call.1} parent=0
    _
  %s16 = ssub.s32 1, %s14
  %s17 = scalar_select 0, %s16, %s14
  $region1: #{tpu_custom_call.1} parent=0
    #allocation2 [shape = 'u8[16384]{0}', space=vmem, size = 0x4000, scoped, tag = 'input window, operand 2, single buffered']
    #allocation3 [shape = 's32[1]{0}', space=sflag, size = 0x4, scoped, tag = 'scoped memory for tpu_custom_call.1']
    #allocation4 [shape = 's32[1]{0}', space=sflag, size = 0x4, scoped, tag = 'scoped memory for tpu_custom_call.1']
    #allocation5 [shape = 'u8[8192]{0}', space=vmem, size = 0x2000, scoped, tag = 'input window, operand 3, single buffered']
    #allocation6 [shape = 's32[1]{0}', space=sflag, size = 0x4, scoped, tag = 'scoped memory for tpu_custom_call.1']
    #allocation7 [shape = 'u8[2048]{0}', space=vmem, size = 0x800, scoped, tag = 'input window, operand 4, single buffered']
    #allocation8 [shape = 'u8[2048]{0}', space=vmem, size = 0x800, scoped, tag = 'input window, operand 5, single buffered']
    #allocation9 [shape = 's32[1]{0}', space=sflag, size = 0x4, scoped, tag = 'scoped memory for tpu_custom_call.1']
    #allocation10 [shape = 'u8[2048]{0}', space=vmem, size = 0x800, scoped, tag = 'input window, operand 6, single buffered']
    #allocation11 [shape = 'u8[2097152]{0}', space=vmem, size = 0x200000, scoped, tag = 'input window, operand 7, single buffered']
    #allocation12 [shape = 's32[1]{0}', space=sflag, size = 0x4, scoped, tag = 'scoped memory for tpu_custom_call.1']
    #allocation13 [shape = 'u8[4096]{0}', space=vmem, size = 0x1000, scoped, tag = 'input window, operand 8, single buffered']
    #allocation14 [shape = 'u8[4096]{0}', space=vmem, size = 0x1000, scoped, tag = 'input window, operand 9, single buffered']
    #allocation15 [shape = 's32[1]{0}', space=sflag, size = 0x4, scoped, tag = 'scoped memory for tpu_custom_call.1']
    #allocation16 [shape = 'u8[4096]{0}', space=vmem, size = 0x1000, scoped, tag = 'input window, operand 10, single buffered']
    #allocation17 [shape = 'u8[524288]{0}', space=vmem, size = 0x80000, scoped, tag = 'input window, operand 11, single buffered']
    #allocation18 [shape = 's32[1]{0}', space=sflag, size = 0x4, scoped, tag = 'scoped memory for tpu_custom_call.1']
    #allocation19 [shape = 'u8[512]{0}', space=vmem, size = 0x400, scoped, tag = 'input window, operand 12, single buffered']
    #allocation20 [shape = 'u8[65536]{0}', space=vmem, size = 0x10000, scoped, tag = 'output window, operand 0, single buffered']
    %18 = vsyncpa [#allocation3], 0
    %19 = vsyncpa [#allocation6], 0
    %20 = vsyncpa [#allocation9], 0
    %21 = vsyncpa [#allocation12], 0
    %22 = vsyncpa [#allocation15], 0
    %23 = vsyncpa [#allocation18], 0
    %24 = vsyncpa [#allocation4], 0
    // Predicated region
    $region2: #{tpu_custom_call.1} parent=1 // pred_check
      _
    $region3: #{tpu_custom_call.1} parent=1 // pred_check_branch
      %26 = sbr.rel (0) target = $region5
    $region4: #{tpu_custom_call.1} parent=1 // pred_region
      _
    $region5: #{tpu_custom_call.1} parent=1 // pred_fallthru
      _
    // Predicated region
    $region6: #{tpu_custom_call.1} parent=1 // pred_check
      _
    $region7: #{tpu_custom_call.1} parent=1 // pred_check_branch
      %28 = sbr.rel (0) target = $region9
    $region8: #{tpu_custom_call.1} parent=1 // pred_region
      _
    $region9: #{tpu_custom_call.1} parent=1 // pred_fallthru
      _
    // Predicated region
    $region10: #{tpu_custom_call.1} parent=1 // pred_check
      _
    $region11: #{tpu_custom_call.1} parent=1 // pred_check_branch
      %30 = sbr.rel (0) target = $region13
    $region12: #{tpu_custom_call.1} parent=1 // pred_region
      %s32 = ssub.s32 512, 512
      %33 = vsyncadd [#allocation3], %s32
      %s35 = sshll.u32 [#allocation2], 4
      %s36 = int_to_ptr.vmem [resolvable:$true] %s35
      %38 = dma.hbm_to_vmem [thread:$0]  %s2, 512, %s36, [#allocation3]
    $region13: #{tpu_custom_call.1} parent=1 // pred_fallthru
      _
    // Predicated region
    $region14: #{tpu_custom_call.1} parent=1 // pred_check
      _
    $region15: #{tpu_custom_call.1} parent=1 // pred_check_branch
      %40 = sbr.rel (0) target = $region17
    $region16: #{tpu_custom_call.1} parent=1 // pred_region
      %s42 = ssub.s32 256, 256
      %43 = vsyncadd [#allocation6], %s42
      %s45 = sshll.u32 [#allocation5], 4
      %s46 = int_to_ptr.vmem [resolvable:$true] %s45
      %48 = dma.hbm_to_vmem [thread:$0]  %s3, 256, %s46, [#allocation6]
    $region17: #{tpu_custom_call.1} parent=1 // pred_fallthru
      _
    // Predicated region
    $region18: #{tpu_custom_call.1} parent=1 // pred_check
      _
    $region19: #{tpu_custom_call.1} parent=1 // pred_check_branch
      %50 = sbr.rel (0) target = $region21
    $region20: #{tpu_custom_call.1} parent=1 // pred_region
      %s52 = ssub.s32 64, 64
      %53 = vsyncadd [#allocation6], %s52
      %s55 = sshll.u32 [#allocation7], 4
      %s56 = int_to_ptr.vmem [resolvable:$true] %s55
      %58 = dma.hbm_to_vmem [thread:$0]  %s4, 64, %s56, [#allocation6]
    $region21: #{tpu_custom_call.1} parent=1 // pred_fallthru
      _
    // Predicated region
    $region22: #{tpu_custom_call.1} parent=1 // pred_check
      _
    $region23: #{tpu_custom_call.1} parent=1 // pred_check_branch
      %60 = sbr.rel (0) target = $region25
    $region24: #{tpu_custom_call.1} parent=1 // pred_region
      %s62 = ssub.s32 64, 64
      %63 = vsyncadd [#allocation9], %s62
      %s65 = sshll.u32 [#allocation8], 4
      %s66 = int_to_ptr.vmem [resolvable:$true] %s65
      %68 = dma.hbm_to_vmem [thread:$0]  %s5, 64, %s66, [#allocation9]
    $region25: #{tpu_custom_call.1} parent=1 // pred_fallthru
      _
    // Predicated region
    $region26: #{tpu_custom_call.1} parent=1 // pred_check
      _
    $region27: #{tpu_custom_call.1} parent=1 // pred_check_branch
      %70 = sbr.rel (0) target = $region29
    $region28: #{tpu_custom_call.1} parent=1 // pred_region
      %s72 = ssub.s32 64, 64
      %73 = vsyncadd [#allocation9], %s72
      %s75 = sshll.u32 [#allocation10], 4
      %s76 = int_to_ptr.vmem [resolvable:$true] %s75
      %78 = dma.hbm_to_vmem [thread:$0]  %s6, 64, %s76, [#allocation9]
    $region29: #{tpu_custom_call.1} parent=1 // pred_fallthru
      _
    // Predicated region
    $region30: #{tpu_custom_call.1} parent=1 // pred_check
      _
    $region31: #{tpu_custom_call.1} parent=1 // pred_check_branch
      %80 = sbr.rel (0) target = $region33
    $region32: #{tpu_custom_call.1} parent=1 // pred_region
      %s82 = ssub.s32 65536, 65536
      %83 = vsyncadd [#allocation12], %s82
      %s84 = sshll.u32 [#allocation11], 4
      %s85 = int_to_ptr.vmem [resolvable:$true] %s84
      %90 = dma.hbm_to_vmem [thread:$0]  %s7, 65536, %s85, [#allocation12], 1024, 1024, 64
    $region33: #{tpu_custom_call.1} parent=1 // pred_fallthru
      _
    // Predicated region
    $region34: #{tpu_custom_call.1} parent=1 // pred_check
      _
    $region35: #{tpu_custom_call.1} parent=1 // pred_check_branch
      %92 = sbr.rel (0) target = $region37
    $region36: #{tpu_custom_call.1} parent=1 // pred_region
      %s94 = ssub.s32 128, 128
      %95 = vsyncadd [#allocation12], %s94
      %s97 = sshll.u32 [#allocation13], 4
      %s98 = int_to_ptr.vmem [resolvable:$true] %s97
      %100 = dma.hbm_to_vmem [thread:$0]  %s8, 128, %s98, [#allocation12]
    $region37: #{tpu_custom_call.1} parent=1 // pred_fallthru
      _
    // Predicated region
    $region38: #{tpu_custom_call.1} parent=1 // pred_check
      _
    $region39: #{tpu_custom_call.1} parent=1 // pred_check_branch
      %102 = sbr.rel (0) target = $region41
    $region40: #{tpu_custom_call.1} parent=1 // pred_region
      %s104 = ssub.s32 128, 128
      %105 = vsyncadd [#allocation15], %s104
      %s107 = sshll.u32 [#allocation14], 4
      %s108 = int_to_ptr.vmem [resolvable:$true] %s107
      %110 = dma.hbm_to_vmem [thread:$0]  %s9, 128, %s108, [#allocation15]
    $region41: #{tpu_custom_call.1} parent=1 // pred_fallthru
      _
    // Predicated region
    $region42: #{tpu_custom_call.1} parent=1 // pred_check
      _
    $region43: #{tpu_custom_call.1} parent=1 // pred_check_branch
      %112 = sbr.rel (0) target = $region45
    $region44: #{tpu_custom_call.1} parent=1 // pred_region
      %s114 = ssub.s32 128, 128
      %115 = vsyncadd [#allocation15], %s114
      %s117 = sshll.u32 [#allocation16], 4
      %s118 = int_to_ptr.vmem [resolvable:$true] %s117
      %120 = dma.hbm_to_vmem [thread:$0]  %s10, 128, %s118, [#allocation15]
    $region45: #{tpu_custom_call.1} parent=1 // pred_fallthru
      _
    // Predicated region
    $region46: #{tpu_custom_call.1} parent=1 // pred_check
      _
    $region47: #{tpu_custom_call.1} parent=1 // pred_check_branch
      %122 = sbr.rel (0) target = $region49
    $region48: #{tpu_custom_call.1} parent=1 // pred_region
      %s124 = ssub.s32 16384, 16384
      %125 = vsyncadd [#allocation18], %s124
      %s126 = sshll.u32 [#allocation17], 4
      %s127 = int_to_ptr.vmem [resolvable:$true] %s126
      %132 = dma.hbm_to_vmem [thread:$0]  %s11, 16384, %s127, [#allocation18], 128, 128, 8
    $region49: #{tpu_custom_call.1} parent=1 // pred_fallthru
      _
    // Predicated region
    $region50: #{tpu_custom_call.1} parent=1 // pred_check
      _
    $region51: #{tpu_custom_call.1} parent=1 // pred_check_branch
      %134 = sbr.rel (0) target = $region53
    $region52: #{tpu_custom_call.1} parent=1 // pred_region
      %s136 = ssub.s32 16, 16
      %137 = vsyncadd [#allocation18], %s136
      %s139 = sshll.u32 [#allocation19], 4
      %s140 = int_to_ptr.vmem [resolvable:$true] %s139
      %142 = dma.hbm_to_vmem [thread:$0]  %s12, 16, %s140, [#allocation18]
    $region53: #{tpu_custom_call.1} parent=1 // pred_fallthru
      _
    // Predicated region
    $region54: #{tpu_custom_call.1} parent=1 // pred_check
      _
    $region55: #{tpu_custom_call.1} parent=1 // pred_check_branch
      %144 = sbr.rel (0) target = $region57
    $region56: #{tpu_custom_call.1} parent=1 // pred_region
      %145 = dma.done [#allocation3], 512
    $region57: #{tpu_custom_call.1} parent=1 // pred_fallthru
      _
    // Predicated region
    $region58: #{tpu_custom_call.1} parent=1 // pred_check
      _
    $region59: #{tpu_custom_call.1} parent=1 // pred_check_branch
      %147 = sbr.rel (0) target = $region61
    $region60: #{tpu_custom_call.1} parent=1 // pred_region
      %148 = dma.done [#allocation6], 256
    $region61: #{tpu_custom_call.1} parent=1 // pred_fallthru
      _
    // Predicated region
    $region62: #{tpu_custom_call.1} parent=1 // pred_check
      _
    $region63: #{tpu_custom_call.1} parent=1 // pred_check_branch
      %150 = sbr.rel (0) target = $region65
    $region64: #{tpu_custom_call.1} parent=1 // pred_region
      %151 = dma.done [#allocation6], 64
    $region65: #{tpu_custom_call.1} parent=1 // pred_fallthru
      _
    // Predicated region
    $region66: #{tpu_custom_call.1} parent=1 // pred_check
      _
    $region67: #{tpu_custom_call.1} parent=1 // pred_check_branch
      %153 = sbr.rel (0) target = $region69
    $region68: #{tpu_custom_call.1} parent=1 // pred_region
      %154 = dma.done [#allocation9], 64
    $region69: #{tpu_custom_call.1} parent=1 // pred_fallthru
      _
    // Predicated region
    $region70: #{tpu_custom_call.1} parent=1 // pred_check
      _
    $region71: #{tpu_custom_call.1} parent=1 // pred_check_branch
      %156 = sbr.rel (0) target = $region73
    $region72: #{tpu_custom_call.1} parent=1 // pred_region
      %157 = dma.done [#allocation9], 64
    $region73: #{tpu_custom_call.1} parent=1 // pred_fallthru
      _
    // Predicated region
    $region74: #{tpu_custom_call.1} parent=1 // pred_check
      _
    $region75: #{tpu_custom_call.1} parent=1 // pred_check_branch
      %159 = sbr.rel (0) target = $region77
    $region76: #{tpu_custom_call.1} parent=1 // pred_region
      %160 = dma.done [#allocation12], 65536
    $region77: #{tpu_custom_call.1} parent=1 // pred_fallthru
      _
    // Predicated region
    $region78: #{tpu_custom_call.1} parent=1 // pred_check
      _
    $region79: #{tpu_custom_call.1} parent=1 // pred_check_branch
      %162 = sbr.rel (0) target = $region81
    $region80: #{tpu_custom_call.1} parent=1 // pred_region
      %163 = dma.done [#allocation12], 128
    $region81: #{tpu_custom_call.1} parent=1 // pred_fallthru
      _
    // Predicated region
    $region82: #{tpu_custom_call.1} parent=1 // pred_check
      _
    $region83: #{tpu_custom_call.1} parent=1 // pred_check_branch
      %165 = sbr.rel (0) target = $region85
    $region84: #{tpu_custom_call.1} parent=1 // pred_region
      %166 = dma.done [#allocation15], 128
    $region85: #{tpu_custom_call.1} parent=1 // pred_fallthru
      _
    // Predicated region
    $region86: #{tpu_custom_call.1} parent=1 // pred_check
      _
    $region87: #{tpu_custom_call.1} parent=1 // pred_check_branch
      %168 = sbr.rel (0) target = $region89
    $region88: #{tpu_custom_call.1} parent=1 // pred_region
      %169 = dma.done [#allocation15], 128
    $region89: #{tpu_custom_call.1} parent=1 // pred_fallthru
      _
    // Predicated region
    $region90: #{tpu_custom_call.1} parent=1 // pred_check
      _
    $region91: #{tpu_custom_call.1} parent=1 // pred_check_branch
      %171 = sbr.rel (0) target = $region93
    $region92: #{tpu_custom_call.1} parent=1 // pred_region
      %172 = dma.done [#allocation18], 16384
    $region93: #{tpu_custom_call.1} parent=1 // pred_fallthru
      _
    // Predicated region
    $region94: #{tpu_custom_call.1} parent=1 // pred_check
      _
    $region95: #{tpu_custom_call.1} parent=1 // pred_check_branch
      %174 = sbr.rel (0) target = $region97
    $region96: #{tpu_custom_call.1} parent=1 // pred_region
      %175 = dma.done [#allocation18], 16
    $region97: #{tpu_custom_call.1} parent=1 // pred_fallthru
      _
    %v176 = vld [vmem:[%s1] sm:$0xff]
    %v177 = vld [vmem:[%s1 + $0x8] sm:$0xff]
    %v178 = vld [vmem:[%s1 + $0x10] sm:$0xff]
    %v179 = vld [vmem:[%s1 + $0x18] sm:$0xff]
    %v180 = vld [vmem:[%s1 + $0x20] sm:$0xff]
    %v181 = vld [vmem:[%s1 + $0x28] sm:$0xff]
    %v182 = vld [vmem:[%s1 + $0x30] sm:$0xff]
    %v183 = vld [vmem:[%s1 + $0x38] sm:$0xff]
    %v184 = vld [vmem:[%s1 + $0x40] sm:$0xff]
    %v185 = vld [vmem:[%s1 + $0x48] sm:$0xff]
    %v186 = vld [vmem:[%s1 + $0x50] sm:$0xff]
    %v187 = vld [vmem:[%s1 + $0x58] sm:$0xff]
    %v188 = vld [vmem:[%s1 + $0x60] sm:$0xff]
    %v189 = vld [vmem:[%s1 + $0x68] sm:$0xff]
    %v190 = vld [vmem:[%s1 + $0x70] sm:$0xff]
    %v191 = vld [vmem:[%s1 + $0x78] sm:$0xff]
    %v192 = vlaneseq
    %v193 = vand.u32 %v192, 127
    %194 = vset.pattern.permute.xlu0 0
    %195 = vperm.xlu0 %194, %v176
    %v196 = vpop.permute.xlu0 %195
    %197 = vset.pattern.permute.xlu0 0
    %198 = vperm.xlu0 %197, %v177
    %v199 = vpop.permute.xlu0 %198
    %200 = vset.pattern.permute.xlu0 0
    %201 = vperm.xlu0 %200, %v178
    %v202 = vpop.permute.xlu0 %201
    %203 = vset.pattern.permute.xlu0 0
    %204 = vperm.xlu0 %203, %v179
    %v205 = vpop.permute.xlu0 %204
    %206 = vset.pattern.permute.xlu0 0
    %207 = vperm.xlu0 %206, %v180
    %v208 = vpop.permute.xlu0 %207
    %209 = vset.pattern.permute.xlu0 0
    %210 = vperm.xlu0 %209, %v181
    %v211 = vpop.permute.xlu0 %210
    %212 = vset.pattern.permute.xlu0 0
    %213 = vperm.xlu0 %212, %v182
    %v214 = vpop.permute.xlu0 %213
    %215 = vset.pattern.permute.xlu0 0
    %216 = vperm.xlu0 %215, %v183
    %v217 = vpop.permute.xlu0 %216
    %218 = vset.pattern.permute.xlu0 0
    %219 = vperm.xlu0 %218, %v184
    %v220 = vpop.permute.xlu0 %219
    %221 = vset.pattern.permute.xlu0 0
    %222 = vperm.xlu0 %221, %v185
    %v223 = vpop.permute.xlu0 %222
    %224 = vset.pattern.permute.xlu0 0
    %225 = vperm.xlu0 %224, %v186
    %v226 = vpop.permute.xlu0 %225
    %227 = vset.pattern.permute.xlu0 0
    %228 = vperm.xlu0 %227, %v187
    %v229 = vpop.permute.xlu0 %228
    %230 = vset.pattern.permute.xlu0 0
    %231 = vperm.xlu0 %230, %v188
    %v232 = vpop.permute.xlu0 %231
    %233 = vset.pattern.permute.xlu0 0
    %234 = vperm.xlu0 %233, %v189
    %v235 = vpop.permute.xlu0 %234
    %236 = vset.pattern.permute.xlu0 0
    %237 = vperm.xlu0 %236, %v190
    %v238 = vpop.permute.xlu0 %237
    %239 = vset.pattern.permute.xlu0 0
    %240 = vperm.xlu0 %239, %v191
    %v241 = vpop.permute.xlu0 %240
    %vm242 = vcmp.eq.s32.totalorder %v193, %v196
    %vm243 = vcmp.eq.s32.totalorder %v193, %v199
    %vm244 = vcmp.eq.s32.totalorder %v193, %v202
    %vm245 = vcmp.eq.s32.totalorder %v193, %v205
    %vm246 = vcmp.eq.s32.totalorder %v193, %v208
    %vm247 = vcmp.eq.s32.totalorder %v193, %v211
    %vm248 = vcmp.eq.s32.totalorder %v193, %v214
    %vm249 = vcmp.eq.s32.totalorder %v193, %v217
    %vm250 = vcmp.eq.s32.totalorder %v193, %v220
    %vm251 = vcmp.eq.s32.totalorder %v193, %v223
    %vm252 = vcmp.eq.s32.totalorder %v193, %v226
    %vm253 = vcmp.eq.s32.totalorder %v193, %v229
    %vm254 = vcmp.eq.s32.totalorder %v193, %v232
    %vm255 = vcmp.eq.s32.totalorder %v193, %v235
    %vm256 = vcmp.eq.s32.totalorder %v193, %v238
    %vm257 = vcmp.eq.s32.totalorder %v193, %v241
    %v258 = vsel %vm242, 1, 0
    %v259 = vsel %vm243, 1, 0
    %v260 = vsel %vm244, 1, 0
    %v261 = vsel %vm245, 1, 0
    %v262 = vsel %vm246, 1, 0
    %v263 = vsel %vm247, 1, 0
    %v264 = vsel %vm248, 1, 0
    %v265 = vsel %vm249, 1, 0
    %v266 = vsel %vm250, 1, 0
    %v267 = vsel %vm251, 1, 0
    %v268 = vsel %vm252, 1, 0
    %v269 = vsel %vm253, 1, 0
    %v270 = vsel %vm254, 1, 0
    %v271 = vsel %vm255, 1, 0
    %v272 = vsel %vm256, 1, 0
    %v273 = vsel %vm257, 1, 0
    %v274 = vcvt.s32.f32 %v258
    %v275 = vcvt.s32.f32 %v259
    %v276 = vcvt.s32.f32 %v260
    %v277 = vcvt.s32.f32 %v261
    %v278 = vcvt.s32.f32 %v262
    %v279 = vcvt.s32.f32 %v263
    %v280 = vcvt.s32.f32 %v264
    %v281 = vcvt.s32.f32 %v265
    %v282 = vcvt.s32.f32 %v266
    %v283 = vcvt.s32.f32 %v267
    %v284 = vcvt.s32.f32 %v268
    %v285 = vcvt.s32.f32 %v269
    %v286 = vcvt.s32.f32 %v270
    %v287 = vcvt.s32.f32 %v271
    %v288 = vcvt.s32.f32 %v272
    %v289 = vcvt.s32.f32 %v273
    %v290 = vld [vmem:[%s0] sm:$0xff]
    %v291 = vld [vmem:[%s0 + $0x8] sm:$0xff]
    %v292 = vld [vmem:[%s0 + $0x10] sm:$0xff]
    %v293 = vld [vmem:[%s0 + $0x18] sm:$0xff]
    %v294 = vld [vmem:[%s0 + $0x20] sm:$0xff]
    %v295 = vld [vmem:[%s0 + $0x28] sm:$0xff]
    %v296 = vld [vmem:[%s0 + $0x30] sm:$0xff]
    %v297 = vld [vmem:[%s0 + $0x38] sm:$0xff]
    %v298 = vld [vmem:[%s0 + $0x40] sm:$0xff]
    %v299 = vld [vmem:[%s0 + $0x48] sm:$0xff]
    %v300 = vld [vmem:[%s0 + $0x50] sm:$0xff]
    %v301 = vld [vmem:[%s0 + $0x58] sm:$0xff]
    %v302 = vld [vmem:[%s0 + $0x60] sm:$0xff]
    %v303 = vld [vmem:[%s0 + $0x68] sm:$0xff]
    %v304 = vld [vmem:[%s0 + $0x70] sm:$0xff]
    %v305 = vld [vmem:[%s0 + $0x78] sm:$0xff]
    %v306 = vld [vmem:[#allocation2] sm:$0x3f]
    %v307 = vld [vmem:[#allocation2 + $0x8] sm:$0x3f]
    %v308 = vld [vmem:[#allocation2 + $0x10] sm:$0x3f]
    %v309 = vld [vmem:[#allocation2 + $0x18] sm:$0x3f]
    %v310 = vld [vmem:[#allocation5] sm:$0x77]
    %v311 = vld [vmem:[#allocation5 + $0x8] sm:$0x77]
    %v314 = vcombine.high %v310, %v310
    %v315 = vcombine.high %v311, %v311
    %vm316 = vcmask 23552
    %v318 = vsel %vm316, %v274, 0
    %v321 = vsel %vm316, %v275, 0
    %v324 = vsel %vm316, %v276, 0
    %v327 = vsel %vm316, %v277, 0
    %v330 = vsel %vm316, %v278, 0
    %v333 = vsel %vm316, %v279, 0
    %v336 = vsel %vm316, %v280, 0
    %v339 = vsel %vm316, %v281, 0
    %v342 = vsel %vm316, %v282, 0
    %v345 = vsel %vm316, %v283, 0
    %v348 = vsel %vm316, %v284, 0
    %v351 = vsel %vm316, %v285, 0
    %v354 = vsel %vm316, %v286, 0
    %v357 = vsel %vm316, %v287, 0
    %v360 = vsel %vm316, %v288, 0
    %v363 = vsel %vm316, %v289, 0
    %vm365 = vcmask 1042432
    %v366 = vsel %vm365, %v310, 0
    %v368 = vsel %vm365, %v314, 0
    %v370 = vsel %vm365, %v311, 0
    %v372 = vsel %vm365, %v315, 0
    %374 = vmatprep.subr.mxu0 0.0
    %375 = vmatpush1.msra.mxu0 0.0
    %376 = vmatprep.subr.mxu0 0.0
    %377 = vmatpush1.msra.mxu0 0.0
    %378 = vmatprep.subr.mxu0 0.0
    %379 = vmatpush1.msra.mxu0 0.0
    %380 = vmatprep.subr.mxu0 0.0
    %381 = vmatpush1.msra.mxu0 0.0
    %382 = vmatprep.subr.mxu0 0.0
    %383 = vmatpush1.msra.mxu0 0.0
    %384 = vmatprep.subr.mxu0 0.0
    %385 = vmatpush1.msra.mxu0 0.0
    %386 = vmatprep.subr.mxu0 0.0
    %387 = vmatpush1.msra.mxu0 0.0
    %388 = vmatprep.subr.mxu0 0.0
    %389 = vmatpush1.msra.mxu0 0.0
    %390 = vmatprep.subr.mxu0 0.0
    %391 = vmatpush1.msra.mxu0 0.0
    %392 = vmatprep.subr.mxu0 0.0
    %393 = vmatpush1.msra.mxu0 0.0
    %394 = vmatprep.subr.mxu0 0.0
    %395 = vmatpush1.msra.mxu0 0.0
    %396 = vmatprep.subr.mxu0 0.0
    %397 = vmatpush1.msra.mxu0 0.0
    %398 = vmatprep.subr.mxu0 0.0
    %399 = vmatpush1.msra.mxu0 0.0
    %400 = vmatprep.subr.mxu0 0.0
    %401 = vmatpush1.msra.mxu0 0.0
    %402 = vmatprep.subr.mxu0 0.0
    %403 = vmatpush1.msra.mxu0 0.0
    %404 = vmatprep.subr.mxu0 %v368
    %405 = vmatpush1.msra.mxu0 %v366
    %406 = vmatprep.subr.mxu0 0.0
    %407 = vmatpush2.msra.mxu0 0.0
    %408 = vmatprep.subr.mxu0 0.0
    %409 = vmatpush2.msra.mxu0 0.0
    %410 = vmatprep.subr.mxu0 0.0
    %411 = vmatpush2.msra.mxu0 0.0
    %412 = vmatprep.subr.mxu0 0.0
    %413 = vmatpush2.msra.mxu0 0.0
    %414 = vmatprep.subr.mxu0 0.0
    %415 = vmatpush2.msra.mxu0 0.0
    %416 = vmatprep.subr.mxu0 0.0
    %417 = vmatpush2.msra.mxu0 0.0
    %418 = vmatprep.subr.mxu0 0.0
    %419 = vmatpush2.msra.mxu0 0.0
    %420 = vmatprep.subr.mxu0 0.0
    %421 = vmatpush2.msra.mxu0 0.0
    %422 = vmatprep.subr.mxu0 0.0
    %423 = vmatpush2.msra.mxu0 0.0
    %424 = vmatprep.subr.mxu0 0.0
    %425 = vmatpush2.msra.mxu0 0.0
    %426 = vmatprep.subr.mxu0 0.0
    %427 = vmatpush2.msra.mxu0 0.0
    %428 = vmatprep.subr.mxu0 0.0
    %429 = vmatpush2.msra.mxu0 0.0
    %430 = vmatprep.subr.mxu0 0.0
    %431 = vmatpush2.msra.mxu0 0.0
    %432 = vmatprep.subr.mxu0 0.0
    %433 = vmatpush2.msra.mxu0 0.0
    %434 = vmatprep.subr.mxu0 0.0
    %435 = vmatpush2.msra.mxu0 0.0
    %436 = vmatprep.subr.mxu0 0.0
    %437 = vmatpush2.msra.mxu0 0.0
    %438 = vmatprep.mubr.f32.mxu0 0.0
    %439 = vmatmul.mubr.f32.gmra.mxu0 %v318
    %v440 = vpop.f32.mrf.mxu0
    %v441 = vadd.f32 0.0, %v440
    %v442 = vpop.f32.mrf.mxu0
    %v443 = vadd.f32 0.0, %v442
    %444 = vmatprep.mubr.f32.mxu0 0.0
    %445 = vmatmul.mubr.f32.gmra.mxu0 %v321
    %v446 = vpop.f32.mrf.mxu0
    %v447 = vadd.f32 0.0, %v446
    %v448 = vpop.f32.mrf.mxu0
    %v449 = vadd.f32 0.0, %v448
    %450 = vmatprep.mubr.f32.mxu0 0.0
    %451 = vmatmul.mubr.f32.gmra.mxu0 %v324
    %v452 = vpop.f32.mrf.mxu0
    %v453 = vadd.f32 0.0, %v452
    %v454 = vpop.f32.mrf.mxu0
    %v455 = vadd.f32 0.0, %v454
    %456 = vmatprep.mubr.f32.mxu0 0.0
    %457 = vmatmul.mubr.f32.gmra.mxu0 %v327
    %v458 = vpop.f32.mrf.mxu0
    %v459 = vadd.f32 0.0, %v458
    %v460 = vpop.f32.mrf.mxu0
    %v461 = vadd.f32 0.0, %v460
    %462 = vmatprep.mubr.f32.mxu0 0.0
    %463 = vmatmul.mubr.f32.gmra.mxu0 %v330
    %v464 = vpop.f32.mrf.mxu0
    %v465 = vadd.f32 0.0, %v464
    %v466 = vpop.f32.mrf.mxu0
    %v467 = vadd.f32 0.0, %v466
    %468 = vmatprep.mubr.f32.mxu0 0.0
    %469 = vmatmul.mubr.f32.gmra.mxu0 %v333
    %v470 = vpop.f32.mrf.mxu0
    %v471 = vadd.f32 0.0, %v470
    %v472 = vpop.f32.mrf.mxu0
    %v473 = vadd.f32 0.0, %v472
    %474 = vmatprep.mubr.f32.mxu0 0.0
    %475 = vmatmul.mubr.f32.gmra.mxu0 %v336
    %v476 = vpop.f32.mrf.mxu0
    %v477 = vadd.f32 0.0, %v476
    %v478 = vpop.f32.mrf.mxu0
    %v479 = vadd.f32 0.0, %v478
    %480 = vmatprep.mubr.f32.mxu0 0.0
    %481 = vmatmul.mubr.f32.gmra.mxu0 %v339
    %v482 = vpop.f32.mrf.mxu0
    %v483 = vadd.f32 0.0, %v482
    %v484 = vpop.f32.mrf.mxu0
    %v485 = vadd.f32 0.0, %v484
    %486 = vmatprep.mubr.f32.mxu0 0.0
    %487 = vmatmul.mubr.f32.gmra.mxu0 %v342
    %v488 = vpop.f32.mrf.mxu0
    %v489 = vadd.f32 0.0, %v488
    %v490 = vpop.f32.mrf.mxu0
    %v491 = vadd.f32 0.0, %v490
    %492 = vmatprep.mubr.f32.mxu0 0.0
    %493 = vmatmul.mubr.f32.gmra.mxu0 %v345
    %v494 = vpop.f32.mrf.mxu0
    %v495 = vadd.f32 0.0, %v494
    %v496 = vpop.f32.mrf.mxu0
    %v497 = vadd.f32 0.0, %v496
    %498 = vmatprep.mubr.f32.mxu0 0.0
    %499 = vmatmul.mubr.f32.gmra.mxu0 %v348
    %v500 = vpop.f32.mrf.mxu0
    %v501 = vadd.f32 0.0, %v500
    %v502 = vpop.f32.mrf.mxu0
    %v503 = vadd.f32 0.0, %v502
    %504 = vmatprep.mubr.f32.mxu0 0.0
    %505 = vmatmul.mubr.f32.gmra.mxu0 %v351
    %v506 = vpop.f32.mrf.mxu0
    %v507 = vadd.f32 0.0, %v506
    %v508 = vpop.f32.mrf.mxu0
    %v509 = vadd.f32 0.0, %v508
    %510 = vmatprep.mubr.f32.mxu0 0.0
    %511 = vmatmul.mubr.f32.gmra.mxu0 %v354
    %v512 = vpop.f32.mrf.mxu0
    %v513 = vadd.f32 0.0, %v512
    %v514 = vpop.f32.mrf.mxu0
    %v515 = vadd.f32 0.0, %v514
    %516 = vmatprep.mubr.f32.mxu0 0.0
    %517 = vmatmul.mubr.f32.gmra.mxu0 %v357
    %v518 = vpop.f32.mrf.mxu0
    %v519 = vadd.f32 0.0, %v518
    %v520 = vpop.f32.mrf.mxu0
    %v521 = vadd.f32 0.0, %v520
    %522 = vmatprep.mubr.f32.mxu0 0.0
    %523 = vmatmul.mubr.f32.gmra.mxu0 %v360
    %v524 = vpop.f32.mrf.mxu0
    %v525 = vadd.f32 0.0, %v524
    %v526 = vpop.f32.mrf.mxu0
    %v527 = vadd.f32 0.0, %v526
    %528 = vmatprep.mubr.f32.mxu0 0.0
    %529 = vmatmul.mubr.f32.gmra.mxu0 %v363
    %v530 = vpop.f32.mrf.mxu0
    %v531 = vadd.f32 0.0, %v530
    %v532 = vpop.f32.mrf.mxu0
    %v533 = vadd.f32 0.0, %v532
    %534 = vdwg.mxu0
    %535 = vmatprep.subr.mxu0 0.0
    %536 = vmatpush1.msra.mxu0 0.0
    %537 = vmatprep.subr.mxu0 0.0
    %538 = vmatpush1.msra.mxu0 0.0
    %539 = vmatprep.subr.mxu0 0.0
    %540 = vmatpush1.msra.mxu0 0.0
    %541 = vmatprep.subr.mxu0 0.0
    %542 = vmatpush1.msra.mxu0 0.0
    %543 = vmatprep.subr.mxu0 0.0
    %544 = vmatpush1.msra.mxu0 0.0
    %545 = vmatprep.subr.mxu0 0.0
    %546 = vmatpush1.msra.mxu0 0.0
    %547 = vmatprep.subr.mxu0 0.0
    %548 = vmatpush1.msra.mxu0 0.0
    %549 = vmatprep.subr.mxu0 0.0
    %550 = vmatpush1.msra.mxu0 0.0
    %551 = vmatprep.subr.mxu0 0.0
    %552 = vmatpush1.msra.mxu0 0.0
    %553 = vmatprep.subr.mxu0 0.0
    %554 = vmatpush1.msra.mxu0 0.0
    %555 = vmatprep.subr.mxu0 0.0
    %556 = vmatpush1.msra.mxu0 0.0
    %557 = vmatprep.subr.mxu0 0.0
    %558 = vmatpush1.msra.mxu0 0.0
    %559 = vmatprep.subr.mxu0 0.0
    %560 = vmatpush1.msra.mxu0 0.0
    %561 = vmatprep.subr.mxu0 0.0
    %562 = vmatpush1.msra.mxu0 0.0
    %563 = vmatprep.subr.mxu0 0.0
    %564 = vmatpush1.msra.mxu0 0.0
    %565 = vmatprep.subr.mxu0 %v372
    %566 = vmatpush1.msra.mxu0 %v370
    %567 = vmatprep.subr.mxu0 0.0
    %568 = vmatpush2.msra.mxu0 0.0
    %569 = vmatprep.subr.mxu0 0.0
    %570 = vmatpush2.msra.mxu0 0.0
    %571 = vmatprep.subr.mxu0 0.0
    %572 = vmatpush2.msra.mxu0 0.0
    %573 = vmatprep.subr.mxu0 0.0
    %574 = vmatpush2.msra.mxu0 0.0
    %575 = vmatprep.subr.mxu0 0.0
    %576 = vmatpush2.msra.mxu0 0.0
    %577 = vmatprep.subr.mxu0 0.0
    %578 = vmatpush2.msra.mxu0 0.0
    %579 = vmatprep.subr.mxu0 0.0
    %580 = vmatpush2.msra.mxu0 0.0
    %581 = vmatprep.subr.mxu0 0.0
    %582 = vmatpush2.msra.mxu0 0.0
    %583 = vmatprep.subr.mxu0 0.0
    %584 = vmatpush2.msra.mxu0 0.0
    %585 = vmatprep.subr.mxu0 0.0
    %586 = vmatpush2.msra.mxu0 0.0
    %587 = vmatprep.subr.mxu0 0.0
    %588 = vmatpush2.msra.mxu0 0.0
    %589 = vmatprep.subr.mxu0 0.0
    %590 = vmatpush2.msra.mxu0 0.0
    %591 = vmatprep.subr.mxu0 0.0
    %592 = vmatpush2.msra.mxu0 0.0
    %593 = vmatprep.subr.mxu0 0.0
    %594 = vmatpush2.msra.mxu0 0.0
    %595 = vmatprep.subr.mxu0 0.0
    %596 = vmatpush2.msra.mxu0 0.0
    %597 = vmatprep.subr.mxu0 0.0
    %598 = vmatpush2.msra.mxu0 0.0
    %599 = vmatprep.mubr.f32.mxu0 0.0
    %600 = vmatmul.mubr.f32.gmra.mxu0 %v318
    %v601 = vpop.f32.mrf.mxu0
    %v602 = vadd.f32 0.0, %v601
    %v603 = vpop.f32.mrf.mxu0
    %v604 = vadd.f32 0.0, %v603
    %605 = vmatprep.mubr.f32.mxu0 0.0
    %606 = vmatmul.mubr.f32.gmra.mxu0 %v321
    %v607 = vpop.f32.mrf.mxu0
    %v608 = vadd.f32 0.0, %v607
    %v609 = vpop.f32.mrf.mxu0
    %v610 = vadd.f32 0.0, %v609
    %611 = vmatprep.mubr.f32.mxu0 0.0
    %612 = vmatmul.mubr.f32.gmra.mxu0 %v324
    %v613 = vpop.f32.mrf.mxu0
    %v614 = vadd.f32 0.0, %v613
    %v615 = vpop.f32.mrf.mxu0
    %v616 = vadd.f32 0.0, %v615
    %617 = vmatprep.mubr.f32.mxu0 0.0
    %618 = vmatmul.mubr.f32.gmra.mxu0 %v327
    %v619 = vpop.f32.mrf.mxu0
    %v620 = vadd.f32 0.0, %v619
    %v621 = vpop.f32.mrf.mxu0
    %v622 = vadd.f32 0.0, %v621
    %623 = vmatprep.mubr.f32.mxu0 0.0
    %624 = vmatmul.mubr.f32.gmra.mxu0 %v330
    %v625 = vpop.f32.mrf.mxu0
    %v626 = vadd.f32 0.0, %v625
    %v627 = vpop.f32.mrf.mxu0
    %v628 = vadd.f32 0.0, %v627
    %629 = vmatprep.mubr.f32.mxu0 0.0
    %630 = vmatmul.mubr.f32.gmra.mxu0 %v333
    %v631 = vpop.f32.mrf.mxu0
    %v632 = vadd.f32 0.0, %v631
    %v633 = vpop.f32.mrf.mxu0
    %v634 = vadd.f32 0.0, %v633
    %635 = vmatprep.mubr.f32.mxu0 0.0
    %636 = vmatmul.mubr.f32.gmra.mxu0 %v336
    %v637 = vpop.f32.mrf.mxu0
    %v638 = vadd.f32 0.0, %v637
    %v639 = vpop.f32.mrf.mxu0
    %v640 = vadd.f32 0.0, %v639
    %641 = vmatprep.mubr.f32.mxu0 0.0
    %642 = vmatmul.mubr.f32.gmra.mxu0 %v339
    %v643 = vpop.f32.mrf.mxu0
    %v644 = vadd.f32 0.0, %v643
    %v645 = vpop.f32.mrf.mxu0
    %v646 = vadd.f32 0.0, %v645
    %647 = vmatprep.mubr.f32.mxu0 0.0
    %648 = vmatmul.mubr.f32.gmra.mxu0 %v342
    %v649 = vpop.f32.mrf.mxu0
    %v650 = vadd.f32 0.0, %v649
    %v651 = vpop.f32.mrf.mxu0
    %v652 = vadd.f32 0.0, %v651
    %653 = vmatprep.mubr.f32.mxu0 0.0
    %654 = vmatmul.mubr.f32.gmra.mxu0 %v345
    %v655 = vpop.f32.mrf.mxu0
    %v656 = vadd.f32 0.0, %v655
    %v657 = vpop.f32.mrf.mxu0
    %v658 = vadd.f32 0.0, %v657
    %659 = vmatprep.mubr.f32.mxu0 0.0
    %660 = vmatmul.mubr.f32.gmra.mxu0 %v348
    %v661 = vpop.f32.mrf.mxu0
    %v662 = vadd.f32 0.0, %v661
    %v663 = vpop.f32.mrf.mxu0
    %v664 = vadd.f32 0.0, %v663
    %665 = vmatprep.mubr.f32.mxu0 0.0
    %666 = vmatmul.mubr.f32.gmra.mxu0 %v351
    %v667 = vpop.f32.mrf.mxu0
    %v668 = vadd.f32 0.0, %v667
    %v669 = vpop.f32.mrf.mxu0
    %v670 = vadd.f32 0.0, %v669
    %671 = vmatprep.mubr.f32.mxu0 0.0
    %672 = vmatmul.mubr.f32.gmra.mxu0 %v354
    %v673 = vpop.f32.mrf.mxu0
    %v674 = vadd.f32 0.0, %v673
    %v675 = vpop.f32.mrf.mxu0
    %v676 = vadd.f32 0.0, %v675
    %677 = vmatprep.mubr.f32.mxu0 0.0
    %678 = vmatmul.mubr.f32.gmra.mxu0 %v357
    %v679 = vpop.f32.mrf.mxu0
    %v680 = vadd.f32 0.0, %v679
    %v681 = vpop.f32.mrf.mxu0
    %v682 = vadd.f32 0.0, %v681
    %683 = vmatprep.mubr.f32.mxu0 0.0
    %684 = vmatmul.mubr.f32.gmra.mxu0 %v360
    %v685 = vpop.f32.mrf.mxu0
    %v686 = vadd.f32 0.0, %v685
    %v687 = vpop.f32.mrf.mxu0
    %v688 = vadd.f32 0.0, %v687
    %689 = vmatprep.mubr.f32.mxu0 0.0
    %690 = vmatmul.mubr.f32.gmra.mxu0 %v363
    %v691 = vpop.f32.mrf.mxu0
    %v692 = vadd.f32 0.0, %v691
    %v693 = vpop.f32.mrf.mxu0
    %v694 = vadd.f32 0.0, %v693
    %695 = vdwg.mxu0
    %vm696 = vcmask 48128
    %v698 = vsel %vm696, %v290, 0
    %v701 = vsel %vm696, %v291, 0
    %v704 = vsel %vm696, %v292, 0
    %v707 = vsel %vm696, %v293, 0
    %v710 = vsel %vm696, %v294, 0
    %v713 = vsel %vm696, %v295, 0
    %v716 = vsel %vm696, %v296, 0
    %v719 = vsel %vm696, %v297, 0
    %v722 = vsel %vm696, %v298, 0
    %v725 = vsel %vm696, %v299, 0
    %v728 = vsel %vm696, %v300, 0
    %v731 = vsel %vm696, %v301, 0
    %v734 = vsel %vm696, %v302, 0
    %v737 = vsel %vm696, %v303, 0
    %v740 = vsel %vm696, %v304, 0
    %v743 = vsel %vm696, %v305, 0
    %vm745 = vcmask 1045504
    %v747 = vsel %vm745, %v306, 0
    %v750 = vsel %vm745, %v307, 0
    %v753 = vsel %vm745, %v308, 0
    %v756 = vsel %vm745, %v309, 0
    %758 = vmatprep.subr.mxu0 0.0
    %759 = vmatpush1.msra.mxu0 0.0
    %760 = vmatprep.subr.mxu0 0.0
    %761 = vmatpush1.msra.mxu0 0.0
    %762 = vmatprep.subr.mxu0 0.0
    %763 = vmatpush1.msra.mxu0 0.0
    %764 = vmatprep.subr.mxu0 0.0
    %765 = vmatpush1.msra.mxu0 0.0
    %766 = vmatprep.subr.mxu0 0.0
    %767 = vmatpush1.msra.mxu0 0.0
    %768 = vmatprep.subr.mxu0 0.0
    %769 = vmatpush1.msra.mxu0 0.0
    %770 = vmatprep.subr.mxu0 0.0
    %771 = vmatpush1.msra.mxu0 0.0
    %772 = vmatprep.subr.mxu0 0.0
    %773 = vmatpush1.msra.mxu0 0.0
    %774 = vmatprep.subr.mxu0 0.0
    %775 = vmatpush1.msra.mxu0 0.0
    %776 = vmatprep.subr.mxu0 0.0
    %777 = vmatpush1.msra.mxu0 0.0
    %778 = vmatprep.subr.mxu0 0.0
    %779 = vmatpush1.msra.mxu0 0.0
    %780 = vmatprep.subr.mxu0 0.0
    %781 = vmatpush1.msra.mxu0 0.0
    %782 = vmatprep.subr.mxu0 0.0
    %783 = vmatpush1.msra.mxu0 0.0
    %784 = vmatprep.subr.mxu0 0.0
    %785 = vmatpush1.msra.mxu0 0.0
    %786 = vmatprep.subr.mxu0 0.0
    %787 = vmatpush1.msra.mxu0 0.0
    %788 = vmatprep.subr.mxu0 %v750
    %789 = vmatpush1.msra.mxu0 %v747
    %790 = vmatprep.subr.mxu0 0.0
    %791 = vmatpush2.msra.mxu0 0.0
    %792 = vmatprep.subr.mxu0 0.0
    %793 = vmatpush2.msra.mxu0 0.0
    %794 = vmatprep.subr.mxu0 0.0
    %795 = vmatpush2.msra.mxu0 0.0
    %796 = vmatprep.subr.mxu0 0.0
    %797 = vmatpush2.msra.mxu0 0.0
    %798 = vmatprep.subr.mxu0 0.0
    %799 = vmatpush2.msra.mxu0 0.0
    %800 = vmatprep.subr.mxu0 0.0
    %801 = vmatpush2.msra.mxu0 0.0
    %802 = vmatprep.subr.mxu0 0.0
    %803 = vmatpush2.msra.mxu0 0.0
    %804 = vmatprep.subr.mxu0 0.0
    %805 = vmatpush2.msra.mxu0 0.0
    %806 = vmatprep.subr.mxu0 0.0
    %807 = vmatpush2.msra.mxu0 0.0
    %808 = vmatprep.subr.mxu0 0.0
    %809 = vmatpush2.msra.mxu0 0.0
    %810 = vmatprep.subr.mxu0 0.0
    %811 = vmatpush2.msra.mxu0 0.0
    %812 = vmatprep.subr.mxu0 0.0
    %813 = vmatpush2.msra.mxu0 0.0
    %814 = vmatprep.subr.mxu0 0.0
    %815 = vmatpush2.msra.mxu0 0.0
    %816 = vmatprep.subr.mxu0 0.0
    %817 = vmatpush2.msra.mxu0 0.0
    %818 = vmatprep.subr.mxu0 0.0
    %819 = vmatpush2.msra.mxu0 0.0
    %820 = vmatprep.subr.mxu0 0.0
    %821 = vmatpush2.msra.mxu0 0.0
    %822 = vmatprep.mubr.f32.mxu0 0.0
    %823 = vmatmul.mubr.f32.gmra.mxu0 %v698
    %v824 = vpop.f32.mrf.mxu0
    %v825 = vadd.f32 %v441, %v824
    %v826 = vpop.f32.mrf.mxu0
    %v827 = vadd.f32 %v443, %v826
    %828 = vmatprep.mubr.f32.mxu0 0.0
    %829 = vmatmul.mubr.f32.gmra.mxu0 %v701
    %v830 = vpop.f32.mrf.mxu0
    %v831 = vadd.f32 %v447, %v830
    %v832 = vpop.f32.mrf.mxu0
    %v833 = vadd.f32 %v449, %v832
    %834 = vmatprep.mubr.f32.mxu0 0.0
    %835 = vmatmul.mubr.f32.gmra.mxu0 %v704
    %v836 = vpop.f32.mrf.mxu0
    %v837 = vadd.f32 %v453, %v836
    %v838 = vpop.f32.mrf.mxu0
    %v839 = vadd.f32 %v455, %v838
    %840 = vmatprep.mubr.f32.mxu0 0.0
    %841 = vmatmul.mubr.f32.gmra.mxu0 %v707
    %v842 = vpop.f32.mrf.mxu0
    %v843 = vadd.f32 %v459, %v842
    %v844 = vpop.f32.mrf.mxu0
    %v845 = vadd.f32 %v461, %v844
    %846 = vmatprep.mubr.f32.mxu0 0.0
    %847 = vmatmul.mubr.f32.gmra.mxu0 %v710
    %v848 = vpop.f32.mrf.mxu0
    %v849 = vadd.f32 %v465, %v848
    %v850 = vpop.f32.mrf.mxu0
    %v851 = vadd.f32 %v467, %v850
    %852 = vmatprep.mubr.f32.mxu0 0.0
    %853 = vmatmul.mubr.f32.gmra.mxu0 %v713
    %v854 = vpop.f32.mrf.mxu0
    %v855 = vadd.f32 %v471, %v854
    %v856 = vpop.f32.mrf.mxu0
    %v857 = vadd.f32 %v473, %v856
    %858 = vmatprep.mubr.f32.mxu0 0.0
    %859 = vmatmul.mubr.f32.gmra.mxu0 %v716
    %v860 = vpop.f32.mrf.mxu0
    %v861 = vadd.f32 %v477, %v860
    %v862 = vpop.f32.mrf.mxu0
    %v863 = vadd.f32 %v479, %v862
    %864 = vmatprep.mubr.f32.mxu0 0.0
    %865 = vmatmul.mubr.f32.gmra.mxu0 %v719
    %v866 = vpop.f32.mrf.mxu0
    %v867 = vadd.f32 %v483, %v866
    %v868 = vpop.f32.mrf.mxu0
    %v869 = vadd.f32 %v485, %v868
    %870 = vmatprep.mubr.f32.mxu0 0.0
    %871 = vmatmul.mubr.f32.gmra.mxu0 %v722
    %v872 = vpop.f32.mrf.mxu0
    %v873 = vadd.f32 %v489, %v872
    %v874 = vpop.f32.mrf.mxu0
    %v875 = vadd.f32 %v491, %v874
    %876 = vmatprep.mubr.f32.mxu0 0.0
    %877 = vmatmul.mubr.f32.gmra.mxu0 %v725
    %v878 = vpop.f32.mrf.mxu0
    %v879 = vadd.f32 %v495, %v878
    %v880 = vpop.f32.mrf.mxu0
    %v881 = vadd.f32 %v497, %v880
    %882 = vmatprep.mubr.f32.mxu0 0.0
    %883 = vmatmul.mubr.f32.gmra.mxu0 %v728
    %v884 = vpop.f32.mrf.mxu0
    %v885 = vadd.f32 %v501, %v884
    %v886 = vpop.f32.mrf.mxu0
    %v887 = vadd.f32 %v503, %v886
    %888 = vmatprep.mubr.f32.mxu0 0.0
    %889 = vmatmul.mubr.f32.gmra.mxu0 %v731
    %v890 = vpop.f32.mrf.mxu0
    %v891 = vadd.f32 %v507, %v890
    %v892 = vpop.f32.mrf.mxu0
    %v893 = vadd.f32 %v509, %v892
    %894 = vmatprep.mubr.f32.mxu0 0.0
    %895 = vmatmul.mubr.f32.gmra.mxu0 %v734
    %v896 = vpop.f32.mrf.mxu0
    %v897 = vadd.f32 %v513, %v896
    %v898 = vpop.f32.mrf.mxu0
    %v899 = vadd.f32 %v515, %v898
    %900 = vmatprep.mubr.f32.mxu0 0.0
    %901 = vmatmul.mubr.f32.gmra.mxu0 %v737
    %v902 = vpop.f32.mrf.mxu0
    %v903 = vadd.f32 %v519, %v902
    %v904 = vpop.f32.mrf.mxu0
    %v905 = vadd.f32 %v521, %v904
    %906 = vmatprep.mubr.f32.mxu0 0.0
    %907 = vmatmul.mubr.f32.gmra.mxu0 %v740
    %v908 = vpop.f32.mrf.mxu0
    %v909 = vadd.f32 %v525, %v908
    %v910 = vpop.f32.mrf.mxu0
    %v911 = vadd.f32 %v527, %v910
    %912 = vmatprep.mubr.f32.mxu0 0.0
    %913 = vmatmul.mubr.f32.gmra.mxu0 %v743
    %v914 = vpop.f32.mrf.mxu0
    %v915 = vadd.f32 %v531, %v914
    %v916 = vpop.f32.mrf.mxu0
    %v917 = vadd.f32 %v533, %v916
    %918 = vdwg.mxu0
    %919 = vmatprep.subr.mxu0 0.0
    %920 = vmatpush1.msra.mxu0 0.0
    %921 = vmatprep.subr.mxu0 0.0
    %922 = vmatpush1.msra.mxu0 0.0
    %923 = vmatprep.subr.mxu0 0.0
    %924 = vmatpush1.msra.mxu0 0.0
    %925 = vmatprep.subr.mxu0 0.0
    %926 = vmatpush1.msra.mxu0 0.0
    %927 = vmatprep.subr.mxu0 0.0
    %928 = vmatpush1.msra.mxu0 0.0
    %929 = vmatprep.subr.mxu0 0.0
    %930 = vmatpush1.msra.mxu0 0.0
    %931 = vmatprep.subr.mxu0 0.0
    %932 = vmatpush1.msra.mxu0 0.0
    %933 = vmatprep.subr.mxu0 0.0
    %934 = vmatpush1.msra.mxu0 0.0
    %935 = vmatprep.subr.mxu0 0.0
    %936 = vmatpush1.msra.mxu0 0.0
    %937 = vmatprep.subr.mxu0 0.0
    %938 = vmatpush1.msra.mxu0 0.0
    %939 = vmatprep.subr.mxu0 0.0
    %940 = vmatpush1.msra.mxu0 0.0
    %941 = vmatprep.subr.mxu0 0.0
    %942 = vmatpush1.msra.mxu0 0.0
    %943 = vmatprep.subr.mxu0 0.0
    %944 = vmatpush1.msra.mxu0 0.0
    %945 = vmatprep.subr.mxu0 0.0
    %946 = vmatpush1.msra.mxu0 0.0
    %947 = vmatprep.subr.mxu0 0.0
    %948 = vmatpush1.msra.mxu0 0.0
    %949 = vmatprep.subr.mxu0 %v756
    %950 = vmatpush1.msra.mxu0 %v753
    %951 = vmatprep.subr.mxu0 0.0
    %952 = vmatpush2.msra.mxu0 0.0
    %953 = vmatprep.subr.mxu0 0.0
    %954 = vmatpush2.msra.mxu0 0.0
    %955 = vmatprep.subr.mxu0 0.0
    %956 = vmatpush2.msra.mxu0 0.0
    %957 = vmatprep.subr.mxu0 0.0
    %958 = vmatpush2.msra.mxu0 0.0
    %959 = vmatprep.subr.mxu0 0.0
    %960 = vmatpush2.msra.mxu0 0.0
    %961 = vmatprep.subr.mxu0 0.0
    %962 = vmatpush2.msra.mxu0 0.0
    %963 = vmatprep.subr.mxu0 0.0
    %964 = vmatpush2.msra.mxu0 0.0
    %965 = vmatprep.subr.mxu0 0.0
    %966 = vmatpush2.msra.mxu0 0.0
    %967 = vmatprep.subr.mxu0 0.0
    %968 = vmatpush2.msra.mxu0 0.0
    %969 = vmatprep.subr.mxu0 0.0
    %970 = vmatpush2.msra.mxu0 0.0
    %971 = vmatprep.subr.mxu0 0.0
    %972 = vmatpush2.msra.mxu0 0.0
    %973 = vmatprep.subr.mxu0 0.0
    %974 = vmatpush2.msra.mxu0 0.0
    %975 = vmatprep.subr.mxu0 0.0
    %976 = vmatpush2.msra.mxu0 0.0
    %977 = vmatprep.subr.mxu0 0.0
    %978 = vmatpush2.msra.mxu0 0.0
    %979 = vmatprep.subr.mxu0 0.0
    %980 = vmatpush2.msra.mxu0 0.0
    %981 = vmatprep.subr.mxu0 0.0
    %982 = vmatpush2.msra.mxu0 0.0
    %983 = vmatprep.mubr.f32.mxu0 0.0
    %984 = vmatmul.mubr.f32.gmra.mxu0 %v698
    %v985 = vpop.f32.mrf.mxu0
    %v986 = vadd.f32 %v602, %v985
    %v987 = vpop.f32.mrf.mxu0
    %v988 = vadd.f32 %v604, %v987
    %989 = vmatprep.mubr.f32.mxu0 0.0
    %990 = vmatmul.mubr.f32.gmra.mxu0 %v701
    %v991 = vpop.f32.mrf.mxu0
    %v992 = vadd.f32 %v608, %v991
    %v993 = vpop.f32.mrf.mxu0
    %v994 = vadd.f32 %v610, %v993
    %995 = vmatprep.mubr.f32.mxu0 0.0
    %996 = vmatmul.mubr.f32.gmra.mxu0 %v704
    %v997 = vpop.f32.mrf.mxu0
    %v998 = vadd.f32 %v614, %v997
    %v999 = vpop.f32.mrf.mxu0
    %v1000 = vadd.f32 %v616, %v999
    %1001 = vmatprep.mubr.f32.mxu0 0.0
    %1002 = vmatmul.mubr.f32.gmra.mxu0 %v707
    %v1003 = vpop.f32.mrf.mxu0
    %v1004 = vadd.f32 %v620, %v1003
    %v1005 = vpop.f32.mrf.mxu0
    %v1006 = vadd.f32 %v622, %v1005
    %1007 = vmatprep.mubr.f32.mxu0 0.0
    %1008 = vmatmul.mubr.f32.gmra.mxu0 %v710
    %v1009 = vpop.f32.mrf.mxu0
    %v1010 = vadd.f32 %v626, %v1009
    %v1011 = vpop.f32.mrf.mxu0
    %v1012 = vadd.f32 %v628, %v1011
    %1013 = vmatprep.mubr.f32.mxu0 0.0
    %1014 = vmatmul.mubr.f32.gmra.mxu0 %v713
    %v1015 = vpop.f32.mrf.mxu0
    %v1016 = vadd.f32 %v632, %v1015
    %v1017 = vpop.f32.mrf.mxu0
    %v1018 = vadd.f32 %v634, %v1017
    %1019 = vmatprep.mubr.f32.mxu0 0.0
    %1020 = vmatmul.mubr.f32.gmra.mxu0 %v716
    %v1021 = vpop.f32.mrf.mxu0
    %v1022 = vadd.f32 %v638, %v1021
    %v1023 = vpop.f32.mrf.mxu0
    %v1024 = vadd.f32 %v640, %v1023
    %1025 = vmatprep.mubr.f32.mxu0 0.0
    %1026 = vmatmul.mubr.f32.gmra.mxu0 %v719
    %v1027 = vpop.f32.mrf.mxu0
    %v1028 = vadd.f32 %v644, %v1027
    %v1029 = vpop.f32.mrf.mxu0
    %v1030 = vadd.f32 %v646, %v1029
    %1031 = vmatprep.mubr.f32.mxu0 0.0
    %1032 = vmatmul.mubr.f32.gmra.mxu0 %v722
    %v1033 = vpop.f32.mrf.mxu0
    %v1034 = vadd.f32 %v650, %v1033
    %v1035 = vpop.f32.mrf.mxu0
    %v1036 = vadd.f32 %v652, %v1035
    %1037 = vmatprep.mubr.f32.mxu0 0.0
    %1038 = vmatmul.mubr.f32.gmra.mxu0 %v725
    %v1039 = vpop.f32.mrf.mxu0
    %v1040 = vadd.f32 %v656, %v1039
    %v1041 = vpop.f32.mrf.mxu0
    %v1042 = vadd.f32 %v658, %v1041
    %1043 = vmatprep.mubr.f32.mxu0 0.0
    %1044 = vmatmul.mubr.f32.gmra.mxu0 %v728
    %v1045 = vpop.f32.mrf.mxu0
    %v1046 = vadd.f32 %v662, %v1045
    %v1047 = vpop.f32.mrf.mxu0
    %v1048 = vadd.f32 %v664, %v1047
    %1049 = vmatprep.mubr.f32.mxu0 0.0
    %1050 = vmatmul.mubr.f32.gmra.mxu0 %v731
    %v1051 = vpop.f32.mrf.mxu0
    %v1052 = vadd.f32 %v668, %v1051
    %v1053 = vpop.f32.mrf.mxu0
    %v1054 = vadd.f32 %v670, %v1053
    %1055 = vmatprep.mubr.f32.mxu0 0.0
    %1056 = vmatmul.mubr.f32.gmra.mxu0 %v734
    %v1057 = vpop.f32.mrf.mxu0
    %v1058 = vadd.f32 %v674, %v1057
    %v1059 = vpop.f32.mrf.mxu0
    %v1060 = vadd.f32 %v676, %v1059
    %1061 = vmatprep.mubr.f32.mxu0 0.0
    %1062 = vmatmul.mubr.f32.gmra.mxu0 %v737
    %v1063 = vpop.f32.mrf.mxu0
    %v1064 = vadd.f32 %v680, %v1063
    %v1065 = vpop.f32.mrf.mxu0
    %v1066 = vadd.f32 %v682, %v1065
    %1067 = vmatprep.mubr.f32.mxu0 0.0
    %1068 = vmatmul.mubr.f32.gmra.mxu0 %v740
    %v1069 = vpop.f32.mrf.mxu0
    %v1070 = vadd.f32 %v686, %v1069
    %v1071 = vpop.f32.mrf.mxu0
    %v1072 = vadd.f32 %v688, %v1071
    %1073 = vmatprep.mubr.f32.mxu0 0.0
    %1074 = vmatmul.mubr.f32.gmra.mxu0 %v743
    %v1075 = vpop.f32.mrf.mxu0
    %v1076 = vadd.f32 %v692, %v1075
    %v1077 = vpop.f32.mrf.mxu0
    %v1078 = vadd.f32 %v694, %v1077
    %1079 = vdwg.mxu0
    %v1080 = vld [vmem:[#allocation7] sm:$0xf]
    %v1082 = vlaneseq
    %v1083 = vshrl.u32 %v1082, 7
    %v1084 = vsub.s32 0, %v1083
    %v1085 = vrot.slane %v1080, %v1084
    %v1086 = vlaneseq
    %v1087 = vshrl.u32 %v1086, 7
    %v1088 = vsub.s32 1, %v1087
    %v1089 = vrot.slane %v1080, %v1088
    %v1090 = vlaneseq
    %v1091 = vshrl.u32 %v1090, 7
    %v1092 = vsub.s32 2, %v1091
    %v1093 = vrot.slane %v1080, %v1092
    %v1094 = vlaneseq
    %v1095 = vshrl.u32 %v1094, 7
    %v1096 = vsub.s32 3, %v1095
    %v1097 = vrot.slane %v1080, %v1096
    %v1102 = vadd.f32 %v825, %v1085
    %v1103 = vadd.f32 %v827, %v1089
    %v1104 = vadd.f32 %v986, %v1093
    %v1105 = vadd.f32 %v988, %v1097
    %v1106 = vadd.f32 %v831, %v1085
    %v1107 = vadd.f32 %v833, %v1089
    %v1108 = vadd.f32 %v992, %v1093
    %v1109 = vadd.f32 %v994, %v1097
    %v1110 = vadd.f32 %v837, %v1085
    %v1111 = vadd.f32 %v839, %v1089
    %v1112 = vadd.f32 %v998, %v1093
    %v1113 = vadd.f32 %v1000, %v1097
    %v1114 = vadd.f32 %v843, %v1085
    %v1115 = vadd.f32 %v845, %v1089
    %v1116 = vadd.f32 %v1004, %v1093
    %v1117 = vadd.f32 %v1006, %v1097
    %v1118 = vadd.f32 %v849, %v1085
    %v1119 = vadd.f32 %v851, %v1089
    %v1120 = vadd.f32 %v1010, %v1093
    %v1121 = vadd.f32 %v1012, %v1097
    %v1122 = vadd.f32 %v855, %v1085
    %v1123 = vadd.f32 %v857, %v1089
    %v1124 = vadd.f32 %v1016, %v1093
    %v1125 = vadd.f32 %v1018, %v1097
    %v1126 = vadd.f32 %v861, %v1085
    %v1127 = vadd.f32 %v863, %v1089
    %v1128 = vadd.f32 %v1022, %v1093
    %v1129 = vadd.f32 %v1024, %v1097
    %v1130 = vadd.f32 %v867, %v1085
    %v1131 = vadd.f32 %v869, %v1089
    %v1132 = vadd.f32 %v1028, %v1093
    %v1133 = vadd.f32 %v1030, %v1097
    %v1134 = vadd.f32 %v873, %v1085
    %v1135 = vadd.f32 %v875, %v1089
    %v1136 = vadd.f32 %v1034, %v1093
    %v1137 = vadd.f32 %v1036, %v1097
    %v1138 = vadd.f32 %v879, %v1085
    %v1139 = vadd.f32 %v881, %v1089
    %v1140 = vadd.f32 %v1040, %v1093
    %v1141 = vadd.f32 %v1042, %v1097
    %v1142 = vadd.f32 %v885, %v1085
    %v1143 = vadd.f32 %v887, %v1089
    %v1144 = vadd.f32 %v1046, %v1093
    %v1145 = vadd.f32 %v1048, %v1097
    %v1146 = vadd.f32 %v891, %v1085
    %v1147 = vadd.f32 %v893, %v1089
    %v1148 = vadd.f32 %v1052, %v1093
    %v1149 = vadd.f32 %v1054, %v1097
    %v1150 = vadd.f32 %v897, %v1085
    %v1151 = vadd.f32 %v899, %v1089
    %v1152 = vadd.f32 %v1058, %v1093
    %v1153 = vadd.f32 %v1060, %v1097
    %v1154 = vadd.f32 %v903, %v1085
    %v1155 = vadd.f32 %v905, %v1089
    %v1156 = vadd.f32 %v1064, %v1093
    %v1157 = vadd.f32 %v1066, %v1097
    %v1158 = vadd.f32 %v909, %v1085
    %v1159 = vadd.f32 %v911, %v1089
    %v1160 = vadd.f32 %v1070, %v1093
    %v1161 = vadd.f32 %v1072, %v1097
    %v1162 = vadd.f32 %v915, %v1085
    %v1163 = vadd.f32 %v917, %v1089
    %v1164 = vadd.f32 %v1076, %v1093
    %v1165 = vadd.f32 %v1078, %v1097
    %v1166 = vmax.f32 %v1102, 0.0
    %v1167 = vmax.f32 %v1103, 0.0
    %v1168 = vmax.f32 %v1104, 0.0
    %v1169 = vmax.f32 %v1105, 0.0
    %v1170 = vmax.f32 %v1106, 0.0
    %v1171 = vmax.f32 %v1107, 0.0
    %v1172 = vmax.f32 %v1108, 0.0
    %v1173 = vmax.f32 %v1109, 0.0
    %v1174 = vmax.f32 %v1110, 0.0
    %v1175 = vmax.f32 %v1111, 0.0
    %v1176 = vmax.f32 %v1112, 0.0
    %v1177 = vmax.f32 %v1113, 0.0
    %v1178 = vmax.f32 %v1114, 0.0
    %v1179 = vmax.f32 %v1115, 0.0
    %v1180 = vmax.f32 %v1116, 0.0
    %v1181 = vmax.f32 %v1117, 0.0
    %v1182 = vmax.f32 %v1118, 0.0
    %v1183 = vmax.f32 %v1119, 0.0
    %v1184 = vmax.f32 %v1120, 0.0
    %v1185 = vmax.f32 %v1121, 0.0
    %v1186 = vmax.f32 %v1122, 0.0
    %v1187 = vmax.f32 %v1123, 0.0
    %v1188 = vmax.f32 %v1124, 0.0
    %v1189 = vmax.f32 %v1125, 0.0
    %v1190 = vmax.f32 %v1126, 0.0
    %v1191 = vmax.f32 %v1127, 0.0
    %v1192 = vmax.f32 %v1128, 0.0
    %v1193 = vmax.f32 %v1129, 0.0
    %v1194 = vmax.f32 %v1130, 0.0
    %v1195 = vmax.f32 %v1131, 0.0
    %v1196 = vmax.f32 %v1132, 0.0
    %v1197 = vmax.f32 %v1133, 0.0
    %v1198 = vmax.f32 %v1134, 0.0
    %v1199 = vmax.f32 %v1135, 0.0
    %v1200 = vmax.f32 %v1136, 0.0
    %v1201 = vmax.f32 %v1137, 0.0
    %v1202 = vmax.f32 %v1138, 0.0
    %v1203 = vmax.f32 %v1139, 0.0
    %v1204 = vmax.f32 %v1140, 0.0
    %v1205 = vmax.f32 %v1141, 0.0
    %v1206 = vmax.f32 %v1142, 0.0
    %v1207 = vmax.f32 %v1143, 0.0
    %v1208 = vmax.f32 %v1144, 0.0
    %v1209 = vmax.f32 %v1145, 0.0
    %v1210 = vmax.f32 %v1146, 0.0
    %v1211 = vmax.f32 %v1147, 0.0
    %v1212 = vmax.f32 %v1148, 0.0
    %v1213 = vmax.f32 %v1149, 0.0
    %v1214 = vmax.f32 %v1150, 0.0
    %v1215 = vmax.f32 %v1151, 0.0
    %v1216 = vmax.f32 %v1152, 0.0
    %v1217 = vmax.f32 %v1153, 0.0
    %v1218 = vmax.f32 %v1154, 0.0
    %v1219 = vmax.f32 %v1155, 0.0
    %v1220 = vmax.f32 %v1156, 0.0
    %v1221 = vmax.f32 %v1157, 0.0
    %v1222 = vmax.f32 %v1158, 0.0
    %v1223 = vmax.f32 %v1159, 0.0
    %v1224 = vmax.f32 %v1160, 0.0
    %v1225 = vmax.f32 %v1161, 0.0
    %v1226 = vmax.f32 %v1162, 0.0
    %v1227 = vmax.f32 %v1163, 0.0
    %v1228 = vmax.f32 %v1164, 0.0
    %v1229 = vmax.f32 %v1165, 0.0
    %v1230 = vadd.f32 %v1166, %v1170
    %v1231 = vadd.f32 %v1230, %v1174
    %v1232 = vadd.f32 %v1231, %v1178
    %v1233 = vadd.f32 %v1232, %v1182
    %v1234 = vadd.f32 %v1233, %v1186
    %v1235 = vadd.f32 %v1234, %v1190
    %v1236 = vadd.f32 %v1235, %v1194
    %v1237 = vadd.f32 %v1236, %v1198
    %v1238 = vadd.f32 %v1237, %v1202
    %v1239 = vadd.f32 %v1238, %v1206
    %v1240 = vadd.f32 %v1239, %v1210
    %v1241 = vadd.f32 %v1240, %v1214
    %v1242 = vadd.f32 %v1241, %v1218
    %v1243 = vadd.f32 %v1242, %v1222
    %v1244 = vadd.f32 %v1243, %v1226
    %v1245 = vrot.slane %v1244, 4
    %v1246 = vadd.f32 %v1244, %v1245
    %v1247 = vrot.slane %v1246, 2
    %v1248 = vadd.f32 %v1246, %v1247
    %v1249 = vrot.slane %v1248, 1
    %v1250 = vadd.f32 %v1248, %v1249
    %v1251 = vadd.f32 %v1167, %v1171
    %v1252 = vadd.f32 %v1251, %v1175
    %v1253 = vadd.f32 %v1252, %v1179
    %v1254 = vadd.f32 %v1253, %v1183
    %v1255 = vadd.f32 %v1254, %v1187
    %v1256 = vadd.f32 %v1255, %v1191
    %v1257 = vadd.f32 %v1256, %v1195
    %v1258 = vadd.f32 %v1257, %v1199
    %v1259 = vadd.f32 %v1258, %v1203
    %v1260 = vadd.f32 %v1259, %v1207
    %v1261 = vadd.f32 %v1260, %v1211
    %v1262 = vadd.f32 %v1261, %v1215
    %v1263 = vadd.f32 %v1262, %v1219
    %v1264 = vadd.f32 %v1263, %v1223
    %v1265 = vadd.f32 %v1264, %v1227
    %v1266 = vrot.slane %v1265, 4
    %v1267 = vadd.f32 %v1265, %v1266
    %v1268 = vrot.slane %v1267, 2
    %v1269 = vadd.f32 %v1267, %v1268
    %v1270 = vrot.slane %v1269, 1
    %v1271 = vadd.f32 %v1269, %v1270
    %v1272 = vadd.f32 %v1168, %v1172
    %v1273 = vadd.f32 %v1272, %v1176
    %v1274 = vadd.f32 %v1273, %v1180
    %v1275 = vadd.f32 %v1274, %v1184
    %v1276 = vadd.f32 %v1275, %v1188
    %v1277 = vadd.f32 %v1276, %v1192
    %v1278 = vadd.f32 %v1277, %v1196
    %v1279 = vadd.f32 %v1278, %v1200
    %v1280 = vadd.f32 %v1279, %v1204
    %v1281 = vadd.f32 %v1280, %v1208
    %v1282 = vadd.f32 %v1281, %v1212
    %v1283 = vadd.f32 %v1282, %v1216
    %v1284 = vadd.f32 %v1283, %v1220
    %v1285 = vadd.f32 %v1284, %v1224
    %v1286 = vadd.f32 %v1285, %v1228
    %v1287 = vrot.slane %v1286, 4
    %v1288 = vadd.f32 %v1286, %v1287
    %v1289 = vrot.slane %v1288, 2
    %v1290 = vadd.f32 %v1288, %v1289
    %v1291 = vrot.slane %v1290, 1
    %v1292 = vadd.f32 %v1290, %v1291
    %v1293 = vadd.f32 %v1169, %v1173
    %v1294 = vadd.f32 %v1293, %v1177
    %v1295 = vadd.f32 %v1294, %v1181
    %v1296 = vadd.f32 %v1295, %v1185
    %v1297 = vadd.f32 %v1296, %v1189
    %v1298 = vadd.f32 %v1297, %v1193
    %v1299 = vadd.f32 %v1298, %v1197
    %v1300 = vadd.f32 %v1299, %v1201
    %v1301 = vadd.f32 %v1300, %v1205
    %v1302 = vadd.f32 %v1301, %v1209
    %v1303 = vadd.f32 %v1302, %v1213
    %v1304 = vadd.f32 %v1303, %v1217
    %v1305 = vadd.f32 %v1304, %v1221
    %v1306 = vadd.f32 %v1305, %v1225
    %v1307 = vadd.f32 %v1306, %v1229
    %v1308 = vrot.slane %v1307, 4
    %v1309 = vadd.f32 %v1307, %v1308
    %v1310 = vrot.slane %v1309, 2
    %v1311 = vadd.f32 %v1309, %v1310
    %v1312 = vrot.slane %v1311, 1
    %v1313 = vadd.f32 %v1311, %v1312
    %v1314 = vmul.f32 %v1250, 0.0078125
    %v1315 = vmul.f32 %v1271, 0.0078125
    %v1316 = vmul.f32 %v1292, 0.0078125
    %v1317 = vmul.f32 %v1313, 0.0078125
    %v1318 = vmul.f32 %v1166, %v1166
    %v1319 = vmul.f32 %v1167, %v1167
    %v1320 = vmul.f32 %v1168, %v1168
    %v1321 = vmul.f32 %v1169, %v1169
    %v1322 = vmul.f32 %v1170, %v1170
    %v1323 = vmul.f32 %v1171, %v1171
    %v1324 = vmul.f32 %v1172, %v1172
    %v1325 = vmul.f32 %v1173, %v1173
    %v1326 = vmul.f32 %v1174, %v1174
    %v1327 = vmul.f32 %v1175, %v1175
    %v1328 = vmul.f32 %v1176, %v1176
    %v1329 = vmul.f32 %v1177, %v1177
    %v1330 = vmul.f32 %v1178, %v1178
    %v1331 = vmul.f32 %v1179, %v1179
    %v1332 = vmul.f32 %v1180, %v1180
    %v1333 = vmul.f32 %v1181, %v1181
    %v1334 = vmul.f32 %v1182, %v1182
    %v1335 = vmul.f32 %v1183, %v1183
    %v1336 = vmul.f32 %v1184, %v1184
    %v1337 = vmul.f32 %v1185, %v1185
    %v1338 = vmul.f32 %v1186, %v1186
    %v1339 = vmul.f32 %v1187, %v1187
    %v1340 = vmul.f32 %v1188, %v1188
    %v1341 = vmul.f32 %v1189, %v1189
    %v1342 = vmul.f32 %v1190, %v1190
    %v1343 = vmul.f32 %v1191, %v1191
    %v1344 = vmul.f32 %v1192, %v1192
    %v1345 = vmul.f32 %v1193, %v1193
    %v1346 = vmul.f32 %v1194, %v1194
    %v1347 = vmul.f32 %v1195, %v1195
    %v1348 = vmul.f32 %v1196, %v1196
    %v1349 = vmul.f32 %v1197, %v1197
    %v1350 = vmul.f32 %v1198, %v1198
    %v1351 = vmul.f32 %v1199, %v1199
    %v1352 = vmul.f32 %v1200, %v1200
    %v1353 = vmul.f32 %v1201, %v1201
    %v1354 = vmul.f32 %v1202, %v1202
    %v1355 = vmul.f32 %v1203, %v1203
    %v1356 = vmul.f32 %v1204, %v1204
    %v1357 = vmul.f32 %v1205, %v1205
    %v1358 = vmul.f32 %v1206, %v1206
    %v1359 = vmul.f32 %v1207, %v1207
    %v1360 = vmul.f32 %v1208, %v1208
    %v1361 = vmul.f32 %v1209, %v1209
    %v1362 = vmul.f32 %v1210, %v1210
    %v1363 = vmul.f32 %v1211, %v1211
    %v1364 = vmul.f32 %v1212, %v1212
    %v1365 = vmul.f32 %v1213, %v1213
    %v1366 = vmul.f32 %v1214, %v1214
    %v1367 = vmul.f32 %v1215, %v1215
    %v1368 = vmul.f32 %v1216, %v1216
    %v1369 = vmul.f32 %v1217, %v1217
    %v1370 = vmul.f32 %v1218, %v1218
    %v1371 = vmul.f32 %v1219, %v1219
    %v1372 = vmul.f32 %v1220, %v1220
    %v1373 = vmul.f32 %v1221, %v1221
    %v1374 = vmul.f32 %v1222, %v1222
    %v1375 = vmul.f32 %v1223, %v1223
    %v1376 = vmul.f32 %v1224, %v1224
    %v1377 = vmul.f32 %v1225, %v1225
    %v1378 = vmul.f32 %v1226, %v1226
    %v1379 = vmul.f32 %v1227, %v1227
    %v1380 = vmul.f32 %v1228, %v1228
    %v1381 = vmul.f32 %v1229, %v1229
    %v1382 = vadd.f32 %v1318, %v1322
    %v1383 = vadd.f32 %v1382, %v1326
    %v1384 = vadd.f32 %v1383, %v1330
    %v1385 = vadd.f32 %v1384, %v1334
    %v1386 = vadd.f32 %v1385, %v1338
    %v1387 = vadd.f32 %v1386, %v1342
    %v1388 = vadd.f32 %v1387, %v1346
    %v1389 = vadd.f32 %v1388, %v1350
    %v1390 = vadd.f32 %v1389, %v1354
    %v1391 = vadd.f32 %v1390, %v1358
    %v1392 = vadd.f32 %v1391, %v1362
    %v1393 = vadd.f32 %v1392, %v1366
    %v1394 = vadd.f32 %v1393, %v1370
    %v1395 = vadd.f32 %v1394, %v1374
    %v1396 = vadd.f32 %v1395, %v1378
    %v1397 = vrot.slane %v1396, 4
    %v1398 = vadd.f32 %v1396, %v1397
    %v1399 = vrot.slane %v1398, 2
    %v1400 = vadd.f32 %v1398, %v1399
    %v1401 = vrot.slane %v1400, 1
    %v1402 = vadd.f32 %v1400, %v1401
    %v1403 = vadd.f32 %v1319, %v1323
    %v1404 = vadd.f32 %v1403, %v1327
    %v1405 = vadd.f32 %v1404, %v1331
    %v1406 = vadd.f32 %v1405, %v1335
    %v1407 = vadd.f32 %v1406, %v1339
    %v1408 = vadd.f32 %v1407, %v1343
    %v1409 = vadd.f32 %v1408, %v1347
    %v1410 = vadd.f32 %v1409, %v1351
    %v1411 = vadd.f32 %v1410, %v1355
    %v1412 = vadd.f32 %v1411, %v1359
    %v1413 = vadd.f32 %v1412, %v1363
    %v1414 = vadd.f32 %v1413, %v1367
    %v1415 = vadd.f32 %v1414, %v1371
    %v1416 = vadd.f32 %v1415, %v1375
    %v1417 = vadd.f32 %v1416, %v1379
    %v1418 = vrot.slane %v1417, 4
    %v1419 = vadd.f32 %v1417, %v1418
    %v1420 = vrot.slane %v1419, 2
    %v1421 = vadd.f32 %v1419, %v1420
    %v1422 = vrot.slane %v1421, 1
    %v1423 = vadd.f32 %v1421, %v1422
    %v1424 = vadd.f32 %v1320, %v1324
    %v1425 = vadd.f32 %v1424, %v1328
    %v1426 = vadd.f32 %v1425, %v1332
    %v1427 = vadd.f32 %v1426, %v1336
    %v1428 = vadd.f32 %v1427, %v1340
    %v1429 = vadd.f32 %v1428, %v1344
    %v1430 = vadd.f32 %v1429, %v1348
    %v1431 = vadd.f32 %v1430, %v1352
    %v1432 = vadd.f32 %v1431, %v1356
    %v1433 = vadd.f32 %v1432, %v1360
    %v1434 = vadd.f32 %v1433, %v1364
    %v1435 = vadd.f32 %v1434, %v1368
    %v1436 = vadd.f32 %v1435, %v1372
    %v1437 = vadd.f32 %v1436, %v1376
    %v1438 = vadd.f32 %v1437, %v1380
    %v1439 = vrot.slane %v1438, 4
    %v1440 = vadd.f32 %v1438, %v1439
    %v1441 = vrot.slane %v1440, 2
    %v1442 = vadd.f32 %v1440, %v1441
    %v1443 = vrot.slane %v1442, 1
    %v1444 = vadd.f32 %v1442, %v1443
    %v1445 = vadd.f32 %v1321, %v1325
    %v1446 = vadd.f32 %v1445, %v1329
    %v1447 = vadd.f32 %v1446, %v1333
    %v1448 = vadd.f32 %v1447, %v1337
    %v1449 = vadd.f32 %v1448, %v1341
    %v1450 = vadd.f32 %v1449, %v1345
    %v1451 = vadd.f32 %v1450, %v1349
    %v1452 = vadd.f32 %v1451, %v1353
    %v1453 = vadd.f32 %v1452, %v1357
    %v1454 = vadd.f32 %v1453, %v1361
    %v1455 = vadd.f32 %v1454, %v1365
    %v1456 = vadd.f32 %v1455, %v1369
    %v1457 = vadd.f32 %v1456, %v1373
    %v1458 = vadd.f32 %v1457, %v1377
    %v1459 = vadd.f32 %v1458, %v1381
    %v1460 = vrot.slane %v1459, 4
    %v1461 = vadd.f32 %v1459, %v1460
    %v1462 = vrot.slane %v1461, 2
    %v1463 = vadd.f32 %v1461, %v1462
    %v1464 = vrot.slane %v1463, 1
    %v1465 = vadd.f32 %v1463, %v1464
    %v1466 = vmul.f32 %v1402, 0.0078125
    %v1467 = vmul.f32 %v1423, 0.0078125
    %v1468 = vmul.f32 %v1444, 0.0078125
    %v1469 = vmul.f32 %v1465, 0.0078125
    %v1470 = vmul.f32 %v1314, %v1314
    %v1471 = vmul.f32 %v1315, %v1315
    %v1472 = vmul.f32 %v1316, %v1316
    %v1473 = vmul.f32 %v1317, %v1317
    %v1474 = vsub.f32 %v1466, %v1470
    %v1475 = vsub.f32 %v1467, %v1471
    %v1476 = vsub.f32 %v1468, %v1472
    %v1477 = vsub.f32 %v1469, %v1473
    %v1478 = vadd.f32 %v1474, 1e-05
    %v1479 = vadd.f32 %v1475, 1e-05
    %v1480 = vadd.f32 %v1476, 1e-05
    %v1481 = vadd.f32 %v1477, 1e-05
    %v1482 = vrsqrt.pop %v1478
    %v1483 = vrsqrt.pop %v1479
    %v1484 = vrsqrt.pop %v1480
    %v1485 = vrsqrt.pop %v1481
    %v1486 = vld [vmem:[#allocation8] sm:$0xf]
    %v1488 = vlaneseq
    %v1489 = vshrl.u32 %v1488, 7
    %v1490 = vsub.s32 0, %v1489
    %v1491 = vrot.slane %v1486, %v1490
    %v1492 = vlaneseq
    %v1493 = vshrl.u32 %v1492, 7
    %v1494 = vsub.s32 1, %v1493
    %v1495 = vrot.slane %v1486, %v1494
    %v1496 = vlaneseq
    %v1497 = vshrl.u32 %v1496, 7
    %v1498 = vsub.s32 2, %v1497
    %v1499 = vrot.slane %v1486, %v1498
    %v1500 = vlaneseq
    %v1501 = vshrl.u32 %v1500, 7
    %v1502 = vsub.s32 3, %v1501
    %v1503 = vrot.slane %v1486, %v1502
    %v1508 = vmul.f32 %v1482, %v1491
    %v1509 = vmul.f32 %v1483, %v1495
    %v1510 = vmul.f32 %v1484, %v1499
    %v1511 = vmul.f32 %v1485, %v1503
    %v1512 = vld [vmem:[#allocation10] sm:$0xf]
    %v1513 = vmul.f32 %v1314, %v1508
    %v1514 = vmul.f32 %v1315, %v1509
    %v1515 = vmul.f32 %v1316, %v1510
    %v1516 = vmul.f32 %v1317, %v1511
    %v1521 = vcombine.low %v1513, %v1514
    %v1522 = vcombine.low %v1515, %v1516
    %v1524 = vunpack.c.l.s4 1966171168
    %v1525 = vunpack.c.0.s8 %v1524
    %v1526 = vlaneseq
    %v1527 = vshrl.u32 %v1526, 7
    %v1528 = vsub.s32 %v1525, %v1527
    %v1529 = vrot.slane %v1521, %v1528
    %v1531 = vunpack.c.l.s4 1966171168
    %v1532 = vunpack.c.0.s8 %v1531
    %v1533 = vlaneseq
    %v1534 = vshrl.u32 %v1533, 7
    %v1535 = vsub.s32 %v1532, %v1534
    %v1536 = vrot.slane %v1522, %v1535
    %v1537 = vcombine.low %v1529, %v1536
    %v1539 = vunpack.c.l.s4 1966171168
    %v1540 = vunpack.c.0.s8 %v1539
    %v1541 = vlaneseq
    %v1542 = vshrl.u32 %v1541, 7
    %v1543 = vsub.s32 %v1540, %v1542
    %v1544 = vrot.slane %v1537, %v1543
    %v1546 = vsub.f32 %v1512, %v1544
    %v1547 = vlaneseq
    %v1548 = vshrl.u32 %v1547, 7
    %v1549 = vsub.s32 0, %v1548
    %v1550 = vrot.slane %v1508, %v1549
    %v1551 = vlaneseq
    %v1552 = vshrl.u32 %v1551, 7
    %v1553 = vsub.s32 0, %v1552
    %v1554 = vrot.slane %v1509, %v1553
    %v1555 = vlaneseq
    %v1556 = vshrl.u32 %v1555, 7
    %v1557 = vsub.s32 0, %v1556
    %v1558 = vrot.slane %v1510, %v1557
    %v1559 = vlaneseq
    %v1560 = vshrl.u32 %v1559, 7
    %v1561 = vsub.s32 0, %v1560
    %v1562 = vrot.slane %v1511, %v1561
    %v1563 = vmul.f32 %v1166, %v1550
    %v1564 = vmul.f32 %v1167, %v1554
    %v1565 = vmul.f32 %v1168, %v1558
    %v1566 = vmul.f32 %v1169, %v1562
    %v1567 = vmul.f32 %v1170, %v1550
    %v1568 = vmul.f32 %v1171, %v1554
    %v1569 = vmul.f32 %v1172, %v1558
    %v1570 = vmul.f32 %v1173, %v1562
    %v1571 = vmul.f32 %v1174, %v1550
    %v1572 = vmul.f32 %v1175, %v1554
    %v1573 = vmul.f32 %v1176, %v1558
    %v1574 = vmul.f32 %v1177, %v1562
    %v1575 = vmul.f32 %v1178, %v1550
    %v1576 = vmul.f32 %v1179, %v1554
    %v1577 = vmul.f32 %v1180, %v1558
    %v1578 = vmul.f32 %v1181, %v1562
    %v1579 = vmul.f32 %v1182, %v1550
    %v1580 = vmul.f32 %v1183, %v1554
    %v1581 = vmul.f32 %v1184, %v1558
    %v1582 = vmul.f32 %v1185, %v1562
    %v1583 = vmul.f32 %v1186, %v1550
    %v1584 = vmul.f32 %v1187, %v1554
    %v1585 = vmul.f32 %v1188, %v1558
    %v1586 = vmul.f32 %v1189, %v1562
    %v1587 = vmul.f32 %v1190, %v1550
    %v1588 = vmul.f32 %v1191, %v1554
    %v1589 = vmul.f32 %v1192, %v1558
    %v1590 = vmul.f32 %v1193, %v1562
    %v1591 = vmul.f32 %v1194, %v1550
    %v1592 = vmul.f32 %v1195, %v1554
    %v1593 = vmul.f32 %v1196, %v1558
    %v1594 = vmul.f32 %v1197, %v1562
    %v1595 = vmul.f32 %v1198, %v1550
    %v1596 = vmul.f32 %v1199, %v1554
    %v1597 = vmul.f32 %v1200, %v1558
    %v1598 = vmul.f32 %v1201, %v1562
    %v1599 = vmul.f32 %v1202, %v1550
    %v1600 = vmul.f32 %v1203, %v1554
    %v1601 = vmul.f32 %v1204, %v1558
    %v1602 = vmul.f32 %v1205, %v1562
    %v1603 = vmul.f32 %v1206, %v1550
    %v1604 = vmul.f32 %v1207, %v1554
    %v1605 = vmul.f32 %v1208, %v1558
    %v1606 = vmul.f32 %v1209, %v1562
    %v1607 = vmul.f32 %v1210, %v1550
    %v1608 = vmul.f32 %v1211, %v1554
    %v1609 = vmul.f32 %v1212, %v1558
    %v1610 = vmul.f32 %v1213, %v1562
    %v1611 = vmul.f32 %v1214, %v1550
    %v1612 = vmul.f32 %v1215, %v1554
    %v1613 = vmul.f32 %v1216, %v1558
    %v1614 = vmul.f32 %v1217, %v1562
    %v1615 = vmul.f32 %v1218, %v1550
    %v1616 = vmul.f32 %v1219, %v1554
    %v1617 = vmul.f32 %v1220, %v1558
    %v1618 = vmul.f32 %v1221, %v1562
    %v1619 = vmul.f32 %v1222, %v1550
    %v1620 = vmul.f32 %v1223, %v1554
    %v1621 = vmul.f32 %v1224, %v1558
    %v1622 = vmul.f32 %v1225, %v1562
    %v1623 = vmul.f32 %v1226, %v1550
    %v1624 = vmul.f32 %v1227, %v1554
    %v1625 = vmul.f32 %v1228, %v1558
    %v1626 = vmul.f32 %v1229, %v1562
    %v1628 = vlaneseq
    %v1629 = vshrl.u32 %v1628, 7
    %v1630 = vsub.s32 0, %v1629
    %v1631 = vrot.slane %v1546, %v1630
    %v1632 = vlaneseq
    %v1633 = vshrl.u32 %v1632, 7
    %v1634 = vsub.s32 1, %v1633
    %v1635 = vrot.slane %v1546, %v1634
    %v1636 = vlaneseq
    %v1637 = vshrl.u32 %v1636, 7
    %v1638 = vsub.s32 2, %v1637
    %v1639 = vrot.slane %v1546, %v1638
    %v1640 = vlaneseq
    %v1641 = vshrl.u32 %v1640, 7
    %v1642 = vsub.s32 3, %v1641
    %v1643 = vrot.slane %v1546, %v1642
    %v1648 = vadd.f32 %v1563, %v1631
    %v1649 = vadd.f32 %v1564, %v1635
    %v1650 = vadd.f32 %v1565, %v1639
    %v1651 = vadd.f32 %v1566, %v1643
    %v1652 = vadd.f32 %v1567, %v1631
    %v1653 = vadd.f32 %v1568, %v1635
    %v1654 = vadd.f32 %v1569, %v1639
    %v1655 = vadd.f32 %v1570, %v1643
    %v1656 = vadd.f32 %v1571, %v1631
    %v1657 = vadd.f32 %v1572, %v1635
    %v1658 = vadd.f32 %v1573, %v1639
    %v1659 = vadd.f32 %v1574, %v1643
    %v1660 = vadd.f32 %v1575, %v1631
    %v1661 = vadd.f32 %v1576, %v1635
    %v1662 = vadd.f32 %v1577, %v1639
    %v1663 = vadd.f32 %v1578, %v1643
    %v1664 = vadd.f32 %v1579, %v1631
    %v1665 = vadd.f32 %v1580, %v1635
    %v1666 = vadd.f32 %v1581, %v1639
    %v1667 = vadd.f32 %v1582, %v1643
    %v1668 = vadd.f32 %v1583, %v1631
    %v1669 = vadd.f32 %v1584, %v1635
    %v1670 = vadd.f32 %v1585, %v1639
    %v1671 = vadd.f32 %v1586, %v1643
    %v1672 = vadd.f32 %v1587, %v1631
    %v1673 = vadd.f32 %v1588, %v1635
    %v1674 = vadd.f32 %v1589, %v1639
    %v1675 = vadd.f32 %v1590, %v1643
    %v1676 = vadd.f32 %v1591, %v1631
    %v1677 = vadd.f32 %v1592, %v1635
    %v1678 = vadd.f32 %v1593, %v1639
    %v1679 = vadd.f32 %v1594, %v1643
    %v1680 = vadd.f32 %v1595, %v1631
    %v1681 = vadd.f32 %v1596, %v1635
    %v1682 = vadd.f32 %v1597, %v1639
    %v1683 = vadd.f32 %v1598, %v1643
    %v1684 = vadd.f32 %v1599, %v1631
    %v1685 = vadd.f32 %v1600, %v1635
    %v1686 = vadd.f32 %v1601, %v1639
    %v1687 = vadd.f32 %v1602, %v1643
    %v1688 = vadd.f32 %v1603, %v1631
    %v1689 = vadd.f32 %v1604, %v1635
    %v1690 = vadd.f32 %v1605, %v1639
    %v1691 = vadd.f32 %v1606, %v1643
    %v1692 = vadd.f32 %v1607, %v1631
    %v1693 = vadd.f32 %v1608, %v1635
    %v1694 = vadd.f32 %v1609, %v1639
    %v1695 = vadd.f32 %v1610, %v1643
    %v1696 = vadd.f32 %v1611, %v1631
    %v1697 = vadd.f32 %v1612, %v1635
    %v1698 = vadd.f32 %v1613, %v1639
    %v1699 = vadd.f32 %v1614, %v1643
    %v1700 = vadd.f32 %v1615, %v1631
    %v1701 = vadd.f32 %v1616, %v1635
    %v1702 = vadd.f32 %v1617, %v1639
    %v1703 = vadd.f32 %v1618, %v1643
    %v1704 = vadd.f32 %v1619, %v1631
    %v1705 = vadd.f32 %v1620, %v1635
    %v1706 = vadd.f32 %v1621, %v1639
    %v1707 = vadd.f32 %v1622, %v1643
    %v1708 = vadd.f32 %v1623, %v1631
    %v1709 = vadd.f32 %v1624, %v1635
    %v1710 = vadd.f32 %v1625, %v1639
    %v1711 = vadd.f32 %v1626, %v1643
    %v1712 = vld [vmem:[#allocation11] sm:$0xff]
    %v1713 = vld [vmem:[#allocation11 + $0x8] sm:$0xff]
    %v1714 = vld [vmem:[#allocation11 + $0x10] sm:$0xff]
    %v1715 = vld [vmem:[#allocation11 + $0x18] sm:$0xff]
    %v1716 = vld [vmem:[#allocation11 + $0x20] sm:$0xff]
    %v1717 = vld [vmem:[#allocation11 + $0x28] sm:$0xff]
    %v1718 = vld [vmem:[#allocation11 + $0x30] sm:$0xff]
    %v1719 = vld [vmem:[#allocation11 + $0x38] sm:$0xff]
    %v1720 = vld [vmem:[#allocation11 + $0x40] sm:$0xff]
    %v1721 = vld [vmem:[#allocation11 + $0x48] sm:$0xff]
    %v1722 = vld [vmem:[#allocation11 + $0x50] sm:$0xff]
    %v1723 = vld [vmem:[#allocation11 + $0x58] sm:$0xff]
    %v1724 = vld [vmem:[#allocation11 + $0x60] sm:$0xff]
    %v1725 = vld [vmem:[#allocation11 + $0x68] sm:$0xff]
    %v1726 = vld [vmem:[#allocation11 + $0x70] sm:$0xff]
    %v1727 = vld [vmem:[#allocation11 + $0x78] sm:$0xff]
    %v1728 = vld [vmem:[#allocation11 + $0x80] sm:$0xff]
    %v1729 = vld [vmem:[#allocation11 + $0x88] sm:$0xff]
    %v1730 = vld [vmem:[#allocation11 + $0x90] sm:$0xff]
    %v1731 = vld [vmem:[#allocation11 + $0x98] sm:$0xff]
    %v1732 = vld [vmem:[#allocation11 + $0xa0] sm:$0xff]
    %v1733 = vld [vmem:[#allocation11 + $0xa8] sm:$0xff]
    %v1734 = vld [vmem:[#allocation11 + $0xb0] sm:$0xff]
    %v1735 = vld [vmem:[#allocation11 + $0xb8] sm:$0xff]
    %v1736 = vld [vmem:[#allocation11 + $0xc0] sm:$0xff]
    %v1737 = vld [vmem:[#allocation11 + $0xc8] sm:$0xff]
    %v1738 = vld [vmem:[#allocation11 + $0xd0] sm:$0xff]
    %v1739 = vld [vmem:[#allocation11 + $0xd8] sm:$0xff]
    %v1740 = vld [vmem:[#allocation11 + $0xe0] sm:$0xff]
    %v1741 = vld [vmem:[#allocation11 + $0xe8] sm:$0xff]
    %v1742 = vld [vmem:[#allocation11 + $0xf0] sm:$0xff]
    %v1743 = vld [vmem:[#allocation11 + $0xf8] sm:$0xff]
    %v1744 = vld [vmem:[#allocation11 + $0x100] sm:$0xff]
    %v1745 = vld [vmem:[#allocation11 + $0x108] sm:$0xff]
    %v1746 = vld [vmem:[#allocation11 + $0x110] sm:$0xff]
    %v1747 = vld [vmem:[#allocation11 + $0x118] sm:$0xff]
    %v1748 = vld [vmem:[#allocation11 + $0x120] sm:$0xff]
    %v1749 = vld [vmem:[#allocation11 + $0x128] sm:$0xff]
    %v1750 = vld [vmem:[#allocation11 + $0x130] sm:$0xff]
    %v1751 = vld [vmem:[#allocation11 + $0x138] sm:$0xff]
    %v1752 = vld [vmem:[#allocation11 + $0x140] sm:$0xff]
    %v1753 = vld [vmem:[#allocation11 + $0x148] sm:$0xff]
    %v1754 = vld [vmem:[#allocation11 + $0x150] sm:$0xff]
    %v1755 = vld [vmem:[#allocation11 + $0x158] sm:$0xff]
    %v1756 = vld [vmem:[#allocation11 + $0x160] sm:$0xff]
    %v1757 = vld [vmem:[#allocation11 + $0x168] sm:$0xff]
    %v1758 = vld [vmem:[#allocation11 + $0x170] sm:$0xff]
    %v1759 = vld [vmem:[#allocation11 + $0x178] sm:$0xff]
    %v1760 = vld [vmem:[#allocation11 + $0x180] sm:$0xff]
    %v1761 = vld [vmem:[#allocation11 + $0x188] sm:$0xff]
    %v1762 = vld [vmem:[#allocation11 + $0x190] sm:$0xff]
    %v1763 = vld [vmem:[#allocation11 + $0x198] sm:$0xff]
    %v1764 = vld [vmem:[#allocation11 + $0x1a0] sm:$0xff]
    %v1765 = vld [vmem:[#allocation11 + $0x1a8] sm:$0xff]
    %v1766 = vld [vmem:[#allocation11 + $0x1b0] sm:$0xff]
    %v1767 = vld [vmem:[#allocation11 + $0x1b8] sm:$0xff]
    %v1768 = vld [vmem:[#allocation11 + $0x1c0] sm:$0xff]
    %v1769 = vld [vmem:[#allocation11 + $0x1c8] sm:$0xff]
    %v1770 = vld [vmem:[#allocation11 + $0x1d0] sm:$0xff]
    %v1771 = vld [vmem:[#allocation11 + $0x1d8] sm:$0xff]
    %v1772 = vld [vmem:[#allocation11 + $0x1e0] sm:$0xff]
    %v1773 = vld [vmem:[#allocation11 + $0x1e8] sm:$0xff]
    %v1774 = vld [vmem:[#allocation11 + $0x1f0] sm:$0xff]
    %v1775 = vld [vmem:[#allocation11 + $0x1f8] sm:$0xff]
    %v1776 = vld [vmem:[#allocation11 + $0x200] sm:$0xff]
    %v1777 = vld [vmem:[#allocation11 + $0x208] sm:$0xff]
    %v1778 = vld [vmem:[#allocation11 + $0x210] sm:$0xff]
    %v1779 = vld [vmem:[#allocation11 + $0x218] sm:$0xff]
    %v1780 = vld [vmem:[#allocation11 + $0x220] sm:$0xff]
    %v1781 = vld [vmem:[#allocation11 + $0x228] sm:$0xff]
    %v1782 = vld [vmem:[#allocation11 + $0x230] sm:$0xff]
    %v1783 = vld [vmem:[#allocation11 + $0x238] sm:$0xff]
    %v1784 = vld [vmem:[#allocation11 + $0x240] sm:$0xff]
    %v1785 = vld [vmem:[#allocation11 + $0x248] sm:$0xff]
    %v1786 = vld [vmem:[#allocation11 + $0x250] sm:$0xff]
    %v1787 = vld [vmem:[#allocation11 + $0x258] sm:$0xff]
    %v1788 = vld [vmem:[#allocation11 + $0x260] sm:$0xff]
    %v1789 = vld [vmem:[#allocation11 + $0x268] sm:$0xff]
    %v1790 = vld [vmem:[#allocation11 + $0x270] sm:$0xff]
    %v1791 = vld [vmem:[#allocation11 + $0x278] sm:$0xff]
    %v1792 = vld [vmem:[#allocation11 + $0x280] sm:$0xff]
    %v1793 = vld [vmem:[#allocation11 + $0x288] sm:$0xff]
    %v1794 = vld [vmem:[#allocation11 + $0x290] sm:$0xff]
    %v1795 = vld [vmem:[#allocation11 + $0x298] sm:$0xff]
    %v1796 = vld [vmem:[#allocation11 + $0x2a0] sm:$0xff]
    %v1797 = vld [vmem:[#allocation11 + $0x2a8] sm:$0xff]
    %v1798 = vld [vmem:[#allocation11 + $0x2b0] sm:$0xff]
    %v1799 = vld [vmem:[#allocation11 + $0x2b8] sm:$0xff]
    %v1800 = vld [vmem:[#allocation11 + $0x2c0] sm:$0xff]
    %v1801 = vld [vmem:[#allocation11 + $0x2c8] sm:$0xff]
    %v1802 = vld [vmem:[#allocation11 + $0x2d0] sm:$0xff]
    %v1803 = vld [vmem:[#allocation11 + $0x2d8] sm:$0xff]
    %v1804 = vld [vmem:[#allocation11 + $0x2e0] sm:$0xff]
    %v1805 = vld [vmem:[#allocation11 + $0x2e8] sm:$0xff]
    %v1806 = vld [vmem:[#allocation11 + $0x2f0] sm:$0xff]
    %v1807 = vld [vmem:[#allocation11 + $0x2f8] sm:$0xff]
    %v1808 = vld [vmem:[#allocation11 + $0x300] sm:$0xff]
    %v1809 = vld [vmem:[#allocation11 + $0x308] sm:$0xff]
    %v1810 = vld [vmem:[#allocation11 + $0x310] sm:$0xff]
    %v1811 = vld [vmem:[#allocation11 + $0x318] sm:$0xff]
    %v1812 = vld [vmem:[#allocation11 + $0x320] sm:$0xff]
    %v1813 = vld [vmem:[#allocation11 + $0x328] sm:$0xff]
    %v1814 = vld [vmem:[#allocation11 + $0x330] sm:$0xff]
    %v1815 = vld [vmem:[#allocation11 + $0x338] sm:$0xff]
    %v1816 = vld [vmem:[#allocation11 + $0x340] sm:$0xff]
    %v1817 = vld [vmem:[#allocation11 + $0x348] sm:$0xff]
    %v1818 = vld [vmem:[#allocation11 + $0x350] sm:$0xff]
    %v1819 = vld [vmem:[#allocation11 + $0x358] sm:$0xff]
    %v1820 = vld [vmem:[#allocation11 + $0x360] sm:$0xff]
    %v1821 = vld [vmem:[#allocation11 + $0x368] sm:$0xff]
    %v1822 = vld [vmem:[#allocation11 + $0x370] sm:$0xff]
    %v1823 = vld [vmem:[#allocation11 + $0x378] sm:$0xff]
    %v1824 = vld [vmem:[#allocation11 + $0x380] sm:$0xff]
    %v1825 = vld [vmem:[#allocation11 + $0x388] sm:$0xff]
    %v1826 = vld [vmem:[#allocation11 + $0x390] sm:$0xff]
    %v1827 = vld [vmem:[#allocation11 + $0x398] sm:$0xff]
    %v1828 = vld [vmem:[#allocation11 + $0x3a0] sm:$0xff]
    %v1829 = vld [vmem:[#allocation11 + $0x3a8] sm:$0xff]
    %v1830 = vld [vmem:[#allocation11 + $0x3b0] sm:$0xff]
    %v1831 = vld [vmem:[#allocation11 + $0x3b8] sm:$0xff]
    %v1832 = vld [vmem:[#allocation11 + $0x3c0] sm:$0xff]
    %v1833 = vld [vmem:[#allocation11 + $0x3c8] sm:$0xff]
    %v1834 = vld [vmem:[#allocation11 + $0x3d0] sm:$0xff]
    %v1835 = vld [vmem:[#allocation11 + $0x3d8] sm:$0xff]
    %v1836 = vld [vmem:[#allocation11 + $0x3e0] sm:$0xff]
    %v1837 = vld [vmem:[#allocation11 + $0x3e8] sm:$0xff]
    %v1838 = vld [vmem:[#allocation11 + $0x3f0] sm:$0xff]
    %v1839 = vld [vmem:[#allocation11 + $0x3f8] sm:$0xff]
    %v1840 = vld [vmem:[#allocation11 + $0x400] sm:$0xff]
    %v1841 = vld [vmem:[#allocation11 + $0x408] sm:$0xff]
    %v1842 = vld [vmem:[#allocation11 + $0x410] sm:$0xff]
    %v1843 = vld [vmem:[#allocation11 + $0x418] sm:$0xff]
    %v1844 = vld [vmem:[#allocation11 + $0x420] sm:$0xff]
    %v1845 = vld [vmem:[#allocation11 + $0x428] sm:$0xff]
    %v1846 = vld [vmem:[#allocation11 + $0x430] sm:$0xff]
    %v1847 = vld [vmem:[#allocation11 + $0x438] sm:$0xff]
    %v1848 = vld [vmem:[#allocation11 + $0x440] sm:$0xff]
    %v1849 = vld [vmem:[#allocation11 + $0x448] sm:$0xff]
    %v1850 = vld [vmem:[#allocation11 + $0x450] sm:$0xff]
    %v1851 = vld [vmem:[#allocation11 + $0x458] sm:$0xff]
    %v1852 = vld [vmem:[#allocation11 + $0x460] sm:$0xff]
    %v1853 = vld [vmem:[#allocation11 + $0x468] sm:$0xff]
    %v1854 = vld [vmem:[#allocation11 + $0x470] sm:$0xff]
    %v1855 = vld [vmem:[#allocation11 + $0x478] sm:$0xff]
    %v1856 = vld [vmem:[#allocation11 + $0x480] sm:$0xff]
    %v1857 = vld [vmem:[#allocation11 + $0x488] sm:$0xff]
    %v1858 = vld [vmem:[#allocation11 + $0x490] sm:$0xff]
    %v1859 = vld [vmem:[#allocation11 + $0x498] sm:$0xff]
    %v1860 = vld [vmem:[#allocation11 + $0x4a0] sm:$0xff]
    %v1861 = vld [vmem:[#allocation11 + $0x4a8] sm:$0xff]
    %v1862 = vld [vmem:[#allocation11 + $0x4b0] sm:$0xff]
    %v1863 = vld [vmem:[#allocation11 + $0x4b8] sm:$0xff]
    %v1864 = vld [vmem:[#allocation11 + $0x4c0] sm:$0xff]
    %v1865 = vld [vmem:[#allocation11 + $0x4c8] sm:$0xff]
    %v1866 = vld [vmem:[#allocation11 + $0x4d0] sm:$0xff]
    %v1867 = vld [vmem:[#allocation11 + $0x4d8] sm:$0xff]
    %v1868 = vld [vmem:[#allocation11 + $0x4e0] sm:$0xff]
    %v1869 = vld [vmem:[#allocation11 + $0x4e8] sm:$0xff]
    %v1870 = vld [vmem:[#allocation11 + $0x4f0] sm:$0xff]
    %v1871 = vld [vmem:[#allocation11 + $0x4f8] sm:$0xff]
    %v1872 = vld [vmem:[#allocation11 + $0x500] sm:$0xff]
    %v1873 = vld [vmem:[#allocation11 + $0x508] sm:$0xff]
    %v1874 = vld [vmem:[#allocation11 + $0x510] sm:$0xff]
    %v1875 = vld [vmem:[#allocation11 + $0x518] sm:$0xff]
    %v1876 = vld [vmem:[#allocation11 + $0x520] sm:$0xff]
    %v1877 = vld [vmem:[#allocation11 + $0x528] sm:$0xff]
    %v1878 = vld [vmem:[#allocation11 + $0x530] sm:$0xff]
    %v1879 = vld [vmem:[#allocation11 + $0x538] sm:$0xff]
    %v1880 = vld [vmem:[#allocation11 + $0x540] sm:$0xff]
    %v1881 = vld [vmem:[#allocation11 + $0x548] sm:$0xff]
    %v1882 = vld [vmem:[#allocation11 + $0x550] sm:$0xff]
    %v1883 = vld [vmem:[#allocation11 + $0x558] sm:$0xff]
    %v1884 = vld [vmem:[#allocation11 + $0x560] sm:$0xff]
    %v1885 = vld [vmem:[#allocation11 + $0x568] sm:$0xff]
    %v1886 = vld [vmem:[#allocation11 + $0x570] sm:$0xff]
    %v1887 = vld [vmem:[#allocation11 + $0x578] sm:$0xff]
    %v1888 = vld [vmem:[#allocation11 + $0x580] sm:$0xff]
    %v1889 = vld [vmem:[#allocation11 + $0x588] sm:$0xff]
    %v1890 = vld [vmem:[#allocation11 + $0x590] sm:$0xff]
    %v1891 = vld [vmem:[#allocation11 + $0x598] sm:$0xff]
    %v1892 = vld [vmem:[#allocation11 + $0x5a0] sm:$0xff]
    %v1893 = vld [vmem:[#allocation11 + $0x5a8] sm:$0xff]
    %v1894 = vld [vmem:[#allocation11 + $0x5b0] sm:$0xff]
    %v1895 = vld [vmem:[#allocation11 + $0x5b8] sm:$0xff]
    %v1896 = vld [vmem:[#allocation11 + $0x5c0] sm:$0xff]
    %v1897 = vld [vmem:[#allocation11 + $0x5c8] sm:$0xff]
    %v1898 = vld [vmem:[#allocation11 + $0x5d0] sm:$0xff]
    %v1899 = vld [vmem:[#allocation11 + $0x5d8] sm:$0xff]
    %v1900 = vld [vmem:[#allocation11 + $0x5e0] sm:$0xff]
    %v1901 = vld [vmem:[#allocation11 + $0x5e8] sm:$0xff]
    %v1902 = vld [vmem:[#allocation11 + $0x5f0] sm:$0xff]
    %v1903 = vld [vmem:[#allocation11 + $0x5f8] sm:$0xff]
    %v1904 = vld [vmem:[#allocation11 + $0x600] sm:$0xff]
    %v1905 = vld [vmem:[#allocation11 + $0x608] sm:$0xff]
    %v1906 = vld [vmem:[#allocation11 + $0x610] sm:$0xff]
    %v1907 = vld [vmem:[#allocation11 + $0x618] sm:$0xff]
    %v1908 = vld [vmem:[#allocation11 + $0x620] sm:$0xff]
    %v1909 = vld [vmem:[#allocation11 + $0x628] sm:$0xff]
    %v1910 = vld [vmem:[#allocation11 + $0x630] sm:$0xff]
    %v1911 = vld [vmem:[#allocation11 + $0x638] sm:$0xff]
    %v1912 = vld [vmem:[#allocation11 + $0x640] sm:$0xff]
    %v1913 = vld [vmem:[#allocation11 + $0x648] sm:$0xff]
    %v1914 = vld [vmem:[#allocation11 + $0x650] sm:$0xff]
    %v1915 = vld [vmem:[#allocation11 + $0x658] sm:$0xff]
    %v1916 = vld [vmem:[#allocation11 + $0x660] sm:$0xff]
    %v1917 = vld [vmem:[#allocation11 + $0x668] sm:$0xff]
    %v1918 = vld [vmem:[#allocation11 + $0x670] sm:$0xff]
    %v1919 = vld [vmem:[#allocation11 + $0x678] sm:$0xff]
    %v1920 = vld [vmem:[#allocation11 + $0x680] sm:$0xff]
    %v1921 = vld [vmem:[#allocation11 + $0x688] sm:$0xff]
    %v1922 = vld [vmem:[#allocation11 + $0x690] sm:$0xff]
    %v1923 = vld [vmem:[#allocation11 + $0x698] sm:$0xff]
    %v1924 = vld [vmem:[#allocation11 + $0x6a0] sm:$0xff]
    %v1925 = vld [vmem:[#allocation11 + $0x6a8] sm:$0xff]
    %v1926 = vld [vmem:[#allocation11 + $0x6b0] sm:$0xff]
    %v1927 = vld [vmem:[#allocation11 + $0x6b8] sm:$0xff]
    %v1928 = vld [vmem:[#allocation11 + $0x6c0] sm:$0xff]
    %v1929 = vld [vmem:[#allocation11 + $0x6c8] sm:$0xff]
    %v1930 = vld [vmem:[#allocation11 + $0x6d0] sm:$0xff]
    %v1931 = vld [vmem:[#allocation11 + $0x6d8] sm:$0xff]
    %v1932 = vld [vmem:[#allocation11 + $0x6e0] sm:$0xff]
    %v1933 = vld [vmem:[#allocation11 + $0x6e8] sm:$0xff]
    %v1934 = vld [vmem:[#allocation11 + $0x6f0] sm:$0xff]
    %v1935 = vld [vmem:[#allocation11 + $0x6f8] sm:$0xff]
    %v1936 = vld [vmem:[#allocation11 + $0x700] sm:$0xff]
    %v1937 = vld [vmem:[#allocation11 + $0x708] sm:$0xff]
    %v1938 = vld [vmem:[#allocation11 + $0x710] sm:$0xff]
    %v1939 = vld [vmem:[#allocation11 + $0x718] sm:$0xff]
    %v1940 = vld [vmem:[#allocation11 + $0x720] sm:$0xff]
    %v1941 = vld [vmem:[#allocation11 + $0x728] sm:$0xff]
    %v1942 = vld [vmem:[#allocation11 + $0x730] sm:$0xff]
    %v1943 = vld [vmem:[#allocation11 + $0x738] sm:$0xff]
    %v1944 = vld [vmem:[#allocation11 + $0x740] sm:$0xff]
    %v1945 = vld [vmem:[#allocation11 + $0x748] sm:$0xff]
    %v1946 = vld [vmem:[#allocation11 + $0x750] sm:$0xff]
    %v1947 = vld [vmem:[#allocation11 + $0x758] sm:$0xff]
    %v1948 = vld [vmem:[#allocation11 + $0x760] sm:$0xff]
    %v1949 = vld [vmem:[#allocation11 + $0x768] sm:$0xff]
    %v1950 = vld [vmem:[#allocation11 + $0x770] sm:$0xff]
    %v1951 = vld [vmem:[#allocation11 + $0x778] sm:$0xff]
    %v1952 = vld [vmem:[#allocation11 + $0x780] sm:$0xff]
    %v1953 = vld [vmem:[#allocation11 + $0x788] sm:$0xff]
    %v1954 = vld [vmem:[#allocation11 + $0x790] sm:$0xff]
    %v1955 = vld [vmem:[#allocation11 + $0x798] sm:$0xff]
    %v1956 = vld [vmem:[#allocation11 + $0x7a0] sm:$0xff]
    %v1957 = vld [vmem:[#allocation11 + $0x7a8] sm:$0xff]
    %v1958 = vld [vmem:[#allocation11 + $0x7b0] sm:$0xff]
    %v1959 = vld [vmem:[#allocation11 + $0x7b8] sm:$0xff]
    %v1960 = vld [vmem:[#allocation11 + $0x7c0] sm:$0xff]
    %v1961 = vld [vmem:[#allocation11 + $0x7c8] sm:$0xff]
    %v1962 = vld [vmem:[#allocation11 + $0x7d0] sm:$0xff]
    %v1963 = vld [vmem:[#allocation11 + $0x7d8] sm:$0xff]
    %v1964 = vld [vmem:[#allocation11 + $0x7e0] sm:$0xff]
    %v1965 = vld [vmem:[#allocation11 + $0x7e8] sm:$0xff]
    %v1966 = vld [vmem:[#allocation11 + $0x7f0] sm:$0xff]
    %v1967 = vld [vmem:[#allocation11 + $0x7f8] sm:$0xff]
    %v1968 = vld [vmem:[#allocation11 + $0x800] sm:$0xff]
    %v1969 = vld [vmem:[#allocation11 + $0x808] sm:$0xff]
    %v1970 = vld [vmem:[#allocation11 + $0x810] sm:$0xff]
    %v1971 = vld [vmem:[#allocation11 + $0x818] sm:$0xff]
    %v1972 = vld [vmem:[#allocation11 + $0x820] sm:$0xff]
    %v1973 = vld [vmem:[#allocation11 + $0x828] sm:$0xff]
    %v1974 = vld [vmem:[#allocation11 + $0x830] sm:$0xff]
    %v1975 = vld [vmem:[#allocation11 + $0x838] sm:$0xff]
    %v1976 = vld [vmem:[#allocation11 + $0x840] sm:$0xff]
    %v1977 = vld [vmem:[#allocation11 + $0x848] sm:$0xff]
    %v1978 = vld [vmem:[#allocation11 + $0x850] sm:$0xff]
    %v1979 = vld [vmem:[#allocation11 + $0x858] sm:$0xff]
    %v1980 = vld [vmem:[#allocation11 + $0x860] sm:$0xff]
    %v1981 = vld [vmem:[#allocation11 + $0x868] sm:$0xff]
    %v1982 = vld [vmem:[#allocation11 + $0x870] sm:$0xff]
    %v1983 = vld [vmem:[#allocation11 + $0x878] sm:$0xff]
    %v1984 = vld [vmem:[#allocation11 + $0x880] sm:$0xff]
    %v1985 = vld [vmem:[#allocation11 + $0x888] sm:$0xff]
    %v1986 = vld [vmem:[#allocation11 + $0x890] sm:$0xff]
    %v1987 = vld [vmem:[#allocation11 + $0x898] sm:$0xff]
    %v1988 = vld [vmem:[#allocation11 + $0x8a0] sm:$0xff]
    %v1989 = vld [vmem:[#allocation11 + $0x8a8] sm:$0xff]
    %v1990 = vld [vmem:[#allocation11 + $0x8b0] sm:$0xff]
    %v1991 = vld [vmem:[#allocation11 + $0x8b8] sm:$0xff]
    %v1992 = vld [vmem:[#allocation11 + $0x8c0] sm:$0xff]
    %v1993 = vld [vmem:[#allocation11 + $0x8c8] sm:$0xff]
    %v1994 = vld [vmem:[#allocation11 + $0x8d0] sm:$0xff]
    %v1995 = vld [vmem:[#allocation11 + $0x8d8] sm:$0xff]
    %v1996 = vld [vmem:[#allocation11 + $0x8e0] sm:$0xff]
    %v1997 = vld [vmem:[#allocation11 + $0x8e8] sm:$0xff]
    %v1998 = vld [vmem:[#allocation11 + $0x8f0] sm:$0xff]
    %v1999 = vld [vmem:[#allocation11 + $0x8f8] sm:$0xff]
    %v2000 = vld [vmem:[#allocation11 + $0x900] sm:$0xff]
    %v2001 = vld [vmem:[#allocation11 + $0x908] sm:$0xff]
    %v2002 = vld [vmem:[#allocation11 + $0x910] sm:$0xff]
    %v2003 = vld [vmem:[#allocation11 + $0x918] sm:$0xff]
    %v2004 = vld [vmem:[#allocation11 + $0x920] sm:$0xff]
    %v2005 = vld [vmem:[#allocation11 + $0x928] sm:$0xff]
    %v2006 = vld [vmem:[#allocation11 + $0x930] sm:$0xff]
    %v2007 = vld [vmem:[#allocation11 + $0x938] sm:$0xff]
    %v2008 = vld [vmem:[#allocation11 + $0x940] sm:$0xff]
    %v2009 = vld [vmem:[#allocation11 + $0x948] sm:$0xff]
    %v2010 = vld [vmem:[#allocation11 + $0x950] sm:$0xff]
    %v2011 = vld [vmem:[#allocation11 + $0x958] sm:$0xff]
    %v2012 = vld [vmem:[#allocation11 + $0x960] sm:$0xff]
    %v2013 = vld [vmem:[#allocation11 + $0x968] sm:$0xff]
    %v2014 = vld [vmem:[#allocation11 + $0x970] sm:$0xff]
    %v2015 = vld [vmem:[#allocation11 + $0x978] sm:$0xff]
    %v2016 = vld [vmem:[#allocation11 + $0x980] sm:$0xff]
    %v2017 = vld [vmem:[#allocation11 + $0x988] sm:$0xff]
    %v2018 = vld [vmem:[#allocation11 + $0x990] sm:$0xff]
    %v2019 = vld [vmem:[#allocation11 + $0x998] sm:$0xff]
    %v2020 = vld [vmem:[#allocation11 + $0x9a0] sm:$0xff]
    %v2021 = vld [vmem:[#allocation11 + $0x9a8] sm:$0xff]
    %v2022 = vld [vmem:[#allocation11 + $0x9b0] sm:$0xff]
    %v2023 = vld [vmem:[#allocation11 + $0x9b8] sm:$0xff]
    %v2024 = vld [vmem:[#allocation11 + $0x9c0] sm:$0xff]
    %v2025 = vld [vmem:[#allocation11 + $0x9c8] sm:$0xff]
    %v2026 = vld [vmem:[#allocation11 + $0x9d0] sm:$0xff]
    %v2027 = vld [vmem:[#allocation11 + $0x9d8] sm:$0xff]
    %v2028 = vld [vmem:[#allocation11 + $0x9e0] sm:$0xff]
    %v2029 = vld [vmem:[#allocation11 + $0x9e8] sm:$0xff]
    %v2030 = vld [vmem:[#allocation11 + $0x9f0] sm:$0xff]
    %v2031 = vld [vmem:[#allocation11 + $0x9f8] sm:$0xff]
    %v2032 = vld [vmem:[#allocation11 + $0xa00] sm:$0xff]
    %v2033 = vld [vmem:[#allocation11 + $0xa08] sm:$0xff]
    %v2034 = vld [vmem:[#allocation11 + $0xa10] sm:$0xff]
    %v2035 = vld [vmem:[#allocation11 + $0xa18] sm:$0xff]
    %v2036 = vld [vmem:[#allocation11 + $0xa20] sm:$0xff]
    %v2037 = vld [vmem:[#allocation11 + $0xa28] sm:$0xff]
    %v2038 = vld [vmem:[#allocation11 + $0xa30] sm:$0xff]
    %v2039 = vld [vmem:[#allocation11 + $0xa38] sm:$0xff]
    %v2040 = vld [vmem:[#allocation11 + $0xa40] sm:$0xff]
    %v2041 = vld [vmem:[#allocation11 + $0xa48] sm:$0xff]
    %v2042 = vld [vmem:[#allocation11 + $0xa50] sm:$0xff]
    %v2043 = vld [vmem:[#allocation11 + $0xa58] sm:$0xff]
    %v2044 = vld [vmem:[#allocation11 + $0xa60] sm:$0xff]
    %v2045 = vld [vmem:[#allocation11 + $0xa68] sm:$0xff]
    %v2046 = vld [vmem:[#allocation11 + $0xa70] sm:$0xff]
    %v2047 = vld [vmem:[#allocation11 + $0xa78] sm:$0xff]
    %v2048 = vld [vmem:[#allocation11 + $0xa80] sm:$0xff]
    %v2049 = vld [vmem:[#allocation11 + $0xa88] sm:$0xff]
    %v2050 = vld [vmem:[#allocation11 + $0xa90] sm:$0xff]
    %v2051 = vld [vmem:[#allocation11 + $0xa98] sm:$0xff]
    %v2052 = vld [vmem:[#allocation11 + $0xaa0] sm:$0xff]
    %v2053 = vld [vmem:[#allocation11 + $0xaa8] sm:$0xff]
    %v2054 = vld [vmem:[#allocation11 + $0xab0] sm:$0xff]
    %v2055 = vld [vmem:[#allocation11 + $0xab8] sm:$0xff]
    %v2056 = vld [vmem:[#allocation11 + $0xac0] sm:$0xff]
    %v2057 = vld [vmem:[#allocation11 + $0xac8] sm:$0xff]
    %v2058 = vld [vmem:[#allocation11 + $0xad0] sm:$0xff]
    %v2059 = vld [vmem:[#allocation11 + $0xad8] sm:$0xff]
    %v2060 = vld [vmem:[#allocation11 + $0xae0] sm:$0xff]
    %v2061 = vld [vmem:[#allocation11 + $0xae8] sm:$0xff]
    %v2062 = vld [vmem:[#allocation11 + $0xaf0] sm:$0xff]
    %v2063 = vld [vmem:[#allocation11 + $0xaf8] sm:$0xff]
    %v2064 = vld [vmem:[#allocation11 + $0xb00] sm:$0xff]
    %v2065 = vld [vmem:[#allocation11 + $0xb08] sm:$0xff]
    %v2066 = vld [vmem:[#allocation11 + $0xb10] sm:$0xff]
    %v2067 = vld [vmem:[#allocation11 + $0xb18] sm:$0xff]
    %v2068 = vld [vmem:[#allocation11 + $0xb20] sm:$0xff]
    %v2069 = vld [vmem:[#allocation11 + $0xb28] sm:$0xff]
    %v2070 = vld [vmem:[#allocation11 + $0xb30] sm:$0xff]
    %v2071 = vld [vmem:[#allocation11 + $0xb38] sm:$0xff]
    %v2072 = vld [vmem:[#allocation11 + $0xb40] sm:$0xff]
    %v2073 = vld [vmem:[#allocation11 + $0xb48] sm:$0xff]
    %v2074 = vld [vmem:[#allocation11 + $0xb50] sm:$0xff]
    %v2075 = vld [vmem:[#allocation11 + $0xb58] sm:$0xff]
    %v2076 = vld [vmem:[#allocation11 + $0xb60] sm:$0xff]
    %v2077 = vld [vmem:[#allocation11 + $0xb68] sm:$0xff]
    %v2078 = vld [vmem:[#allocation11 + $0xb70] sm:$0xff]
    %v2079 = vld [vmem:[#allocation11 + $0xb78] sm:$0xff]
    %v2080 = vld [vmem:[#allocation11 + $0xb80] sm:$0xff]
    %v2081 = vld [vmem:[#allocation11 + $0xb88] sm:$0xff]
    %v2082 = vld [vmem:[#allocation11 + $0xb90] sm:$0xff]
    %v2083 = vld [vmem:[#allocation11 + $0xb98] sm:$0xff]
    %v2084 = vld [vmem:[#allocation11 + $0xba0] sm:$0xff]
    %v2085 = vld [vmem:[#allocation11 + $0xba8] sm:$0xff]
    %v2086 = vld [vmem:[#allocation11 + $0xbb0] sm:$0xff]
    %v2087 = vld [vmem:[#allocation11 + $0xbb8] sm:$0xff]
    %v2088 = vld [vmem:[#allocation11 + $0xbc0] sm:$0xff]
    %v2089 = vld [vmem:[#allocation11 + $0xbc8] sm:$0xff]
    %v2090 = vld [vmem:[#allocation11 + $0xbd0] sm:$0xff]
    %v2091 = vld [vmem:[#allocation11 + $0xbd8] sm:$0xff]
    %v2092 = vld [vmem:[#allocation11 + $0xbe0] sm:$0xff]
    %v2093 = vld [vmem:[#allocation11 + $0xbe8] sm:$0xff]
    %v2094 = vld [vmem:[#allocation11 + $0xbf0] sm:$0xff]
    %v2095 = vld [vmem:[#allocation11 + $0xbf8] sm:$0xff]
    %v2096 = vld [vmem:[#allocation11 + $0xc00] sm:$0xff]
    %v2097 = vld [vmem:[#allocation11 + $0xc08] sm:$0xff]
    %v2098 = vld [vmem:[#allocation11 + $0xc10] sm:$0xff]
    %v2099 = vld [vmem:[#allocation11 + $0xc18] sm:$0xff]
    %v2100 = vld [vmem:[#allocation11 + $0xc20] sm:$0xff]
    %v2101 = vld [vmem:[#allocation11 + $0xc28] sm:$0xff]
    %v2102 = vld [vmem:[#allocation11 + $0xc30] sm:$0xff]
    %v2103 = vld [vmem:[#allocation11 + $0xc38] sm:$0xff]
    %v2104 = vld [vmem:[#allocation11 + $0xc40] sm:$0xff]
    %v2105 = vld [vmem:[#allocation11 + $0xc48] sm:$0xff]
    %v2106 = vld [vmem:[#allocation11 + $0xc50] sm:$0xff]
    %v2107 = vld [vmem:[#allocation11 + $0xc58] sm:$0xff]
    %v2108 = vld [vmem:[#allocation11 + $0xc60] sm:$0xff]
    %v2109 = vld [vmem:[#allocation11 + $0xc68] sm:$0xff]
    %v2110 = vld [vmem:[#allocation11 + $0xc70] sm:$0xff]
    %v2111 = vld [vmem:[#allocation11 + $0xc78] sm:$0xff]
    %v2112 = vld [vmem:[#allocation11 + $0xc80] sm:$0xff]
    %v2113 = vld [vmem:[#allocation11 + $0xc88] sm:$0xff]
    %v2114 = vld [vmem:[#allocation11 + $0xc90] sm:$0xff]
    %v2115 = vld [vmem:[#allocation11 + $0xc98] sm:$0xff]
    %v2116 = vld [vmem:[#allocation11 + $0xca0] sm:$0xff]
    %v2117 = vld [vmem:[#allocation11 + $0xca8] sm:$0xff]
    %v2118 = vld [vmem:[#allocation11 + $0xcb0] sm:$0xff]
    %v2119 = vld [vmem:[#allocation11 + $0xcb8] sm:$0xff]
    %v2120 = vld [vmem:[#allocation11 + $0xcc0] sm:$0xff]
    %v2121 = vld [vmem:[#allocation11 + $0xcc8] sm:$0xff]
    %v2122 = vld [vmem:[#allocation11 + $0xcd0] sm:$0xff]
    %v2123 = vld [vmem:[#allocation11 + $0xcd8] sm:$0xff]
    %v2124 = vld [vmem:[#allocation11 + $0xce0] sm:$0xff]
    %v2125 = vld [vmem:[#allocation11 + $0xce8] sm:$0xff]
    %v2126 = vld [vmem:[#allocation11 + $0xcf0] sm:$0xff]
    %v2127 = vld [vmem:[#allocation11 + $0xcf8] sm:$0xff]
    %v2128 = vld [vmem:[#allocation11 + $0xd00] sm:$0xff]
    %v2129 = vld [vmem:[#allocation11 + $0xd08] sm:$0xff]
    %v2130 = vld [vmem:[#allocation11 + $0xd10] sm:$0xff]
    %v2131 = vld [vmem:[#allocation11 + $0xd18] sm:$0xff]
    %v2132 = vld [vmem:[#allocation11 + $0xd20] sm:$0xff]
    %v2133 = vld [vmem:[#allocation11 + $0xd28] sm:$0xff]
    %v2134 = vld [vmem:[#allocation11 + $0xd30] sm:$0xff]
    %v2135 = vld [vmem:[#allocation11 + $0xd38] sm:$0xff]
    %v2136 = vld [vmem:[#allocation11 + $0xd40] sm:$0xff]
    %v2137 = vld [vmem:[#allocation11 + $0xd48] sm:$0xff]
    %v2138 = vld [vmem:[#allocation11 + $0xd50] sm:$0xff]
    %v2139 = vld [vmem:[#allocation11 + $0xd58] sm:$0xff]
    %v2140 = vld [vmem:[#allocation11 + $0xd60] sm:$0xff]
    %v2141 = vld [vmem:[#allocation11 + $0xd68] sm:$0xff]
    %v2142 = vld [vmem:[#allocation11 + $0xd70] sm:$0xff]
    %v2143 = vld [vmem:[#allocation11 + $0xd78] sm:$0xff]
    %v2144 = vld [vmem:[#allocation11 + $0xd80] sm:$0xff]
    %v2145 = vld [vmem:[#allocation11 + $0xd88] sm:$0xff]
    %v2146 = vld [vmem:[#allocation11 + $0xd90] sm:$0xff]
    %v2147 = vld [vmem:[#allocation11 + $0xd98] sm:$0xff]
    %v2148 = vld [vmem:[#allocation11 + $0xda0] sm:$0xff]
    %v2149 = vld [vmem:[#allocation11 + $0xda8] sm:$0xff]
    %v2150 = vld [vmem:[#allocation11 + $0xdb0] sm:$0xff]
    %v2151 = vld [vmem:[#allocation11 + $0xdb8] sm:$0xff]
    %v2152 = vld [vmem:[#allocation11 + $0xdc0] sm:$0xff]
    %v2153 = vld [vmem:[#allocation11 + $0xdc8] sm:$0xff]
    %v2154 = vld [vmem:[#allocation11 + $0xdd0] sm:$0xff]
    %v2155 = vld [vmem:[#allocation11 + $0xdd8] sm:$0xff]
    %v2156 = vld [vmem:[#allocation11 + $0xde0] sm:$0xff]
    %v2157 = vld [vmem:[#allocation11 + $0xde8] sm:$0xff]
    %v2158 = vld [vmem:[#allocation11 + $0xdf0] sm:$0xff]
    %v2159 = vld [vmem:[#allocation11 + $0xdf8] sm:$0xff]
    %v2160 = vld [vmem:[#allocation11 + $0xe00] sm:$0xff]
    %v2161 = vld [vmem:[#allocation11 + $0xe08] sm:$0xff]
    %v2162 = vld [vmem:[#allocation11 + $0xe10] sm:$0xff]
    %v2163 = vld [vmem:[#allocation11 + $0xe18] sm:$0xff]
    %v2164 = vld [vmem:[#allocation11 + $0xe20] sm:$0xff]
    %v2165 = vld [vmem:[#allocation11 + $0xe28] sm:$0xff]
    %v2166 = vld [vmem:[#allocation11 + $0xe30] sm:$0xff]
    %v2167 = vld [vmem:[#allocation11 + $0xe38] sm:$0xff]
    %v2168 = vld [vmem:[#allocation11 + $0xe40] sm:$0xff]
    %v2169 = vld [vmem:[#allocation11 + $0xe48] sm:$0xff]
    %v2170 = vld [vmem:[#allocation11 + $0xe50] sm:$0xff]
    %v2171 = vld [vmem:[#allocation11 + $0xe58] sm:$0xff]
    %v2172 = vld [vmem:[#allocation11 + $0xe60] sm:$0xff]
    %v2173 = vld [vmem:[#allocation11 + $0xe68] sm:$0xff]
    %v2174 = vld [vmem:[#allocation11 + $0xe70] sm:$0xff]
    %v2175 = vld [vmem:[#allocation11 + $0xe78] sm:$0xff]
    %v2176 = vld [vmem:[#allocation11 + $0xe80] sm:$0xff]
    %v2177 = vld [vmem:[#allocation11 + $0xe88] sm:$0xff]
    %v2178 = vld [vmem:[#allocation11 + $0xe90] sm:$0xff]
    %v2179 = vld [vmem:[#allocation11 + $0xe98] sm:$0xff]
    %v2180 = vld [vmem:[#allocation11 + $0xea0] sm:$0xff]
    %v2181 = vld [vmem:[#allocation11 + $0xea8] sm:$0xff]
    %v2182 = vld [vmem:[#allocation11 + $0xeb0] sm:$0xff]
    %v2183 = vld [vmem:[#allocation11 + $0xeb8] sm:$0xff]
    %v2184 = vld [vmem:[#allocation11 + $0xec0] sm:$0xff]
    %v2185 = vld [vmem:[#allocation11 + $0xec8] sm:$0xff]
    %v2186 = vld [vmem:[#allocation11 + $0xed0] sm:$0xff]
    %v2187 = vld [vmem:[#allocation11 + $0xed8] sm:$0xff]
    %v2188 = vld [vmem:[#allocation11 + $0xee0] sm:$0xff]
    %v2189 = vld [vmem:[#allocation11 + $0xee8] sm:$0xff]
    %v2190 = vld [vmem:[#allocation11 + $0xef0] sm:$0xff]
    %v2191 = vld [vmem:[#allocation11 + $0xef8] sm:$0xff]
    %v2192 = vld [vmem:[#allocation11 + $0xf00] sm:$0xff]
    %v2193 = vld [vmem:[#allocation11 + $0xf08] sm:$0xff]
    %v2194 = vld [vmem:[#allocation11 + $0xf10] sm:$0xff]
    %v2195 = vld [vmem:[#allocation11 + $0xf18] sm:$0xff]
    %v2196 = vld [vmem:[#allocation11 + $0xf20] sm:$0xff]
    %v2197 = vld [vmem:[#allocation11 + $0xf28] sm:$0xff]
    %v2198 = vld [vmem:[#allocation11 + $0xf30] sm:$0xff]
    %v2199 = vld [vmem:[#allocation11 + $0xf38] sm:$0xff]
    %v2200 = vld [vmem:[#allocation11 + $0xf40] sm:$0xff]
    %v2201 = vld [vmem:[#allocation11 + $0xf48] sm:$0xff]
    %v2202 = vld [vmem:[#allocation11 + $0xf50] sm:$0xff]
    %v2203 = vld [vmem:[#allocation11 + $0xf58] sm:$0xff]
    %v2204 = vld [vmem:[#allocation11 + $0xf60] sm:$0xff]
    %v2205 = vld [vmem:[#allocation11 + $0xf68] sm:$0xff]
    %v2206 = vld [vmem:[#allocation11 + $0xf70] sm:$0xff]
    %v2207 = vld [vmem:[#allocation11 + $0xf78] sm:$0xff]
    %v2208 = vld [vmem:[#allocation11 + $0xf80] sm:$0xff]
    %v2209 = vld [vmem:[#allocation11 + $0xf88] sm:$0xff]
    %v2210 = vld [vmem:[#allocation11 + $0xf90] sm:$0xff]
    %v2211 = vld [vmem:[#allocation11 + $0xf98] sm:$0xff]
    %v2212 = vld [vmem:[#allocation11 + $0xfa0] sm:$0xff]
    %v2213 = vld [vmem:[#allocation11 + $0xfa8] sm:$0xff]
    %v2214 = vld [vmem:[#allocation11 + $0xfb0] sm:$0xff]
    %v2215 = vld [vmem:[#allocation11 + $0xfb8] sm:$0xff]
    %v2216 = vld [vmem:[#allocation11 + $0xfc0] sm:$0xff]
    %v2217 = vld [vmem:[#allocation11 + $0xfc8] sm:$0xff]
    %v2218 = vld [vmem:[#allocation11 + $0xfd0] sm:$0xff]
    %v2219 = vld [vmem:[#allocation11 + $0xfd8] sm:$0xff]
    %v2220 = vld [vmem:[#allocation11 + $0xfe0] sm:$0xff]
    %v2221 = vld [vmem:[#allocation11 + $0xfe8] sm:$0xff]
    %v2222 = vld [vmem:[#allocation11 + $0xff0] sm:$0xff]
    %v2223 = vld [vmem:[#allocation11 + $0xff8] sm:$0xff]
    %v2224 = vld [vmem:[#allocation13] sm:$0xff]
    %v2226 = vlaneseq
    %v2227 = vshrl.u32 %v2226, 7
    %v2228 = vsub.s32 0, %v2227
    %v2229 = vrot.slane %v2224, %v2228
    %v2230 = vlaneseq
    %v2231 = vshrl.u32 %v2230, 7
    %v2232 = vsub.s32 1, %v2231
    %v2233 = vrot.slane %v2224, %v2232
    %v2234 = vlaneseq
    %v2235 = vshrl.u32 %v2234, 7
    %v2236 = vsub.s32 2, %v2235
    %v2237 = vrot.slane %v2224, %v2236
    %v2238 = vlaneseq
    %v2239 = vshrl.u32 %v2238, 7
    %v2240 = vsub.s32 3, %v2239
    %v2241 = vrot.slane %v2224, %v2240
    %v2242 = vlaneseq
    %v2243 = vshrl.u32 %v2242, 7
    %v2244 = vsub.s32 4, %v2243
    %v2245 = vrot.slane %v2224, %v2244
    %v2246 = vlaneseq
    %v2247 = vshrl.u32 %v2246, 7
    %v2248 = vsub.s32 5, %v2247
    %v2249 = vrot.slane %v2224, %v2248
    %v2250 = vlaneseq
    %v2251 = vshrl.u32 %v2250, 7
    %v2252 = vsub.s32 6, %v2251
    %v2253 = vrot.slane %v2224, %v2252
    %v2254 = vlaneseq
    %v2255 = vshrl.u32 %v2254, 7
    %v2256 = vsub.s32 7, %v2255
    %v2257 = vrot.slane %v2224, %v2256
    %2266 = vmatprep.subr.mxu0 %v1833
    %2267 = vmatpush1.msra.mxu0 %v1832
    %2268 = vmatprep.subr.mxu0 %v1825
    %2269 = vmatpush1.msra.mxu0 %v1824
    %2270 = vmatprep.subr.mxu0 %v1817
    %2271 = vmatpush1.msra.mxu0 %v1816
    %2272 = vmatprep.subr.mxu0 %v1809
    %2273 = vmatpush1.msra.mxu0 %v1808
    %2274 = vmatprep.subr.mxu0 %v1801
    %2275 = vmatpush1.msra.mxu0 %v1800
    %2276 = vmatprep.subr.mxu0 %v1793
    %2277 = vmatpush1.msra.mxu0 %v1792
    %2278 = vmatprep.subr.mxu0 %v1785
    %2279 = vmatpush1.msra.mxu0 %v1784
    %2280 = vmatprep.subr.mxu0 %v1777
    %2281 = vmatpush1.msra.mxu0 %v1776
    %2282 = vmatprep.subr.mxu0 %v1769
    %2283 = vmatpush1.msra.mxu0 %v1768
    %2284 = vmatprep.subr.mxu0 %v1761
    %2285 = vmatpush1.msra.mxu0 %v1760
    %2286 = vmatprep.subr.mxu0 %v1753
    %2287 = vmatpush1.msra.mxu0 %v1752
    %2288 = vmatprep.subr.mxu0 %v1745
    %2289 = vmatpush1.msra.mxu0 %v1744
    %2290 = vmatprep.subr.mxu0 %v1737
    %2291 = vmatpush1.msra.mxu0 %v1736
    %2292 = vmatprep.subr.mxu0 %v1729
    %2293 = vmatpush1.msra.mxu0 %v1728
    %2294 = vmatprep.subr.mxu0 %v1721
    %2295 = vmatpush1.msra.mxu0 %v1720
    %2296 = vmatprep.subr.mxu0 %v1713
    %2297 = vmatpush1.msra.mxu0 %v1712
    %2298 = vmatprep.subr.mxu0 %v1961
    %2299 = vmatpush2.msra.mxu0 %v1960
    %2300 = vmatprep.subr.mxu0 %v1953
    %2301 = vmatpush2.msra.mxu0 %v1952
    %2302 = vmatprep.subr.mxu0 %v1945
    %2303 = vmatpush2.msra.mxu0 %v1944
    %2304 = vmatprep.subr.mxu0 %v1937
    %2305 = vmatpush2.msra.mxu0 %v1936
    %2306 = vmatprep.subr.mxu0 %v1929
    %2307 = vmatpush2.msra.mxu0 %v1928
    %2308 = vmatprep.subr.mxu0 %v1921
    %2309 = vmatpush2.msra.mxu0 %v1920
    %2310 = vmatprep.subr.mxu0 %v1913
    %2311 = vmatpush2.msra.mxu0 %v1912
    %2312 = vmatprep.subr.mxu0 %v1905
    %2313 = vmatpush2.msra.mxu0 %v1904
    %2314 = vmatprep.subr.mxu0 %v1897
    %2315 = vmatpush2.msra.mxu0 %v1896
    %2316 = vmatprep.subr.mxu0 %v1889
    %2317 = vmatpush2.msra.mxu0 %v1888
    %2318 = vmatprep.subr.mxu0 %v1881
    %2319 = vmatpush2.msra.mxu0 %v1880
    %2320 = vmatprep.subr.mxu0 %v1873
    %2321 = vmatpush2.msra.mxu0 %v1872
    %2322 = vmatprep.subr.mxu0 %v1865
    %2323 = vmatpush2.msra.mxu0 %v1864
    %2324 = vmatprep.subr.mxu0 %v1857
    %2325 = vmatpush2.msra.mxu0 %v1856
    %2326 = vmatprep.subr.mxu0 %v1849
    %2327 = vmatpush2.msra.mxu0 %v1848
    %2328 = vmatprep.subr.mxu0 %v1841
    %2329 = vmatpush2.msra.mxu0 %v1840
    %2330 = vmatprep.mubr.f32.mxu0 %v1649
    %2331 = vmatmul.mubr.f32.gmra.mxu0 %v1648
    %v2332 = vpop.f32.mrf.mxu0
    %v2333 = vadd.f32 %v2229, %v2332
    %v2334 = vpop.f32.mrf.mxu0
    %v2335 = vadd.f32 %v2233, %v2334
    %2336 = vmatprep.mubr.f32.mxu0 %v1653
    %2337 = vmatmul.mubr.f32.gmra.mxu0 %v1652
    %v2338 = vpop.f32.mrf.mxu0
    %v2339 = vadd.f32 %v2229, %v2338
    %v2340 = vpop.f32.mrf.mxu0
    %v2341 = vadd.f32 %v2233, %v2340
    %2342 = vmatprep.mubr.f32.mxu0 %v1657
    %2343 = vmatmul.mubr.f32.gmra.mxu0 %v1656
    %v2344 = vpop.f32.mrf.mxu0
    %v2345 = vadd.f32 %v2229, %v2344
    %v2346 = vpop.f32.mrf.mxu0
    %v2347 = vadd.f32 %v2233, %v2346
    %2348 = vmatprep.mubr.f32.mxu0 %v1661
    %2349 = vmatmul.mubr.f32.gmra.mxu0 %v1660
    %v2350 = vpop.f32.mrf.mxu0
    %v2351 = vadd.f32 %v2229, %v2350
    %v2352 = vpop.f32.mrf.mxu0
    %v2353 = vadd.f32 %v2233, %v2352
    %2354 = vmatprep.mubr.f32.mxu0 %v1665
    %2355 = vmatmul.mubr.f32.gmra.mxu0 %v1664
    %v2356 = vpop.f32.mrf.mxu0
    %v2357 = vadd.f32 %v2229, %v2356
    %v2358 = vpop.f32.mrf.mxu0
    %v2359 = vadd.f32 %v2233, %v2358
    %2360 = vmatprep.mubr.f32.mxu0 %v1669
    %2361 = vmatmul.mubr.f32.gmra.mxu0 %v1668
    %v2362 = vpop.f32.mrf.mxu0
    %v2363 = vadd.f32 %v2229, %v2362
    %v2364 = vpop.f32.mrf.mxu0
    %v2365 = vadd.f32 %v2233, %v2364
    %2366 = vmatprep.mubr.f32.mxu0 %v1673
    %2367 = vmatmul.mubr.f32.gmra.mxu0 %v1672
    %v2368 = vpop.f32.mrf.mxu0
    %v2369 = vadd.f32 %v2229, %v2368
    %v2370 = vpop.f32.mrf.mxu0
    %v2371 = vadd.f32 %v2233, %v2370
    %2372 = vmatprep.mubr.f32.mxu0 %v1677
    %2373 = vmatmul.mubr.f32.gmra.mxu0 %v1676
    %v2374 = vpop.f32.mrf.mxu0
    %v2375 = vadd.f32 %v2229, %v2374
    %v2376 = vpop.f32.mrf.mxu0
    %v2377 = vadd.f32 %v2233, %v2376
    %2378 = vmatprep.mubr.f32.mxu0 %v1681
    %2379 = vmatmul.mubr.f32.gmra.mxu0 %v1680
    %v2380 = vpop.f32.mrf.mxu0
    %v2381 = vadd.f32 %v2229, %v2380
    %v2382 = vpop.f32.mrf.mxu0
    %v2383 = vadd.f32 %v2233, %v2382
    %2384 = vmatprep.mubr.f32.mxu0 %v1685
    %2385 = vmatmul.mubr.f32.gmra.mxu0 %v1684
    %v2386 = vpop.f32.mrf.mxu0
    %v2387 = vadd.f32 %v2229, %v2386
    %v2388 = vpop.f32.mrf.mxu0
    %v2389 = vadd.f32 %v2233, %v2388
    %2390 = vmatprep.mubr.f32.mxu0 %v1689
    %2391 = vmatmul.mubr.f32.gmra.mxu0 %v1688
    %v2392 = vpop.f32.mrf.mxu0
    %v2393 = vadd.f32 %v2229, %v2392
    %v2394 = vpop.f32.mrf.mxu0
    %v2395 = vadd.f32 %v2233, %v2394
    %2396 = vmatprep.mubr.f32.mxu0 %v1693
    %2397 = vmatmul.mubr.f32.gmra.mxu0 %v1692
    %v2398 = vpop.f32.mrf.mxu0
    %v2399 = vadd.f32 %v2229, %v2398
    %v2400 = vpop.f32.mrf.mxu0
    %v2401 = vadd.f32 %v2233, %v2400
    %2402 = vmatprep.mubr.f32.mxu0 %v1697
    %2403 = vmatmul.mubr.f32.gmra.mxu0 %v1696
    %v2404 = vpop.f32.mrf.mxu0
    %v2405 = vadd.f32 %v2229, %v2404
    %v2406 = vpop.f32.mrf.mxu0
    %v2407 = vadd.f32 %v2233, %v2406
    %2408 = vmatprep.mubr.f32.mxu0 %v1701
    %2409 = vmatmul.mubr.f32.gmra.mxu0 %v1700
    %v2410 = vpop.f32.mrf.mxu0
    %v2411 = vadd.f32 %v2229, %v2410
    %v2412 = vpop.f32.mrf.mxu0
    %v2413 = vadd.f32 %v2233, %v2412
    %2414 = vmatprep.mubr.f32.mxu0 %v1705
    %2415 = vmatmul.mubr.f32.gmra.mxu0 %v1704
    %v2416 = vpop.f32.mrf.mxu0
    %v2417 = vadd.f32 %v2229, %v2416
    %v2418 = vpop.f32.mrf.mxu0
    %v2419 = vadd.f32 %v2233, %v2418
    %2420 = vmatprep.mubr.f32.mxu0 %v1709
    %2421 = vmatmul.mubr.f32.gmra.mxu0 %v1708
    %v2422 = vpop.f32.mrf.mxu0
    %v2423 = vadd.f32 %v2229, %v2422
    %v2424 = vpop.f32.mrf.mxu0
    %v2425 = vadd.f32 %v2233, %v2424
    %2426 = vdwg.mxu0
    %2427 = vmatprep.subr.mxu0 %v2089
    %2428 = vmatpush1.msra.mxu0 %v2088
    %2429 = vmatprep.subr.mxu0 %v2081
    %2430 = vmatpush1.msra.mxu0 %v2080
    %2431 = vmatprep.subr.mxu0 %v2073
    %2432 = vmatpush1.msra.mxu0 %v2072
    %2433 = vmatprep.subr.mxu0 %v2065
    %2434 = vmatpush1.msra.mxu0 %v2064
    %2435 = vmatprep.subr.mxu0 %v2057
    %2436 = vmatpush1.msra.mxu0 %v2056
    %2437 = vmatprep.subr.mxu0 %v2049
    %2438 = vmatpush1.msra.mxu0 %v2048
    %2439 = vmatprep.subr.mxu0 %v2041
    %2440 = vmatpush1.msra.mxu0 %v2040
    %2441 = vmatprep.subr.mxu0 %v2033
    %2442 = vmatpush1.msra.mxu0 %v2032
    %2443 = vmatprep.subr.mxu0 %v2025
    %2444 = vmatpush1.msra.mxu0 %v2024
    %2445 = vmatprep.subr.mxu0 %v2017
    %2446 = vmatpush1.msra.mxu0 %v2016
    %2447 = vmatprep.subr.mxu0 %v2009
    %2448 = vmatpush1.msra.mxu0 %v2008
    %2449 = vmatprep.subr.mxu0 %v2001
    %2450 = vmatpush1.msra.mxu0 %v2000
    %2451 = vmatprep.subr.mxu0 %v1993
    %2452 = vmatpush1.msra.mxu0 %v1992
    %2453 = vmatprep.subr.mxu0 %v1985
    %2454 = vmatpush1.msra.mxu0 %v1984
    %2455 = vmatprep.subr.mxu0 %v1977
    %2456 = vmatpush1.msra.mxu0 %v1976
    %2457 = vmatprep.subr.mxu0 %v1969
    %2458 = vmatpush1.msra.mxu0 %v1968
    %2459 = vmatprep.subr.mxu0 %v2217
    %2460 = vmatpush2.msra.mxu0 %v2216
    %2461 = vmatprep.subr.mxu0 %v2209
    %2462 = vmatpush2.msra.mxu0 %v2208
    %2463 = vmatprep.subr.mxu0 %v2201
    %2464 = vmatpush2.msra.mxu0 %v2200
    %2465 = vmatprep.subr.mxu0 %v2193
    %2466 = vmatpush2.msra.mxu0 %v2192
    %2467 = vmatprep.subr.mxu0 %v2185
    %2468 = vmatpush2.msra.mxu0 %v2184
    %2469 = vmatprep.subr.mxu0 %v2177
    %2470 = vmatpush2.msra.mxu0 %v2176
    %2471 = vmatprep.subr.mxu0 %v2169
    %2472 = vmatpush2.msra.mxu0 %v2168
    %2473 = vmatprep.subr.mxu0 %v2161
    %2474 = vmatpush2.msra.mxu0 %v2160
    %2475 = vmatprep.subr.mxu0 %v2153
    %2476 = vmatpush2.msra.mxu0 %v2152
    %2477 = vmatprep.subr.mxu0 %v2145
    %2478 = vmatpush2.msra.mxu0 %v2144
    %2479 = vmatprep.subr.mxu0 %v2137
    %2480 = vmatpush2.msra.mxu0 %v2136
    %2481 = vmatprep.subr.mxu0 %v2129
    %2482 = vmatpush2.msra.mxu0 %v2128
    %2483 = vmatprep.subr.mxu0 %v2121
    %2484 = vmatpush2.msra.mxu0 %v2120
    %2485 = vmatprep.subr.mxu0 %v2113
    %2486 = vmatpush2.msra.mxu0 %v2112
    %2487 = vmatprep.subr.mxu0 %v2105
    %2488 = vmatpush2.msra.mxu0 %v2104
    %2489 = vmatprep.subr.mxu0 %v2097
    %2490 = vmatpush2.msra.mxu0 %v2096
    %2491 = vmatprep.mubr.f32.mxu0 %v1651
    %2492 = vmatmul.mubr.f32.gmra.mxu0 %v1650
    %v2493 = vpop.f32.mrf.mxu0
    %v2494 = vadd.f32 %v2333, %v2493
    %v2495 = vpop.f32.mrf.mxu0
    %v2496 = vadd.f32 %v2335, %v2495
    %2497 = vmatprep.mubr.f32.mxu0 %v1655
    %2498 = vmatmul.mubr.f32.gmra.mxu0 %v1654
    %v2499 = vpop.f32.mrf.mxu0
    %v2500 = vadd.f32 %v2339, %v2499
    %v2501 = vpop.f32.mrf.mxu0
    %v2502 = vadd.f32 %v2341, %v2501
    %2503 = vmatprep.mubr.f32.mxu0 %v1659
    %2504 = vmatmul.mubr.f32.gmra.mxu0 %v1658
    %v2505 = vpop.f32.mrf.mxu0
    %v2506 = vadd.f32 %v2345, %v2505
    %v2507 = vpop.f32.mrf.mxu0
    %v2508 = vadd.f32 %v2347, %v2507
    %2509 = vmatprep.mubr.f32.mxu0 %v1663
    %2510 = vmatmul.mubr.f32.gmra.mxu0 %v1662
    %v2511 = vpop.f32.mrf.mxu0
    %v2512 = vadd.f32 %v2351, %v2511
    %v2513 = vpop.f32.mrf.mxu0
    %v2514 = vadd.f32 %v2353, %v2513
    %2515 = vmatprep.mubr.f32.mxu0 %v1667
    %2516 = vmatmul.mubr.f32.gmra.mxu0 %v1666
    %v2517 = vpop.f32.mrf.mxu0
    %v2518 = vadd.f32 %v2357, %v2517
    %v2519 = vpop.f32.mrf.mxu0
    %v2520 = vadd.f32 %v2359, %v2519
    %2521 = vmatprep.mubr.f32.mxu0 %v1671
    %2522 = vmatmul.mubr.f32.gmra.mxu0 %v1670
    %v2523 = vpop.f32.mrf.mxu0
    %v2524 = vadd.f32 %v2363, %v2523
    %v2525 = vpop.f32.mrf.mxu0
    %v2526 = vadd.f32 %v2365, %v2525
    %2527 = vmatprep.mubr.f32.mxu0 %v1675
    %2528 = vmatmul.mubr.f32.gmra.mxu0 %v1674
    %v2529 = vpop.f32.mrf.mxu0
    %v2530 = vadd.f32 %v2369, %v2529
    %v2531 = vpop.f32.mrf.mxu0
    %v2532 = vadd.f32 %v2371, %v2531
    %2533 = vmatprep.mubr.f32.mxu0 %v1679
    %2534 = vmatmul.mubr.f32.gmra.mxu0 %v1678
    %v2535 = vpop.f32.mrf.mxu0
    %v2536 = vadd.f32 %v2375, %v2535
    %v2537 = vpop.f32.mrf.mxu0
    %v2538 = vadd.f32 %v2377, %v2537
    %2539 = vmatprep.mubr.f32.mxu0 %v1683
    %2540 = vmatmul.mubr.f32.gmra.mxu0 %v1682
    %v2541 = vpop.f32.mrf.mxu0
    %v2542 = vadd.f32 %v2381, %v2541
    %v2543 = vpop.f32.mrf.mxu0
    %v2544 = vadd.f32 %v2383, %v2543
    %2545 = vmatprep.mubr.f32.mxu0 %v1687
    %2546 = vmatmul.mubr.f32.gmra.mxu0 %v1686
    %v2547 = vpop.f32.mrf.mxu0
    %v2548 = vadd.f32 %v2387, %v2547
    %v2549 = vpop.f32.mrf.mxu0
    %v2550 = vadd.f32 %v2389, %v2549
    %2551 = vmatprep.mubr.f32.mxu0 %v1691
    %2552 = vmatmul.mubr.f32.gmra.mxu0 %v1690
    %v2553 = vpop.f32.mrf.mxu0
    %v2554 = vadd.f32 %v2393, %v2553
    %v2555 = vpop.f32.mrf.mxu0
    %v2556 = vadd.f32 %v2395, %v2555
    %2557 = vmatprep.mubr.f32.mxu0 %v1695
    %2558 = vmatmul.mubr.f32.gmra.mxu0 %v1694
    %v2559 = vpop.f32.mrf.mxu0
    %v2560 = vadd.f32 %v2399, %v2559
    %v2561 = vpop.f32.mrf.mxu0
    %v2562 = vadd.f32 %v2401, %v2561
    %2563 = vmatprep.mubr.f32.mxu0 %v1699
    %2564 = vmatmul.mubr.f32.gmra.mxu0 %v1698
    %v2565 = vpop.f32.mrf.mxu0
    %v2566 = vadd.f32 %v2405, %v2565
    %v2567 = vpop.f32.mrf.mxu0
    %v2568 = vadd.f32 %v2407, %v2567
    %2569 = vmatprep.mubr.f32.mxu0 %v1703
    %2570 = vmatmul.mubr.f32.gmra.mxu0 %v1702
    %v2571 = vpop.f32.mrf.mxu0
    %v2572 = vadd.f32 %v2411, %v2571
    %v2573 = vpop.f32.mrf.mxu0
    %v2574 = vadd.f32 %v2413, %v2573
    %2575 = vmatprep.mubr.f32.mxu0 %v1707
    %2576 = vmatmul.mubr.f32.gmra.mxu0 %v1706
    %v2577 = vpop.f32.mrf.mxu0
    %v2578 = vadd.f32 %v2417, %v2577
    %v2579 = vpop.f32.mrf.mxu0
    %v2580 = vadd.f32 %v2419, %v2579
    %2581 = vmatprep.mubr.f32.mxu0 %v1711
    %2582 = vmatmul.mubr.f32.gmra.mxu0 %v1710
    %v2583 = vpop.f32.mrf.mxu0
    %v2584 = vadd.f32 %v2423, %v2583
    %v2585 = vpop.f32.mrf.mxu0
    %v2586 = vadd.f32 %v2425, %v2585
    %2587 = vdwg.mxu0
    %2588 = vmatprep.subr.mxu0 %v1835
    %2589 = vmatpush1.msra.mxu0 %v1834
    %2590 = vmatprep.subr.mxu0 %v1827
    %2591 = vmatpush1.msra.mxu0 %v1826
    %2592 = vmatprep.subr.mxu0 %v1819
    %2593 = vmatpush1.msra.mxu0 %v1818
    %2594 = vmatprep.subr.mxu0 %v1811
    %2595 = vmatpush1.msra.mxu0 %v1810
    %2596 = vmatprep.subr.mxu0 %v1803
    %2597 = vmatpush1.msra.mxu0 %v1802
    %2598 = vmatprep.subr.mxu0 %v1795
    %2599 = vmatpush1.msra.mxu0 %v1794
    %2600 = vmatprep.subr.mxu0 %v1787
    %2601 = vmatpush1.msra.mxu0 %v1786
    %2602 = vmatprep.subr.mxu0 %v1779
    %2603 = vmatpush1.msra.mxu0 %v1778
    %2604 = vmatprep.subr.mxu0 %v1771
    %2605 = vmatpush1.msra.mxu0 %v1770
    %2606 = vmatprep.subr.mxu0 %v1763
    %2607 = vmatpush1.msra.mxu0 %v1762
    %2608 = vmatprep.subr.mxu0 %v1755
    %2609 = vmatpush1.msra.mxu0 %v1754
    %2610 = vmatprep.subr.mxu0 %v1747
    %2611 = vmatpush1.msra.mxu0 %v1746
    %2612 = vmatprep.subr.mxu0 %v1739
    %2613 = vmatpush1.msra.mxu0 %v1738
    %2614 = vmatprep.subr.mxu0 %v1731
    %2615 = vmatpush1.msra.mxu0 %v1730
    %2616 = vmatprep.subr.mxu0 %v1723
    %2617 = vmatpush1.msra.mxu0 %v1722
    %2618 = vmatprep.subr.mxu0 %v1715
    %2619 = vmatpush1.msra.mxu0 %v1714
    %2620 = vmatprep.subr.mxu0 %v1963
    %2621 = vmatpush2.msra.mxu0 %v1962
    %2622 = vmatprep.subr.mxu0 %v1955
    %2623 = vmatpush2.msra.mxu0 %v1954
    %2624 = vmatprep.subr.mxu0 %v1947
    %2625 = vmatpush2.msra.mxu0 %v1946
    %2626 = vmatprep.subr.mxu0 %v1939
    %2627 = vmatpush2.msra.mxu0 %v1938
    %2628 = vmatprep.subr.mxu0 %v1931
    %2629 = vmatpush2.msra.mxu0 %v1930
    %2630 = vmatprep.subr.mxu0 %v1923
    %2631 = vmatpush2.msra.mxu0 %v1922
    %2632 = vmatprep.subr.mxu0 %v1915
    %2633 = vmatpush2.msra.mxu0 %v1914
    %2634 = vmatprep.subr.mxu0 %v1907
    %2635 = vmatpush2.msra.mxu0 %v1906
    %2636 = vmatprep.subr.mxu0 %v1899
    %2637 = vmatpush2.msra.mxu0 %v1898
    %2638 = vmatprep.subr.mxu0 %v1891
    %2639 = vmatpush2.msra.mxu0 %v1890
    %2640 = vmatprep.subr.mxu0 %v1883
    %2641 = vmatpush2.msra.mxu0 %v1882
    %2642 = vmatprep.subr.mxu0 %v1875
    %2643 = vmatpush2.msra.mxu0 %v1874
    %2644 = vmatprep.subr.mxu0 %v1867
    %2645 = vmatpush2.msra.mxu0 %v1866
    %2646 = vmatprep.subr.mxu0 %v1859
    %2647 = vmatpush2.msra.mxu0 %v1858
    %2648 = vmatprep.subr.mxu0 %v1851
    %2649 = vmatpush2.msra.mxu0 %v1850
    %2650 = vmatprep.subr.mxu0 %v1843
    %2651 = vmatpush2.msra.mxu0 %v1842
    %2652 = vmatprep.mubr.f32.mxu0 %v1649
    %2653 = vmatmul.mubr.f32.gmra.mxu0 %v1648
    %v2654 = vpop.f32.mrf.mxu0
    %v2655 = vadd.f32 %v2237, %v2654
    %v2656 = vpop.f32.mrf.mxu0
    %v2657 = vadd.f32 %v2241, %v2656
    %2658 = vmatprep.mubr.f32.mxu0 %v1653
    %2659 = vmatmul.mubr.f32.gmra.mxu0 %v1652
    %v2660 = vpop.f32.mrf.mxu0
    %v2661 = vadd.f32 %v2237, %v2660
    %v2662 = vpop.f32.mrf.mxu0
    %v2663 = vadd.f32 %v2241, %v2662
    %2664 = vmatprep.mubr.f32.mxu0 %v1657
    %2665 = vmatmul.mubr.f32.gmra.mxu0 %v1656
    %v2666 = vpop.f32.mrf.mxu0
    %v2667 = vadd.f32 %v2237, %v2666
    %v2668 = vpop.f32.mrf.mxu0
    %v2669 = vadd.f32 %v2241, %v2668
    %2670 = vmatprep.mubr.f32.mxu0 %v1661
    %2671 = vmatmul.mubr.f32.gmra.mxu0 %v1660
    %v2672 = vpop.f32.mrf.mxu0
    %v2673 = vadd.f32 %v2237, %v2672
    %v2674 = vpop.f32.mrf.mxu0
    %v2675 = vadd.f32 %v2241, %v2674
    %2676 = vmatprep.mubr.f32.mxu0 %v1665
    %2677 = vmatmul.mubr.f32.gmra.mxu0 %v1664
    %v2678 = vpop.f32.mrf.mxu0
    %v2679 = vadd.f32 %v2237, %v2678
    %v2680 = vpop.f32.mrf.mxu0
    %v2681 = vadd.f32 %v2241, %v2680
    %2682 = vmatprep.mubr.f32.mxu0 %v1669
    %2683 = vmatmul.mubr.f32.gmra.mxu0 %v1668
    %v2684 = vpop.f32.mrf.mxu0
    %v2685 = vadd.f32 %v2237, %v2684
    %v2686 = vpop.f32.mrf.mxu0
    %v2687 = vadd.f32 %v2241, %v2686
    %2688 = vmatprep.mubr.f32.mxu0 %v1673
    %2689 = vmatmul.mubr.f32.gmra.mxu0 %v1672
    %v2690 = vpop.f32.mrf.mxu0
    %v2691 = vadd.f32 %v2237, %v2690
    %v2692 = vpop.f32.mrf.mxu0
    %v2693 = vadd.f32 %v2241, %v2692
    %2694 = vmatprep.mubr.f32.mxu0 %v1677
    %2695 = vmatmul.mubr.f32.gmra.mxu0 %v1676
    %v2696 = vpop.f32.mrf.mxu0
    %v2697 = vadd.f32 %v2237, %v2696
    %v2698 = vpop.f32.mrf.mxu0
    %v2699 = vadd.f32 %v2241, %v2698
    %2700 = vmatprep.mubr.f32.mxu0 %v1681
    %2701 = vmatmul.mubr.f32.gmra.mxu0 %v1680
    %v2702 = vpop.f32.mrf.mxu0
    %v2703 = vadd.f32 %v2237, %v2702
    %v2704 = vpop.f32.mrf.mxu0
    %v2705 = vadd.f32 %v2241, %v2704
    %2706 = vmatprep.mubr.f32.mxu0 %v1685
    %2707 = vmatmul.mubr.f32.gmra.mxu0 %v1684
    %v2708 = vpop.f32.mrf.mxu0
    %v2709 = vadd.f32 %v2237, %v2708
    %v2710 = vpop.f32.mrf.mxu0
    %v2711 = vadd.f32 %v2241, %v2710
    %2712 = vmatprep.mubr.f32.mxu0 %v1689
    %2713 = vmatmul.mubr.f32.gmra.mxu0 %v1688
    %v2714 = vpop.f32.mrf.mxu0
    %v2715 = vadd.f32 %v2237, %v2714
    %v2716 = vpop.f32.mrf.mxu0
    %v2717 = vadd.f32 %v2241, %v2716
    %2718 = vmatprep.mubr.f32.mxu0 %v1693
    %2719 = vmatmul.mubr.f32.gmra.mxu0 %v1692
    %v2720 = vpop.f32.mrf.mxu0
    %v2721 = vadd.f32 %v2237, %v2720
    %v2722 = vpop.f32.mrf.mxu0
    %v2723 = vadd.f32 %v2241, %v2722
    %2724 = vmatprep.mubr.f32.mxu0 %v1697
    %2725 = vmatmul.mubr.f32.gmra.mxu0 %v1696
    %v2726 = vpop.f32.mrf.mxu0
    %v2727 = vadd.f32 %v2237, %v2726
    %v2728 = vpop.f32.mrf.mxu0
    %v2729 = vadd.f32 %v2241, %v2728
    %2730 = vmatprep.mubr.f32.mxu0 %v1701
    %2731 = vmatmul.mubr.f32.gmra.mxu0 %v1700
    %v2732 = vpop.f32.mrf.mxu0
    %v2733 = vadd.f32 %v2237, %v2732
    %v2734 = vpop.f32.mrf.mxu0
    %v2735 = vadd.f32 %v2241, %v2734
    %2736 = vmatprep.mubr.f32.mxu0 %v1705
    %2737 = vmatmul.mubr.f32.gmra.mxu0 %v1704
    %v2738 = vpop.f32.mrf.mxu0
    %v2739 = vadd.f32 %v2237, %v2738
    %v2740 = vpop.f32.mrf.mxu0
    %v2741 = vadd.f32 %v2241, %v2740
    %2742 = vmatprep.mubr.f32.mxu0 %v1709
    %2743 = vmatmul.mubr.f32.gmra.mxu0 %v1708
    %v2744 = vpop.f32.mrf.mxu0
    %v2745 = vadd.f32 %v2237, %v2744
    %v2746 = vpop.f32.mrf.mxu0
    %v2747 = vadd.f32 %v2241, %v2746
    %2748 = vdwg.mxu0
    %2749 = vmatprep.subr.mxu0 %v2091
    %2750 = vmatpush1.msra.mxu0 %v2090
    %2751 = vmatprep.subr.mxu0 %v2083
    %2752 = vmatpush1.msra.mxu0 %v2082
    %2753 = vmatprep.subr.mxu0 %v2075
    %2754 = vmatpush1.msra.mxu0 %v2074
    %2755 = vmatprep.subr.mxu0 %v2067
    %2756 = vmatpush1.msra.mxu0 %v2066
    %2757 = vmatprep.subr.mxu0 %v2059
    %2758 = vmatpush1.msra.mxu0 %v2058
    %2759 = vmatprep.subr.mxu0 %v2051
    %2760 = vmatpush1.msra.mxu0 %v2050
    %2761 = vmatprep.subr.mxu0 %v2043
    %2762 = vmatpush1.msra.mxu0 %v2042
    %2763 = vmatprep.subr.mxu0 %v2035
    %2764 = vmatpush1.msra.mxu0 %v2034
    %2765 = vmatprep.subr.mxu0 %v2027
    %2766 = vmatpush1.msra.mxu0 %v2026
    %2767 = vmatprep.subr.mxu0 %v2019
    %2768 = vmatpush1.msra.mxu0 %v2018
    %2769 = vmatprep.subr.mxu0 %v2011
    %2770 = vmatpush1.msra.mxu0 %v2010
    %2771 = vmatprep.subr.mxu0 %v2003
    %2772 = vmatpush1.msra.mxu0 %v2002
    %2773 = vmatprep.subr.mxu0 %v1995
    %2774 = vmatpush1.msra.mxu0 %v1994
    %2775 = vmatprep.subr.mxu0 %v1987
    %2776 = vmatpush1.msra.mxu0 %v1986
    %2777 = vmatprep.subr.mxu0 %v1979
    %2778 = vmatpush1.msra.mxu0 %v1978
    %2779 = vmatprep.subr.mxu0 %v1971
    %2780 = vmatpush1.msra.mxu0 %v1970
    %2781 = vmatprep.subr.mxu0 %v2219
    %2782 = vmatpush2.msra.mxu0 %v2218
    %2783 = vmatprep.subr.mxu0 %v2211
    %2784 = vmatpush2.msra.mxu0 %v2210
    %2785 = vmatprep.subr.mxu0 %v2203
    %2786 = vmatpush2.msra.mxu0 %v2202
    %2787 = vmatprep.subr.mxu0 %v2195
    %2788 = vmatpush2.msra.mxu0 %v2194
    %2789 = vmatprep.subr.mxu0 %v2187
    %2790 = vmatpush2.msra.mxu0 %v2186
    %2791 = vmatprep.subr.mxu0 %v2179
    %2792 = vmatpush2.msra.mxu0 %v2178
    %2793 = vmatprep.subr.mxu0 %v2171
    %2794 = vmatpush2.msra.mxu0 %v2170
    %2795 = vmatprep.subr.mxu0 %v2163
    %2796 = vmatpush2.msra.mxu0 %v2162
    %2797 = vmatprep.subr.mxu0 %v2155
    %2798 = vmatpush2.msra.mxu0 %v2154
    %2799 = vmatprep.subr.mxu0 %v2147
    %2800 = vmatpush2.msra.mxu0 %v2146
    %2801 = vmatprep.subr.mxu0 %v2139
    %2802 = vmatpush2.msra.mxu0 %v2138
    %2803 = vmatprep.subr.mxu0 %v2131
    %2804 = vmatpush2.msra.mxu0 %v2130
    %2805 = vmatprep.subr.mxu0 %v2123
    %2806 = vmatpush2.msra.mxu0 %v2122
    %2807 = vmatprep.subr.mxu0 %v2115
    %2808 = vmatpush2.msra.mxu0 %v2114
    %2809 = vmatprep.subr.mxu0 %v2107
    %2810 = vmatpush2.msra.mxu0 %v2106
    %2811 = vmatprep.subr.mxu0 %v2099
    %2812 = vmatpush2.msra.mxu0 %v2098
    %2813 = vmatprep.mubr.f32.mxu0 %v1651
    %2814 = vmatmul.mubr.f32.gmra.mxu0 %v1650
    %v2815 = vpop.f32.mrf.mxu0
    %v2816 = vadd.f32 %v2655, %v2815
    %v2817 = vpop.f32.mrf.mxu0
    %v2818 = vadd.f32 %v2657, %v2817
    %2819 = vmatprep.mubr.f32.mxu0 %v1655
    %2820 = vmatmul.mubr.f32.gmra.mxu0 %v1654
    %v2821 = vpop.f32.mrf.mxu0
    %v2822 = vadd.f32 %v2661, %v2821
    %v2823 = vpop.f32.mrf.mxu0
    %v2824 = vadd.f32 %v2663, %v2823
    %2825 = vmatprep.mubr.f32.mxu0 %v1659
    %2826 = vmatmul.mubr.f32.gmra.mxu0 %v1658
    %v2827 = vpop.f32.mrf.mxu0
    %v2828 = vadd.f32 %v2667, %v2827
    %v2829 = vpop.f32.mrf.mxu0
    %v2830 = vadd.f32 %v2669, %v2829
    %2831 = vmatprep.mubr.f32.mxu0 %v1663
    %2832 = vmatmul.mubr.f32.gmra.mxu0 %v1662
    %v2833 = vpop.f32.mrf.mxu0
    %v2834 = vadd.f32 %v2673, %v2833
    %v2835 = vpop.f32.mrf.mxu0
    %v2836 = vadd.f32 %v2675, %v2835
    %2837 = vmatprep.mubr.f32.mxu0 %v1667
    %2838 = vmatmul.mubr.f32.gmra.mxu0 %v1666
    %v2839 = vpop.f32.mrf.mxu0
    %v2840 = vadd.f32 %v2679, %v2839
    %v2841 = vpop.f32.mrf.mxu0
    %v2842 = vadd.f32 %v2681, %v2841
    %2843 = vmatprep.mubr.f32.mxu0 %v1671
    %2844 = vmatmul.mubr.f32.gmra.mxu0 %v1670
    %v2845 = vpop.f32.mrf.mxu0
    %v2846 = vadd.f32 %v2685, %v2845
    %v2847 = vpop.f32.mrf.mxu0
    %v2848 = vadd.f32 %v2687, %v2847
    %2849 = vmatprep.mubr.f32.mxu0 %v1675
    %2850 = vmatmul.mubr.f32.gmra.mxu0 %v1674
    %v2851 = vpop.f32.mrf.mxu0
    %v2852 = vadd.f32 %v2691, %v2851
    %v2853 = vpop.f32.mrf.mxu0
    %v2854 = vadd.f32 %v2693, %v2853
    %2855 = vmatprep.mubr.f32.mxu0 %v1679
    %2856 = vmatmul.mubr.f32.gmra.mxu0 %v1678
    %v2857 = vpop.f32.mrf.mxu0
    %v2858 = vadd.f32 %v2697, %v2857
    %v2859 = vpop.f32.mrf.mxu0
    %v2860 = vadd.f32 %v2699, %v2859
    %2861 = vmatprep.mubr.f32.mxu0 %v1683
    %2862 = vmatmul.mubr.f32.gmra.mxu0 %v1682
    %v2863 = vpop.f32.mrf.mxu0
    %v2864 = vadd.f32 %v2703, %v2863
    %v2865 = vpop.f32.mrf.mxu0
    %v2866 = vadd.f32 %v2705, %v2865
    %2867 = vmatprep.mubr.f32.mxu0 %v1687
    %2868 = vmatmul.mubr.f32.gmra.mxu0 %v1686
    %v2869 = vpop.f32.mrf.mxu0
    %v2870 = vadd.f32 %v2709, %v2869
    %v2871 = vpop.f32.mrf.mxu0
    %v2872 = vadd.f32 %v2711, %v2871
    %2873 = vmatprep.mubr.f32.mxu0 %v1691
    %2874 = vmatmul.mubr.f32.gmra.mxu0 %v1690
    %v2875 = vpop.f32.mrf.mxu0
    %v2876 = vadd.f32 %v2715, %v2875
    %v2877 = vpop.f32.mrf.mxu0
    %v2878 = vadd.f32 %v2717, %v2877
    %2879 = vmatprep.mubr.f32.mxu0 %v1695
    %2880 = vmatmul.mubr.f32.gmra.mxu0 %v1694
    %v2881 = vpop.f32.mrf.mxu0
    %v2882 = vadd.f32 %v2721, %v2881
    %v2883 = vpop.f32.mrf.mxu0
    %v2884 = vadd.f32 %v2723, %v2883
    %2885 = vmatprep.mubr.f32.mxu0 %v1699
    %2886 = vmatmul.mubr.f32.gmra.mxu0 %v1698
    %v2887 = vpop.f32.mrf.mxu0
    %v2888 = vadd.f32 %v2727, %v2887
    %v2889 = vpop.f32.mrf.mxu0
    %v2890 = vadd.f32 %v2729, %v2889
    %2891 = vmatprep.mubr.f32.mxu0 %v1703
    %2892 = vmatmul.mubr.f32.gmra.mxu0 %v1702
    %v2893 = vpop.f32.mrf.mxu0
    %v2894 = vadd.f32 %v2733, %v2893
    %v2895 = vpop.f32.mrf.mxu0
    %v2896 = vadd.f32 %v2735, %v2895
    %2897 = vmatprep.mubr.f32.mxu0 %v1707
    %2898 = vmatmul.mubr.f32.gmra.mxu0 %v1706
    %v2899 = vpop.f32.mrf.mxu0
    %v2900 = vadd.f32 %v2739, %v2899
    %v2901 = vpop.f32.mrf.mxu0
    %v2902 = vadd.f32 %v2741, %v2901
    %2903 = vmatprep.mubr.f32.mxu0 %v1711
    %2904 = vmatmul.mubr.f32.gmra.mxu0 %v1710
    %v2905 = vpop.f32.mrf.mxu0
    %v2906 = vadd.f32 %v2745, %v2905
    %v2907 = vpop.f32.mrf.mxu0
    %v2908 = vadd.f32 %v2747, %v2907
    %2909 = vdwg.mxu0
    %2910 = vmatprep.subr.mxu0 %v1837
    %2911 = vmatpush1.msra.mxu0 %v1836
    %2912 = vmatprep.subr.mxu0 %v1829
    %2913 = vmatpush1.msra.mxu0 %v1828
    %2914 = vmatprep.subr.mxu0 %v1821
    %2915 = vmatpush1.msra.mxu0 %v1820
    %2916 = vmatprep.subr.mxu0 %v1813
    %2917 = vmatpush1.msra.mxu0 %v1812
    %2918 = vmatprep.subr.mxu0 %v1805
    %2919 = vmatpush1.msra.mxu0 %v1804
    %2920 = vmatprep.subr.mxu0 %v1797
    %2921 = vmatpush1.msra.mxu0 %v1796
    %2922 = vmatprep.subr.mxu0 %v1789
    %2923 = vmatpush1.msra.mxu0 %v1788
    %2924 = vmatprep.subr.mxu0 %v1781
    %2925 = vmatpush1.msra.mxu0 %v1780
    %2926 = vmatprep.subr.mxu0 %v1773
    %2927 = vmatpush1.msra.mxu0 %v1772
    %2928 = vmatprep.subr.mxu0 %v1765
    %2929 = vmatpush1.msra.mxu0 %v1764
    %2930 = vmatprep.subr.mxu0 %v1757
    %2931 = vmatpush1.msra.mxu0 %v1756
    %2932 = vmatprep.subr.mxu0 %v1749
    %2933 = vmatpush1.msra.mxu0 %v1748
    %2934 = vmatprep.subr.mxu0 %v1741
    %2935 = vmatpush1.msra.mxu0 %v1740
    %2936 = vmatprep.subr.mxu0 %v1733
    %2937 = vmatpush1.msra.mxu0 %v1732
    %2938 = vmatprep.subr.mxu0 %v1725
    %2939 = vmatpush1.msra.mxu0 %v1724
    %2940 = vmatprep.subr.mxu0 %v1717
    %2941 = vmatpush1.msra.mxu0 %v1716
    %2942 = vmatprep.subr.mxu0 %v1965
    %2943 = vmatpush2.msra.mxu0 %v1964
    %2944 = vmatprep.subr.mxu0 %v1957
    %2945 = vmatpush2.msra.mxu0 %v1956
    %2946 = vmatprep.subr.mxu0 %v1949
    %2947 = vmatpush2.msra.mxu0 %v1948
    %2948 = vmatprep.subr.mxu0 %v1941
    %2949 = vmatpush2.msra.mxu0 %v1940
    %2950 = vmatprep.subr.mxu0 %v1933
    %2951 = vmatpush2.msra.mxu0 %v1932
    %2952 = vmatprep.subr.mxu0 %v1925
    %2953 = vmatpush2.msra.mxu0 %v1924
    %2954 = vmatprep.subr.mxu0 %v1917
    %2955 = vmatpush2.msra.mxu0 %v1916
    %2956 = vmatprep.subr.mxu0 %v1909
    %2957 = vmatpush2.msra.mxu0 %v1908
    %2958 = vmatprep.subr.mxu0 %v1901
    %2959 = vmatpush2.msra.mxu0 %v1900
    %2960 = vmatprep.subr.mxu0 %v1893
    %2961 = vmatpush2.msra.mxu0 %v1892
    %2962 = vmatprep.subr.mxu0 %v1885
    %2963 = vmatpush2.msra.mxu0 %v1884
    %2964 = vmatprep.subr.mxu0 %v1877
    %2965 = vmatpush2.msra.mxu0 %v1876
    %2966 = vmatprep.subr.mxu0 %v1869
    %2967 = vmatpush2.msra.mxu0 %v1868
    %2968 = vmatprep.subr.mxu0 %v1861
    %2969 = vmatpush2.msra.mxu0 %v1860
    %2970 = vmatprep.subr.mxu0 %v1853
    %2971 = vmatpush2.msra.mxu0 %v1852
    %2972 = vmatprep.subr.mxu0 %v1845
    %2973 = vmatpush2.msra.mxu0 %v1844
    %2974 = vmatprep.mubr.f32.mxu0 %v1649
    %2975 = vmatmul.mubr.f32.gmra.mxu0 %v1648
    %v2976 = vpop.f32.mrf.mxu0
    %v2977 = vadd.f32 %v2245, %v2976
    %v2978 = vpop.f32.mrf.mxu0
    %v2979 = vadd.f32 %v2249, %v2978
    %2980 = vmatprep.mubr.f32.mxu0 %v1653
    %2981 = vmatmul.mubr.f32.gmra.mxu0 %v1652
    %v2982 = vpop.f32.mrf.mxu0
    %v2983 = vadd.f32 %v2245, %v2982
    %v2984 = vpop.f32.mrf.mxu0
    %v2985 = vadd.f32 %v2249, %v2984
    %2986 = vmatprep.mubr.f32.mxu0 %v1657
    %2987 = vmatmul.mubr.f32.gmra.mxu0 %v1656
    %v2988 = vpop.f32.mrf.mxu0
    %v2989 = vadd.f32 %v2245, %v2988
    %v2990 = vpop.f32.mrf.mxu0
    %v2991 = vadd.f32 %v2249, %v2990
    %2992 = vmatprep.mubr.f32.mxu0 %v1661
    %2993 = vmatmul.mubr.f32.gmra.mxu0 %v1660
    %v2994 = vpop.f32.mrf.mxu0
    %v2995 = vadd.f32 %v2245, %v2994
    %v2996 = vpop.f32.mrf.mxu0
    %v2997 = vadd.f32 %v2249, %v2996
    %2998 = vmatprep.mubr.f32.mxu0 %v1665
    %2999 = vmatmul.mubr.f32.gmra.mxu0 %v1664
    %v3000 = vpop.f32.mrf.mxu0
    %v3001 = vadd.f32 %v2245, %v3000
    %v3002 = vpop.f32.mrf.mxu0
    %v3003 = vadd.f32 %v2249, %v3002
    %3004 = vmatprep.mubr.f32.mxu0 %v1669
    %3005 = vmatmul.mubr.f32.gmra.mxu0 %v1668
    %v3006 = vpop.f32.mrf.mxu0
    %v3007 = vadd.f32 %v2245, %v3006
    %v3008 = vpop.f32.mrf.mxu0
    %v3009 = vadd.f32 %v2249, %v3008
    %3010 = vmatprep.mubr.f32.mxu0 %v1673
    %3011 = vmatmul.mubr.f32.gmra.mxu0 %v1672
    %v3012 = vpop.f32.mrf.mxu0
    %v3013 = vadd.f32 %v2245, %v3012
    %v3014 = vpop.f32.mrf.mxu0
    %v3015 = vadd.f32 %v2249, %v3014
    %3016 = vmatprep.mubr.f32.mxu0 %v1677
    %3017 = vmatmul.mubr.f32.gmra.mxu0 %v1676
    %v3018 = vpop.f32.mrf.mxu0
    %v3019 = vadd.f32 %v2245, %v3018
    %v3020 = vpop.f32.mrf.mxu0
    %v3021 = vadd.f32 %v2249, %v3020
    %3022 = vmatprep.mubr.f32.mxu0 %v1681
    %3023 = vmatmul.mubr.f32.gmra.mxu0 %v1680
    %v3024 = vpop.f32.mrf.mxu0
    %v3025 = vadd.f32 %v2245, %v3024
    %v3026 = vpop.f32.mrf.mxu0
    %v3027 = vadd.f32 %v2249, %v3026
    %3028 = vmatprep.mubr.f32.mxu0 %v1685
    %3029 = vmatmul.mubr.f32.gmra.mxu0 %v1684
    %v3030 = vpop.f32.mrf.mxu0
    %v3031 = vadd.f32 %v2245, %v3030
    %v3032 = vpop.f32.mrf.mxu0
    %v3033 = vadd.f32 %v2249, %v3032
    %3034 = vmatprep.mubr.f32.mxu0 %v1689
    %3035 = vmatmul.mubr.f32.gmra.mxu0 %v1688
    %v3036 = vpop.f32.mrf.mxu0
    %v3037 = vadd.f32 %v2245, %v3036
    %v3038 = vpop.f32.mrf.mxu0
    %v3039 = vadd.f32 %v2249, %v3038
    %3040 = vmatprep.mubr.f32.mxu0 %v1693
    %3041 = vmatmul.mubr.f32.gmra.mxu0 %v1692
    %v3042 = vpop.f32.mrf.mxu0
    %v3043 = vadd.f32 %v2245, %v3042
    %v3044 = vpop.f32.mrf.mxu0
    %v3045 = vadd.f32 %v2249, %v3044
    %3046 = vmatprep.mubr.f32.mxu0 %v1697
    %3047 = vmatmul.mubr.f32.gmra.mxu0 %v1696
    %v3048 = vpop.f32.mrf.mxu0
    %v3049 = vadd.f32 %v2245, %v3048
    %v3050 = vpop.f32.mrf.mxu0
    %v3051 = vadd.f32 %v2249, %v3050
    %3052 = vmatprep.mubr.f32.mxu0 %v1701
    %3053 = vmatmul.mubr.f32.gmra.mxu0 %v1700
    %v3054 = vpop.f32.mrf.mxu0
    %v3055 = vadd.f32 %v2245, %v3054
    %v3056 = vpop.f32.mrf.mxu0
    %v3057 = vadd.f32 %v2249, %v3056
    %3058 = vmatprep.mubr.f32.mxu0 %v1705
    %3059 = vmatmul.mubr.f32.gmra.mxu0 %v1704
    %v3060 = vpop.f32.mrf.mxu0
    %v3061 = vadd.f32 %v2245, %v3060
    %v3062 = vpop.f32.mrf.mxu0
    %v3063 = vadd.f32 %v2249, %v3062
    %3064 = vmatprep.mubr.f32.mxu0 %v1709
    %3065 = vmatmul.mubr.f32.gmra.mxu0 %v1708
    %v3066 = vpop.f32.mrf.mxu0
    %v3067 = vadd.f32 %v2245, %v3066
    %v3068 = vpop.f32.mrf.mxu0
    %v3069 = vadd.f32 %v2249, %v3068
    %3070 = vdwg.mxu0
    %3071 = vmatprep.subr.mxu0 %v2093
    %3072 = vmatpush1.msra.mxu0 %v2092
    %3073 = vmatprep.subr.mxu0 %v2085
    %3074 = vmatpush1.msra.mxu0 %v2084
    %3075 = vmatprep.subr.mxu0 %v2077
    %3076 = vmatpush1.msra.mxu0 %v2076
    %3077 = vmatprep.subr.mxu0 %v2069
    %3078 = vmatpush1.msra.mxu0 %v2068
    %3079 = vmatprep.subr.mxu0 %v2061
    %3080 = vmatpush1.msra.mxu0 %v2060
    %3081 = vmatprep.subr.mxu0 %v2053
    %3082 = vmatpush1.msra.mxu0 %v2052
    %3083 = vmatprep.subr.mxu0 %v2045
    %3084 = vmatpush1.msra.mxu0 %v2044
    %3085 = vmatprep.subr.mxu0 %v2037
    %3086 = vmatpush1.msra.mxu0 %v2036
    %3087 = vmatprep.subr.mxu0 %v2029
    %3088 = vmatpush1.msra.mxu0 %v2028
    %3089 = vmatprep.subr.mxu0 %v2021
    %3090 = vmatpush1.msra.mxu0 %v2020
    %3091 = vmatprep.subr.mxu0 %v2013
    %3092 = vmatpush1.msra.mxu0 %v2012
    %3093 = vmatprep.subr.mxu0 %v2005
    %3094 = vmatpush1.msra.mxu0 %v2004
    %3095 = vmatprep.subr.mxu0 %v1997
    %3096 = vmatpush1.msra.mxu0 %v1996
    %3097 = vmatprep.subr.mxu0 %v1989
    %3098 = vmatpush1.msra.mxu0 %v1988
    %3099 = vmatprep.subr.mxu0 %v1981
    %3100 = vmatpush1.msra.mxu0 %v1980
    %3101 = vmatprep.subr.mxu0 %v1973
    %3102 = vmatpush1.msra.mxu0 %v1972
    %3103 = vmatprep.subr.mxu0 %v2221
    %3104 = vmatpush2.msra.mxu0 %v2220
    %3105 = vmatprep.subr.mxu0 %v2213
    %3106 = vmatpush2.msra.mxu0 %v2212
    %3107 = vmatprep.subr.mxu0 %v2205
    %3108 = vmatpush2.msra.mxu0 %v2204
    %3109 = vmatprep.subr.mxu0 %v2197
    %3110 = vmatpush2.msra.mxu0 %v2196
    %3111 = vmatprep.subr.mxu0 %v2189
    %3112 = vmatpush2.msra.mxu0 %v2188
    %3113 = vmatprep.subr.mxu0 %v2181
    %3114 = vmatpush2.msra.mxu0 %v2180
    %3115 = vmatprep.subr.mxu0 %v2173
    %3116 = vmatpush2.msra.mxu0 %v2172
    %3117 = vmatprep.subr.mxu0 %v2165
    %3118 = vmatpush2.msra.mxu0 %v2164
    %3119 = vmatprep.subr.mxu0 %v2157
    %3120 = vmatpush2.msra.mxu0 %v2156
    %3121 = vmatprep.subr.mxu0 %v2149
    %3122 = vmatpush2.msra.mxu0 %v2148
    %3123 = vmatprep.subr.mxu0 %v2141
    %3124 = vmatpush2.msra.mxu0 %v2140
    %3125 = vmatprep.subr.mxu0 %v2133
    %3126 = vmatpush2.msra.mxu0 %v2132
    %3127 = vmatprep.subr.mxu0 %v2125
    %3128 = vmatpush2.msra.mxu0 %v2124
    %3129 = vmatprep.subr.mxu0 %v2117
    %3130 = vmatpush2.msra.mxu0 %v2116
    %3131 = vmatprep.subr.mxu0 %v2109
    %3132 = vmatpush2.msra.mxu0 %v2108
    %3133 = vmatprep.subr.mxu0 %v2101
    %3134 = vmatpush2.msra.mxu0 %v2100
    %3135 = vmatprep.mubr.f32.mxu0 %v1651
    %3136 = vmatmul.mubr.f32.gmra.mxu0 %v1650
    %v3137 = vpop.f32.mrf.mxu0
    %v3138 = vadd.f32 %v2977, %v3137
    %v3139 = vpop.f32.mrf.mxu0
    %v3140 = vadd.f32 %v2979, %v3139
    %3141 = vmatprep.mubr.f32.mxu0 %v1655
    %3142 = vmatmul.mubr.f32.gmra.mxu0 %v1654
    %v3143 = vpop.f32.mrf.mxu0
    %v3144 = vadd.f32 %v2983, %v3143
    %v3145 = vpop.f32.mrf.mxu0
    %v3146 = vadd.f32 %v2985, %v3145
    %3147 = vmatprep.mubr.f32.mxu0 %v1659
    %3148 = vmatmul.mubr.f32.gmra.mxu0 %v1658
    %v3149 = vpop.f32.mrf.mxu0
    %v3150 = vadd.f32 %v2989, %v3149
    %v3151 = vpop.f32.mrf.mxu0
    %v3152 = vadd.f32 %v2991, %v3151
    %3153 = vmatprep.mubr.f32.mxu0 %v1663
    %3154 = vmatmul.mubr.f32.gmra.mxu0 %v1662
    %v3155 = vpop.f32.mrf.mxu0
    %v3156 = vadd.f32 %v2995, %v3155
    %v3157 = vpop.f32.mrf.mxu0
    %v3158 = vadd.f32 %v2997, %v3157
    %3159 = vmatprep.mubr.f32.mxu0 %v1667
    %3160 = vmatmul.mubr.f32.gmra.mxu0 %v1666
    %v3161 = vpop.f32.mrf.mxu0
    %v3162 = vadd.f32 %v3001, %v3161
    %v3163 = vpop.f32.mrf.mxu0
    %v3164 = vadd.f32 %v3003, %v3163
    %3165 = vmatprep.mubr.f32.mxu0 %v1671
    %3166 = vmatmul.mubr.f32.gmra.mxu0 %v1670
    %v3167 = vpop.f32.mrf.mxu0
    %v3168 = vadd.f32 %v3007, %v3167
    %v3169 = vpop.f32.mrf.mxu0
    %v3170 = vadd.f32 %v3009, %v3169
    %3171 = vmatprep.mubr.f32.mxu0 %v1675
    %3172 = vmatmul.mubr.f32.gmra.mxu0 %v1674
    %v3173 = vpop.f32.mrf.mxu0
    %v3174 = vadd.f32 %v3013, %v3173
    %v3175 = vpop.f32.mrf.mxu0
    %v3176 = vadd.f32 %v3015, %v3175
    %3177 = vmatprep.mubr.f32.mxu0 %v1679
    %3178 = vmatmul.mubr.f32.gmra.mxu0 %v1678
    %v3179 = vpop.f32.mrf.mxu0
    %v3180 = vadd.f32 %v3019, %v3179
    %v3181 = vpop.f32.mrf.mxu0
    %v3182 = vadd.f32 %v3021, %v3181
    %3183 = vmatprep.mubr.f32.mxu0 %v1683
    %3184 = vmatmul.mubr.f32.gmra.mxu0 %v1682
    %v3185 = vpop.f32.mrf.mxu0
    %v3186 = vadd.f32 %v3025, %v3185
    %v3187 = vpop.f32.mrf.mxu0
    %v3188 = vadd.f32 %v3027, %v3187
    %3189 = vmatprep.mubr.f32.mxu0 %v1687
    %3190 = vmatmul.mubr.f32.gmra.mxu0 %v1686
    %v3191 = vpop.f32.mrf.mxu0
    %v3192 = vadd.f32 %v3031, %v3191
    %v3193 = vpop.f32.mrf.mxu0
    %v3194 = vadd.f32 %v3033, %v3193
    %3195 = vmatprep.mubr.f32.mxu0 %v1691
    %3196 = vmatmul.mubr.f32.gmra.mxu0 %v1690
    %v3197 = vpop.f32.mrf.mxu0
    %v3198 = vadd.f32 %v3037, %v3197
    %v3199 = vpop.f32.mrf.mxu0
    %v3200 = vadd.f32 %v3039, %v3199
    %3201 = vmatprep.mubr.f32.mxu0 %v1695
    %3202 = vmatmul.mubr.f32.gmra.mxu0 %v1694
    %v3203 = vpop.f32.mrf.mxu0
    %v3204 = vadd.f32 %v3043, %v3203
    %v3205 = vpop.f32.mrf.mxu0
    %v3206 = vadd.f32 %v3045, %v3205
    %3207 = vmatprep.mubr.f32.mxu0 %v1699
    %3208 = vmatmul.mubr.f32.gmra.mxu0 %v1698
    %v3209 = vpop.f32.mrf.mxu0
    %v3210 = vadd.f32 %v3049, %v3209
    %v3211 = vpop.f32.mrf.mxu0
    %v3212 = vadd.f32 %v3051, %v3211
    %3213 = vmatprep.mubr.f32.mxu0 %v1703
    %3214 = vmatmul.mubr.f32.gmra.mxu0 %v1702
    %v3215 = vpop.f32.mrf.mxu0
    %v3216 = vadd.f32 %v3055, %v3215
    %v3217 = vpop.f32.mrf.mxu0
    %v3218 = vadd.f32 %v3057, %v3217
    %3219 = vmatprep.mubr.f32.mxu0 %v1707
    %3220 = vmatmul.mubr.f32.gmra.mxu0 %v1706
    %v3221 = vpop.f32.mrf.mxu0
    %v3222 = vadd.f32 %v3061, %v3221
    %v3223 = vpop.f32.mrf.mxu0
    %v3224 = vadd.f32 %v3063, %v3223
    %3225 = vmatprep.mubr.f32.mxu0 %v1711
    %3226 = vmatmul.mubr.f32.gmra.mxu0 %v1710
    %v3227 = vpop.f32.mrf.mxu0
    %v3228 = vadd.f32 %v3067, %v3227
    %v3229 = vpop.f32.mrf.mxu0
    %v3230 = vadd.f32 %v3069, %v3229
    %3231 = vdwg.mxu0
    %3232 = vmatprep.subr.mxu0 %v1839
    %3233 = vmatpush1.msra.mxu0 %v1838
    %3234 = vmatprep.subr.mxu0 %v1831
    %3235 = vmatpush1.msra.mxu0 %v1830
    %3236 = vmatprep.subr.mxu0 %v1823
    %3237 = vmatpush1.msra.mxu0 %v1822
    %3238 = vmatprep.subr.mxu0 %v1815
    %3239 = vmatpush1.msra.mxu0 %v1814
    %3240 = vmatprep.subr.mxu0 %v1807
    %3241 = vmatpush1.msra.mxu0 %v1806
    %3242 = vmatprep.subr.mxu0 %v1799
    %3243 = vmatpush1.msra.mxu0 %v1798
    %3244 = vmatprep.subr.mxu0 %v1791
    %3245 = vmatpush1.msra.mxu0 %v1790
    %3246 = vmatprep.subr.mxu0 %v1783
    %3247 = vmatpush1.msra.mxu0 %v1782
    %3248 = vmatprep.subr.mxu0 %v1775
    %3249 = vmatpush1.msra.mxu0 %v1774
    %3250 = vmatprep.subr.mxu0 %v1767
    %3251 = vmatpush1.msra.mxu0 %v1766
    %3252 = vmatprep.subr.mxu0 %v1759
    %3253 = vmatpush1.msra.mxu0 %v1758
    %3254 = vmatprep.subr.mxu0 %v1751
    %3255 = vmatpush1.msra.mxu0 %v1750
    %3256 = vmatprep.subr.mxu0 %v1743
    %3257 = vmatpush1.msra.mxu0 %v1742
    %3258 = vmatprep.subr.mxu0 %v1735
    %3259 = vmatpush1.msra.mxu0 %v1734
    %3260 = vmatprep.subr.mxu0 %v1727
    %3261 = vmatpush1.msra.mxu0 %v1726
    %3262 = vmatprep.subr.mxu0 %v1719
    %3263 = vmatpush1.msra.mxu0 %v1718
    %3264 = vmatprep.subr.mxu0 %v1967
    %3265 = vmatpush2.msra.mxu0 %v1966
    %3266 = vmatprep.subr.mxu0 %v1959
    %3267 = vmatpush2.msra.mxu0 %v1958
    %3268 = vmatprep.subr.mxu0 %v1951
    %3269 = vmatpush2.msra.mxu0 %v1950
    %3270 = vmatprep.subr.mxu0 %v1943
    %3271 = vmatpush2.msra.mxu0 %v1942
    %3272 = vmatprep.subr.mxu0 %v1935
    %3273 = vmatpush2.msra.mxu0 %v1934
    %3274 = vmatprep.subr.mxu0 %v1927
    %3275 = vmatpush2.msra.mxu0 %v1926
    %3276 = vmatprep.subr.mxu0 %v1919
    %3277 = vmatpush2.msra.mxu0 %v1918
    %3278 = vmatprep.subr.mxu0 %v1911
    %3279 = vmatpush2.msra.mxu0 %v1910
    %3280 = vmatprep.subr.mxu0 %v1903
    %3281 = vmatpush2.msra.mxu0 %v1902
    %3282 = vmatprep.subr.mxu0 %v1895
    %3283 = vmatpush2.msra.mxu0 %v1894
    %3284 = vmatprep.subr.mxu0 %v1887
    %3285 = vmatpush2.msra.mxu0 %v1886
    %3286 = vmatprep.subr.mxu0 %v1879
    %3287 = vmatpush2.msra.mxu0 %v1878
    %3288 = vmatprep.subr.mxu0 %v1871
    %3289 = vmatpush2.msra.mxu0 %v1870
    %3290 = vmatprep.subr.mxu0 %v1863
    %3291 = vmatpush2.msra.mxu0 %v1862
    %3292 = vmatprep.subr.mxu0 %v1855
    %3293 = vmatpush2.msra.mxu0 %v1854
    %3294 = vmatprep.subr.mxu0 %v1847
    %3295 = vmatpush2.msra.mxu0 %v1846
    %3296 = vmatprep.mubr.f32.mxu0 %v1649
    %3297 = vmatmul.mubr.f32.gmra.mxu0 %v1648
    %v3298 = vpop.f32.mrf.mxu0
    %v3299 = vadd.f32 %v2253, %v3298
    %v3300 = vpop.f32.mrf.mxu0
    %v3301 = vadd.f32 %v2257, %v3300
    %3302 = vmatprep.mubr.f32.mxu0 %v1653
    %3303 = vmatmul.mubr.f32.gmra.mxu0 %v1652
    %v3304 = vpop.f32.mrf.mxu0
    %v3305 = vadd.f32 %v2253, %v3304
    %v3306 = vpop.f32.mrf.mxu0
    %v3307 = vadd.f32 %v2257, %v3306
    %3308 = vmatprep.mubr.f32.mxu0 %v1657
    %3309 = vmatmul.mubr.f32.gmra.mxu0 %v1656
    %v3310 = vpop.f32.mrf.mxu0
    %v3311 = vadd.f32 %v2253, %v3310
    %v3312 = vpop.f32.mrf.mxu0
    %v3313 = vadd.f32 %v2257, %v3312
    %3314 = vmatprep.mubr.f32.mxu0 %v1661
    %3315 = vmatmul.mubr.f32.gmra.mxu0 %v1660
    %v3316 = vpop.f32.mrf.mxu0
    %v3317 = vadd.f32 %v2253, %v3316
    %v3318 = vpop.f32.mrf.mxu0
    %v3319 = vadd.f32 %v2257, %v3318
    %3320 = vmatprep.mubr.f32.mxu0 %v1665
    %3321 = vmatmul.mubr.f32.gmra.mxu0 %v1664
    %v3322 = vpop.f32.mrf.mxu0
    %v3323 = vadd.f32 %v2253, %v3322
    %v3324 = vpop.f32.mrf.mxu0
    %v3325 = vadd.f32 %v2257, %v3324
    %3326 = vmatprep.mubr.f32.mxu0 %v1669
    %3327 = vmatmul.mubr.f32.gmra.mxu0 %v1668
    %v3328 = vpop.f32.mrf.mxu0
    %v3329 = vadd.f32 %v2253, %v3328
    %v3330 = vpop.f32.mrf.mxu0
    %v3331 = vadd.f32 %v2257, %v3330
    %3332 = vmatprep.mubr.f32.mxu0 %v1673
    %3333 = vmatmul.mubr.f32.gmra.mxu0 %v1672
    %v3334 = vpop.f32.mrf.mxu0
    %v3335 = vadd.f32 %v2253, %v3334
    %v3336 = vpop.f32.mrf.mxu0
    %v3337 = vadd.f32 %v2257, %v3336
    %3338 = vmatprep.mubr.f32.mxu0 %v1677
    %3339 = vmatmul.mubr.f32.gmra.mxu0 %v1676
    %v3340 = vpop.f32.mrf.mxu0
    %v3341 = vadd.f32 %v2253, %v3340
    %v3342 = vpop.f32.mrf.mxu0
    %v3343 = vadd.f32 %v2257, %v3342
    %3344 = vmatprep.mubr.f32.mxu0 %v1681
    %3345 = vmatmul.mubr.f32.gmra.mxu0 %v1680
    %v3346 = vpop.f32.mrf.mxu0
    %v3347 = vadd.f32 %v2253, %v3346
    %v3348 = vpop.f32.mrf.mxu0
    %v3349 = vadd.f32 %v2257, %v3348
    %3350 = vmatprep.mubr.f32.mxu0 %v1685
    %3351 = vmatmul.mubr.f32.gmra.mxu0 %v1684
    %v3352 = vpop.f32.mrf.mxu0
    %v3353 = vadd.f32 %v2253, %v3352
    %v3354 = vpop.f32.mrf.mxu0
    %v3355 = vadd.f32 %v2257, %v3354
    %3356 = vmatprep.mubr.f32.mxu0 %v1689
    %3357 = vmatmul.mubr.f32.gmra.mxu0 %v1688
    %v3358 = vpop.f32.mrf.mxu0
    %v3359 = vadd.f32 %v2253, %v3358
    %v3360 = vpop.f32.mrf.mxu0
    %v3361 = vadd.f32 %v2257, %v3360
    %3362 = vmatprep.mubr.f32.mxu0 %v1693
    %3363 = vmatmul.mubr.f32.gmra.mxu0 %v1692
    %v3364 = vpop.f32.mrf.mxu0
    %v3365 = vadd.f32 %v2253, %v3364
    %v3366 = vpop.f32.mrf.mxu0
    %v3367 = vadd.f32 %v2257, %v3366
    %3368 = vmatprep.mubr.f32.mxu0 %v1697
    %3369 = vmatmul.mubr.f32.gmra.mxu0 %v1696
    %v3370 = vpop.f32.mrf.mxu0
    %v3371 = vadd.f32 %v2253, %v3370
    %v3372 = vpop.f32.mrf.mxu0
    %v3373 = vadd.f32 %v2257, %v3372
    %3374 = vmatprep.mubr.f32.mxu0 %v1701
    %3375 = vmatmul.mubr.f32.gmra.mxu0 %v1700
    %v3376 = vpop.f32.mrf.mxu0
    %v3377 = vadd.f32 %v2253, %v3376
    %v3378 = vpop.f32.mrf.mxu0
    %v3379 = vadd.f32 %v2257, %v3378
    %3380 = vmatprep.mubr.f32.mxu0 %v1705
    %3381 = vmatmul.mubr.f32.gmra.mxu0 %v1704
    %v3382 = vpop.f32.mrf.mxu0
    %v3383 = vadd.f32 %v2253, %v3382
    %v3384 = vpop.f32.mrf.mxu0
    %v3385 = vadd.f32 %v2257, %v3384
    %3386 = vmatprep.mubr.f32.mxu0 %v1709
    %3387 = vmatmul.mubr.f32.gmra.mxu0 %v1708
    %v3388 = vpop.f32.mrf.mxu0
    %v3389 = vadd.f32 %v2253, %v3388
    %v3390 = vpop.f32.mrf.mxu0
    %v3391 = vadd.f32 %v2257, %v3390
    %3392 = vdwg.mxu0
    %3393 = vmatprep.subr.mxu0 %v2095
    %3394 = vmatpush1.msra.mxu0 %v2094
    %3395 = vmatprep.subr.mxu0 %v2087
    %3396 = vmatpush1.msra.mxu0 %v2086
    %3397 = vmatprep.subr.mxu0 %v2079
    %3398 = vmatpush1.msra.mxu0 %v2078
    %3399 = vmatprep.subr.mxu0 %v2071
    %3400 = vmatpush1.msra.mxu0 %v2070
    %3401 = vmatprep.subr.mxu0 %v2063
    %3402 = vmatpush1.msra.mxu0 %v2062
    %3403 = vmatprep.subr.mxu0 %v2055
    %3404 = vmatpush1.msra.mxu0 %v2054
    %3405 = vmatprep.subr.mxu0 %v2047
    %3406 = vmatpush1.msra.mxu0 %v2046
    %3407 = vmatprep.subr.mxu0 %v2039
    %3408 = vmatpush1.msra.mxu0 %v2038
    %3409 = vmatprep.subr.mxu0 %v2031
    %3410 = vmatpush1.msra.mxu0 %v2030
    %3411 = vmatprep.subr.mxu0 %v2023
    %3412 = vmatpush1.msra.mxu0 %v2022
    %3413 = vmatprep.subr.mxu0 %v2015
    %3414 = vmatpush1.msra.mxu0 %v2014
    %3415 = vmatprep.subr.mxu0 %v2007
    %3416 = vmatpush1.msra.mxu0 %v2006
    %3417 = vmatprep.subr.mxu0 %v1999
    %3418 = vmatpush1.msra.mxu0 %v1998
    %3419 = vmatprep.subr.mxu0 %v1991
    %3420 = vmatpush1.msra.mxu0 %v1990
    %3421 = vmatprep.subr.mxu0 %v1983
    %3422 = vmatpush1.msra.mxu0 %v1982
    %3423 = vmatprep.subr.mxu0 %v1975
    %3424 = vmatpush1.msra.mxu0 %v1974
    %3425 = vmatprep.subr.mxu0 %v2223
    %3426 = vmatpush2.msra.mxu0 %v2222
    %3427 = vmatprep.subr.mxu0 %v2215
    %3428 = vmatpush2.msra.mxu0 %v2214
    %3429 = vmatprep.subr.mxu0 %v2207
    %3430 = vmatpush2.msra.mxu0 %v2206
    %3431 = vmatprep.subr.mxu0 %v2199
    %3432 = vmatpush2.msra.mxu0 %v2198
    %3433 = vmatprep.subr.mxu0 %v2191
    %3434 = vmatpush2.msra.mxu0 %v2190
    %3435 = vmatprep.subr.mxu0 %v2183
    %3436 = vmatpush2.msra.mxu0 %v2182
    %3437 = vmatprep.subr.mxu0 %v2175
    %3438 = vmatpush2.msra.mxu0 %v2174
    %3439 = vmatprep.subr.mxu0 %v2167
    %3440 = vmatpush2.msra.mxu0 %v2166
    %3441 = vmatprep.subr.mxu0 %v2159
    %3442 = vmatpush2.msra.mxu0 %v2158
    %3443 = vmatprep.subr.mxu0 %v2151
    %3444 = vmatpush2.msra.mxu0 %v2150
    %3445 = vmatprep.subr.mxu0 %v2143
    %3446 = vmatpush2.msra.mxu0 %v2142
    %3447 = vmatprep.subr.mxu0 %v2135
    %3448 = vmatpush2.msra.mxu0 %v2134
    %3449 = vmatprep.subr.mxu0 %v2127
    %3450 = vmatpush2.msra.mxu0 %v2126
    %3451 = vmatprep.subr.mxu0 %v2119
    %3452 = vmatpush2.msra.mxu0 %v2118
    %3453 = vmatprep.subr.mxu0 %v2111
    %3454 = vmatpush2.msra.mxu0 %v2110
    %3455 = vmatprep.subr.mxu0 %v2103
    %3456 = vmatpush2.msra.mxu0 %v2102
    %3457 = vmatprep.mubr.f32.mxu0 %v1651
    %3458 = vmatmul.mubr.f32.gmra.mxu0 %v1650
    %v3459 = vpop.f32.mrf.mxu0
    %v3460 = vadd.f32 %v3299, %v3459
    %v3461 = vpop.f32.mrf.mxu0
    %v3462 = vadd.f32 %v3301, %v3461
    %3463 = vmatprep.mubr.f32.mxu0 %v1655
    %3464 = vmatmul.mubr.f32.gmra.mxu0 %v1654
    %v3465 = vpop.f32.mrf.mxu0
    %v3466 = vadd.f32 %v3305, %v3465
    %v3467 = vpop.f32.mrf.mxu0
    %v3468 = vadd.f32 %v3307, %v3467
    %3469 = vmatprep.mubr.f32.mxu0 %v1659
    %3470 = vmatmul.mubr.f32.gmra.mxu0 %v1658
    %v3471 = vpop.f32.mrf.mxu0
    %v3472 = vadd.f32 %v3311, %v3471
    %v3473 = vpop.f32.mrf.mxu0
    %v3474 = vadd.f32 %v3313, %v3473
    %3475 = vmatprep.mubr.f32.mxu0 %v1663
    %3476 = vmatmul.mubr.f32.gmra.mxu0 %v1662
    %v3477 = vpop.f32.mrf.mxu0
    %v3478 = vadd.f32 %v3317, %v3477
    %v3479 = vpop.f32.mrf.mxu0
    %v3480 = vadd.f32 %v3319, %v3479
    %3481 = vmatprep.mubr.f32.mxu0 %v1667
    %3482 = vmatmul.mubr.f32.gmra.mxu0 %v1666
    %v3483 = vpop.f32.mrf.mxu0
    %v3484 = vadd.f32 %v3323, %v3483
    %v3485 = vpop.f32.mrf.mxu0
    %v3486 = vadd.f32 %v3325, %v3485
    %3487 = vmatprep.mubr.f32.mxu0 %v1671
    %3488 = vmatmul.mubr.f32.gmra.mxu0 %v1670
    %v3489 = vpop.f32.mrf.mxu0
    %v3490 = vadd.f32 %v3329, %v3489
    %v3491 = vpop.f32.mrf.mxu0
    %v3492 = vadd.f32 %v3331, %v3491
    %3493 = vmatprep.mubr.f32.mxu0 %v1675
    %3494 = vmatmul.mubr.f32.gmra.mxu0 %v1674
    %v3495 = vpop.f32.mrf.mxu0
    %v3496 = vadd.f32 %v3335, %v3495
    %v3497 = vpop.f32.mrf.mxu0
    %v3498 = vadd.f32 %v3337, %v3497
    %3499 = vmatprep.mubr.f32.mxu0 %v1679
    %3500 = vmatmul.mubr.f32.gmra.mxu0 %v1678
    %v3501 = vpop.f32.mrf.mxu0
    %v3502 = vadd.f32 %v3341, %v3501
    %v3503 = vpop.f32.mrf.mxu0
    %v3504 = vadd.f32 %v3343, %v3503
    %3505 = vmatprep.mubr.f32.mxu0 %v1683
    %3506 = vmatmul.mubr.f32.gmra.mxu0 %v1682
    %v3507 = vpop.f32.mrf.mxu0
    %v3508 = vadd.f32 %v3347, %v3507
    %v3509 = vpop.f32.mrf.mxu0
    %v3510 = vadd.f32 %v3349, %v3509
    %3511 = vmatprep.mubr.f32.mxu0 %v1687
    %3512 = vmatmul.mubr.f32.gmra.mxu0 %v1686
    %v3513 = vpop.f32.mrf.mxu0
    %v3514 = vadd.f32 %v3353, %v3513
    %v3515 = vpop.f32.mrf.mxu0
    %v3516 = vadd.f32 %v3355, %v3515
    %3517 = vmatprep.mubr.f32.mxu0 %v1691
    %3518 = vmatmul.mubr.f32.gmra.mxu0 %v1690
    %v3519 = vpop.f32.mrf.mxu0
    %v3520 = vadd.f32 %v3359, %v3519
    %v3521 = vpop.f32.mrf.mxu0
    %v3522 = vadd.f32 %v3361, %v3521
    %3523 = vmatprep.mubr.f32.mxu0 %v1695
    %3524 = vmatmul.mubr.f32.gmra.mxu0 %v1694
    %v3525 = vpop.f32.mrf.mxu0
    %v3526 = vadd.f32 %v3365, %v3525
    %v3527 = vpop.f32.mrf.mxu0
    %v3528 = vadd.f32 %v3367, %v3527
    %3529 = vmatprep.mubr.f32.mxu0 %v1699
    %3530 = vmatmul.mubr.f32.gmra.mxu0 %v1698
    %v3531 = vpop.f32.mrf.mxu0
    %v3532 = vadd.f32 %v3371, %v3531
    %v3533 = vpop.f32.mrf.mxu0
    %v3534 = vadd.f32 %v3373, %v3533
    %3535 = vmatprep.mubr.f32.mxu0 %v1703
    %3536 = vmatmul.mubr.f32.gmra.mxu0 %v1702
    %v3537 = vpop.f32.mrf.mxu0
    %v3538 = vadd.f32 %v3377, %v3537
    %v3539 = vpop.f32.mrf.mxu0
    %v3540 = vadd.f32 %v3379, %v3539
    %3541 = vmatprep.mubr.f32.mxu0 %v1707
    %3542 = vmatmul.mubr.f32.gmra.mxu0 %v1706
    %v3543 = vpop.f32.mrf.mxu0
    %v3544 = vadd.f32 %v3383, %v3543
    %v3545 = vpop.f32.mrf.mxu0
    %v3546 = vadd.f32 %v3385, %v3545
    %3547 = vmatprep.mubr.f32.mxu0 %v1711
    %3548 = vmatmul.mubr.f32.gmra.mxu0 %v1710
    %v3549 = vpop.f32.mrf.mxu0
    %v3550 = vadd.f32 %v3389, %v3549
    %v3551 = vpop.f32.mrf.mxu0
    %v3552 = vadd.f32 %v3391, %v3551
    %3553 = vdwg.mxu0
    %v3554 = vmax.f32 %v2494, 0.0
    %v3555 = vmax.f32 %v2496, 0.0
    %v3556 = vmax.f32 %v2816, 0.0
    %v3557 = vmax.f32 %v2818, 0.0
    %v3558 = vmax.f32 %v3138, 0.0
    %v3559 = vmax.f32 %v3140, 0.0
    %v3560 = vmax.f32 %v3460, 0.0
    %v3561 = vmax.f32 %v3462, 0.0
    %v3562 = vmax.f32 %v2500, 0.0
    %v3563 = vmax.f32 %v2502, 0.0
    %v3564 = vmax.f32 %v2822, 0.0
    %v3565 = vmax.f32 %v2824, 0.0
    %v3566 = vmax.f32 %v3144, 0.0
    %v3567 = vmax.f32 %v3146, 0.0
    %v3568 = vmax.f32 %v3466, 0.0
    %v3569 = vmax.f32 %v3468, 0.0
    %v3570 = vmax.f32 %v2506, 0.0
    %v3571 = vmax.f32 %v2508, 0.0
    %v3572 = vmax.f32 %v2828, 0.0
    %v3573 = vmax.f32 %v2830, 0.0
    %v3574 = vmax.f32 %v3150, 0.0
    %v3575 = vmax.f32 %v3152, 0.0
    %v3576 = vmax.f32 %v3472, 0.0
    %v3577 = vmax.f32 %v3474, 0.0
    %v3578 = vmax.f32 %v2512, 0.0
    %v3579 = vmax.f32 %v2514, 0.0
    %v3580 = vmax.f32 %v2834, 0.0
    %v3581 = vmax.f32 %v2836, 0.0
    %v3582 = vmax.f32 %v3156, 0.0
    %v3583 = vmax.f32 %v3158, 0.0
    %v3584 = vmax.f32 %v3478, 0.0
    %v3585 = vmax.f32 %v3480, 0.0
    %v3586 = vmax.f32 %v2518, 0.0
    %v3587 = vmax.f32 %v2520, 0.0
    %v3588 = vmax.f32 %v2840, 0.0
    %v3589 = vmax.f32 %v2842, 0.0
    %v3590 = vmax.f32 %v3162, 0.0
    %v3591 = vmax.f32 %v3164, 0.0
    %v3592 = vmax.f32 %v3484, 0.0
    %v3593 = vmax.f32 %v3486, 0.0
    %v3594 = vmax.f32 %v2524, 0.0
    %v3595 = vmax.f32 %v2526, 0.0
    %v3596 = vmax.f32 %v2846, 0.0
    %v3597 = vmax.f32 %v2848, 0.0
    %v3598 = vmax.f32 %v3168, 0.0
    %v3599 = vmax.f32 %v3170, 0.0
    %v3600 = vmax.f32 %v3490, 0.0
    %v3601 = vmax.f32 %v3492, 0.0
    %v3602 = vmax.f32 %v2530, 0.0
    %v3603 = vmax.f32 %v2532, 0.0
    %v3604 = vmax.f32 %v2852, 0.0
    %v3605 = vmax.f32 %v2854, 0.0
    %v3606 = vmax.f32 %v3174, 0.0
    %v3607 = vmax.f32 %v3176, 0.0
    %v3608 = vmax.f32 %v3496, 0.0
    %v3609 = vmax.f32 %v3498, 0.0
    %v3610 = vmax.f32 %v2536, 0.0
    %v3611 = vmax.f32 %v2538, 0.0
    %v3612 = vmax.f32 %v2858, 0.0
    %v3613 = vmax.f32 %v2860, 0.0
    %v3614 = vmax.f32 %v3180, 0.0
    %v3615 = vmax.f32 %v3182, 0.0
    %v3616 = vmax.f32 %v3502, 0.0
    %v3617 = vmax.f32 %v3504, 0.0
    %v3618 = vmax.f32 %v2542, 0.0
    %v3619 = vmax.f32 %v2544, 0.0
    %v3620 = vmax.f32 %v2864, 0.0
    %v3621 = vmax.f32 %v2866, 0.0
    %v3622 = vmax.f32 %v3186, 0.0
    %v3623 = vmax.f32 %v3188, 0.0
    %v3624 = vmax.f32 %v3508, 0.0
    %v3625 = vmax.f32 %v3510, 0.0
    %v3626 = vmax.f32 %v2548, 0.0
    %v3627 = vmax.f32 %v2550, 0.0
    %v3628 = vmax.f32 %v2870, 0.0
    %v3629 = vmax.f32 %v2872, 0.0
    %v3630 = vmax.f32 %v3192, 0.0
    %v3631 = vmax.f32 %v3194, 0.0
    %v3632 = vmax.f32 %v3514, 0.0
    %v3633 = vmax.f32 %v3516, 0.0
    %v3634 = vmax.f32 %v2554, 0.0
    %v3635 = vmax.f32 %v2556, 0.0
    %v3636 = vmax.f32 %v2876, 0.0
    %v3637 = vmax.f32 %v2878, 0.0
    %v3638 = vmax.f32 %v3198, 0.0
    %v3639 = vmax.f32 %v3200, 0.0
    %v3640 = vmax.f32 %v3520, 0.0
    %v3641 = vmax.f32 %v3522, 0.0
    %v3642 = vmax.f32 %v2560, 0.0
    %v3643 = vmax.f32 %v2562, 0.0
    %v3644 = vmax.f32 %v2882, 0.0
    %v3645 = vmax.f32 %v2884, 0.0
    %v3646 = vmax.f32 %v3204, 0.0
    %v3647 = vmax.f32 %v3206, 0.0
    %v3648 = vmax.f32 %v3526, 0.0
    %v3649 = vmax.f32 %v3528, 0.0
    %v3650 = vmax.f32 %v2566, 0.0
    %v3651 = vmax.f32 %v2568, 0.0
    %v3652 = vmax.f32 %v2888, 0.0
    %v3653 = vmax.f32 %v2890, 0.0
    %v3654 = vmax.f32 %v3210, 0.0
    %v3655 = vmax.f32 %v3212, 0.0
    %v3656 = vmax.f32 %v3532, 0.0
    %v3657 = vmax.f32 %v3534, 0.0
    %v3658 = vmax.f32 %v2572, 0.0
    %v3659 = vmax.f32 %v2574, 0.0
    %v3660 = vmax.f32 %v2894, 0.0
    %v3661 = vmax.f32 %v2896, 0.0
    %v3662 = vmax.f32 %v3216, 0.0
    %v3663 = vmax.f32 %v3218, 0.0
    %v3664 = vmax.f32 %v3538, 0.0
    %v3665 = vmax.f32 %v3540, 0.0
    %v3666 = vmax.f32 %v2578, 0.0
    %v3667 = vmax.f32 %v2580, 0.0
    %v3668 = vmax.f32 %v2900, 0.0
    %v3669 = vmax.f32 %v2902, 0.0
    %v3670 = vmax.f32 %v3222, 0.0
    %v3671 = vmax.f32 %v3224, 0.0
    %v3672 = vmax.f32 %v3544, 0.0
    %v3673 = vmax.f32 %v3546, 0.0
    %v3674 = vmax.f32 %v2584, 0.0
    %v3675 = vmax.f32 %v2586, 0.0
    %v3676 = vmax.f32 %v2906, 0.0
    %v3677 = vmax.f32 %v2908, 0.0
    %v3678 = vmax.f32 %v3228, 0.0
    %v3679 = vmax.f32 %v3230, 0.0
    %v3680 = vmax.f32 %v3550, 0.0
    %v3681 = vmax.f32 %v3552, 0.0
    %v3682 = vadd.f32 %v3554, %v3562
    %v3683 = vadd.f32 %v3682, %v3570
    %v3684 = vadd.f32 %v3683, %v3578
    %v3685 = vadd.f32 %v3684, %v3586
    %v3686 = vadd.f32 %v3685, %v3594
    %v3687 = vadd.f32 %v3686, %v3602
    %v3688 = vadd.f32 %v3687, %v3610
    %v3689 = vadd.f32 %v3688, %v3618
    %v3690 = vadd.f32 %v3689, %v3626
    %v3691 = vadd.f32 %v3690, %v3634
    %v3692 = vadd.f32 %v3691, %v3642
    %v3693 = vadd.f32 %v3692, %v3650
    %v3694 = vadd.f32 %v3693, %v3658
    %v3695 = vadd.f32 %v3694, %v3666
    %v3696 = vadd.f32 %v3695, %v3674
    %v3697 = vrot.slane %v3696, 4
    %v3698 = vadd.f32 %v3696, %v3697
    %v3699 = vrot.slane %v3698, 2
    %v3700 = vadd.f32 %v3698, %v3699
    %v3701 = vrot.slane %v3700, 1
    %v3702 = vadd.f32 %v3700, %v3701
    %v3703 = vadd.f32 %v3555, %v3563
    %v3704 = vadd.f32 %v3703, %v3571
    %v3705 = vadd.f32 %v3704, %v3579
    %v3706 = vadd.f32 %v3705, %v3587
    %v3707 = vadd.f32 %v3706, %v3595
    %v3708 = vadd.f32 %v3707, %v3603
    %v3709 = vadd.f32 %v3708, %v3611
    %v3710 = vadd.f32 %v3709, %v3619
    %v3711 = vadd.f32 %v3710, %v3627
    %v3712 = vadd.f32 %v3711, %v3635
    %v3713 = vadd.f32 %v3712, %v3643
    %v3714 = vadd.f32 %v3713, %v3651
    %v3715 = vadd.f32 %v3714, %v3659
    %v3716 = vadd.f32 %v3715, %v3667
    %v3717 = vadd.f32 %v3716, %v3675
    %v3718 = vrot.slane %v3717, 4
    %v3719 = vadd.f32 %v3717, %v3718
    %v3720 = vrot.slane %v3719, 2
    %v3721 = vadd.f32 %v3719, %v3720
    %v3722 = vrot.slane %v3721, 1
    %v3723 = vadd.f32 %v3721, %v3722
    %v3724 = vadd.f32 %v3556, %v3564
    %v3725 = vadd.f32 %v3724, %v3572
    %v3726 = vadd.f32 %v3725, %v3580
    %v3727 = vadd.f32 %v3726, %v3588
    %v3728 = vadd.f32 %v3727, %v3596
    %v3729 = vadd.f32 %v3728, %v3604
    %v3730 = vadd.f32 %v3729, %v3612
    %v3731 = vadd.f32 %v3730, %v3620
    %v3732 = vadd.f32 %v3731, %v3628
    %v3733 = vadd.f32 %v3732, %v3636
    %v3734 = vadd.f32 %v3733, %v3644
    %v3735 = vadd.f32 %v3734, %v3652
    %v3736 = vadd.f32 %v3735, %v3660
    %v3737 = vadd.f32 %v3736, %v3668
    %v3738 = vadd.f32 %v3737, %v3676
    %v3739 = vrot.slane %v3738, 4
    %v3740 = vadd.f32 %v3738, %v3739
    %v3741 = vrot.slane %v3740, 2
    %v3742 = vadd.f32 %v3740, %v3741
    %v3743 = vrot.slane %v3742, 1
    %v3744 = vadd.f32 %v3742, %v3743
    %v3745 = vadd.f32 %v3557, %v3565
    %v3746 = vadd.f32 %v3745, %v3573
    %v3747 = vadd.f32 %v3746, %v3581
    %v3748 = vadd.f32 %v3747, %v3589
    %v3749 = vadd.f32 %v3748, %v3597
    %v3750 = vadd.f32 %v3749, %v3605
    %v3751 = vadd.f32 %v3750, %v3613
    %v3752 = vadd.f32 %v3751, %v3621
    %v3753 = vadd.f32 %v3752, %v3629
    %v3754 = vadd.f32 %v3753, %v3637
    %v3755 = vadd.f32 %v3754, %v3645
    %v3756 = vadd.f32 %v3755, %v3653
    %v3757 = vadd.f32 %v3756, %v3661
    %v3758 = vadd.f32 %v3757, %v3669
    %v3759 = vadd.f32 %v3758, %v3677
    %v3760 = vrot.slane %v3759, 4
    %v3761 = vadd.f32 %v3759, %v3760
    %v3762 = vrot.slane %v3761, 2
    %v3763 = vadd.f32 %v3761, %v3762
    %v3764 = vrot.slane %v3763, 1
    %v3765 = vadd.f32 %v3763, %v3764
    %v3766 = vadd.f32 %v3558, %v3566
    %v3767 = vadd.f32 %v3766, %v3574
    %v3768 = vadd.f32 %v3767, %v3582
    %v3769 = vadd.f32 %v3768, %v3590
    %v3770 = vadd.f32 %v3769, %v3598
    %v3771 = vadd.f32 %v3770, %v3606
    %v3772 = vadd.f32 %v3771, %v3614
    %v3773 = vadd.f32 %v3772, %v3622
    %v3774 = vadd.f32 %v3773, %v3630
    %v3775 = vadd.f32 %v3774, %v3638
    %v3776 = vadd.f32 %v3775, %v3646
    %v3777 = vadd.f32 %v3776, %v3654
    %v3778 = vadd.f32 %v3777, %v3662
    %v3779 = vadd.f32 %v3778, %v3670
    %v3780 = vadd.f32 %v3779, %v3678
    %v3781 = vrot.slane %v3780, 4
    %v3782 = vadd.f32 %v3780, %v3781
    %v3783 = vrot.slane %v3782, 2
    %v3784 = vadd.f32 %v3782, %v3783
    %v3785 = vrot.slane %v3784, 1
    %v3786 = vadd.f32 %v3784, %v3785
    %v3787 = vadd.f32 %v3559, %v3567
    %v3788 = vadd.f32 %v3787, %v3575
    %v3789 = vadd.f32 %v3788, %v3583
    %v3790 = vadd.f32 %v3789, %v3591
    %v3791 = vadd.f32 %v3790, %v3599
    %v3792 = vadd.f32 %v3791, %v3607
    %v3793 = vadd.f32 %v3792, %v3615
    %v3794 = vadd.f32 %v3793, %v3623
    %v3795 = vadd.f32 %v3794, %v3631
    %v3796 = vadd.f32 %v3795, %v3639
    %v3797 = vadd.f32 %v3796, %v3647
    %v3798 = vadd.f32 %v3797, %v3655
    %v3799 = vadd.f32 %v3798, %v3663
    %v3800 = vadd.f32 %v3799, %v3671
    %v3801 = vadd.f32 %v3800, %v3679
    %v3802 = vrot.slane %v3801, 4
    %v3803 = vadd.f32 %v3801, %v3802
    %v3804 = vrot.slane %v3803, 2
    %v3805 = vadd.f32 %v3803, %v3804
    %v3806 = vrot.slane %v3805, 1
    %v3807 = vadd.f32 %v3805, %v3806
    %v3808 = vadd.f32 %v3560, %v3568
    %v3809 = vadd.f32 %v3808, %v3576
    %v3810 = vadd.f32 %v3809, %v3584
    %v3811 = vadd.f32 %v3810, %v3592
    %v3812 = vadd.f32 %v3811, %v3600
    %v3813 = vadd.f32 %v3812, %v3608
    %v3814 = vadd.f32 %v3813, %v3616
    %v3815 = vadd.f32 %v3814, %v3624
    %v3816 = vadd.f32 %v3815, %v3632
    %v3817 = vadd.f32 %v3816, %v3640
    %v3818 = vadd.f32 %v3817, %v3648
    %v3819 = vadd.f32 %v3818, %v3656
    %v3820 = vadd.f32 %v3819, %v3664
    %v3821 = vadd.f32 %v3820, %v3672
    %v3822 = vadd.f32 %v3821, %v3680
    %v3823 = vrot.slane %v3822, 4
    %v3824 = vadd.f32 %v3822, %v3823
    %v3825 = vrot.slane %v3824, 2
    %v3826 = vadd.f32 %v3824, %v3825
    %v3827 = vrot.slane %v3826, 1
    %v3828 = vadd.f32 %v3826, %v3827
    %v3829 = vadd.f32 %v3561, %v3569
    %v3830 = vadd.f32 %v3829, %v3577
    %v3831 = vadd.f32 %v3830, %v3585
    %v3832 = vadd.f32 %v3831, %v3593
    %v3833 = vadd.f32 %v3832, %v3601
    %v3834 = vadd.f32 %v3833, %v3609
    %v3835 = vadd.f32 %v3834, %v3617
    %v3836 = vadd.f32 %v3835, %v3625
    %v3837 = vadd.f32 %v3836, %v3633
    %v3838 = vadd.f32 %v3837, %v3641
    %v3839 = vadd.f32 %v3838, %v3649
    %v3840 = vadd.f32 %v3839, %v3657
    %v3841 = vadd.f32 %v3840, %v3665
    %v3842 = vadd.f32 %v3841, %v3673
    %v3843 = vadd.f32 %v3842, %v3681
    %v3844 = vrot.slane %v3843, 4
    %v3845 = vadd.f32 %v3843, %v3844
    %v3846 = vrot.slane %v3845, 2
    %v3847 = vadd.f32 %v3845, %v3846
    %v3848 = vrot.slane %v3847, 1
    %v3849 = vadd.f32 %v3847, %v3848
    %v3850 = vmul.f32 %v3702, 0.0078125
    %v3851 = vmul.f32 %v3723, 0.0078125
    %v3852 = vmul.f32 %v3744, 0.0078125
    %v3853 = vmul.f32 %v3765, 0.0078125
    %v3854 = vmul.f32 %v3786, 0.0078125
    %v3855 = vmul.f32 %v3807, 0.0078125
    %v3856 = vmul.f32 %v3828, 0.0078125
    %v3857 = vmul.f32 %v3849, 0.0078125
    %v3858 = vmul.f32 %v3554, %v3554
    %v3859 = vmul.f32 %v3555, %v3555
    %v3860 = vmul.f32 %v3556, %v3556
    %v3861 = vmul.f32 %v3557, %v3557
    %v3862 = vmul.f32 %v3558, %v3558
    %v3863 = vmul.f32 %v3559, %v3559
    %v3864 = vmul.f32 %v3560, %v3560
    %v3865 = vmul.f32 %v3561, %v3561
    %v3866 = vmul.f32 %v3562, %v3562
    %v3867 = vmul.f32 %v3563, %v3563
    %v3868 = vmul.f32 %v3564, %v3564
    %v3869 = vmul.f32 %v3565, %v3565
    %v3870 = vmul.f32 %v3566, %v3566
    %v3871 = vmul.f32 %v3567, %v3567
    %v3872 = vmul.f32 %v3568, %v3568
    %v3873 = vmul.f32 %v3569, %v3569
    %v3874 = vmul.f32 %v3570, %v3570
    %v3875 = vmul.f32 %v3571, %v3571
    %v3876 = vmul.f32 %v3572, %v3572
    %v3877 = vmul.f32 %v3573, %v3573
    %v3878 = vmul.f32 %v3574, %v3574
    %v3879 = vmul.f32 %v3575, %v3575
    %v3880 = vmul.f32 %v3576, %v3576
    %v3881 = vmul.f32 %v3577, %v3577
    %v3882 = vmul.f32 %v3578, %v3578
    %v3883 = vmul.f32 %v3579, %v3579
    %v3884 = vmul.f32 %v3580, %v3580
    %v3885 = vmul.f32 %v3581, %v3581
    %v3886 = vmul.f32 %v3582, %v3582
    %v3887 = vmul.f32 %v3583, %v3583
    %v3888 = vmul.f32 %v3584, %v3584
    %v3889 = vmul.f32 %v3585, %v3585
    %v3890 = vmul.f32 %v3586, %v3586
    %v3891 = vmul.f32 %v3587, %v3587
    %v3892 = vmul.f32 %v3588, %v3588
    %v3893 = vmul.f32 %v3589, %v3589
    %v3894 = vmul.f32 %v3590, %v3590
    %v3895 = vmul.f32 %v3591, %v3591
    %v3896 = vmul.f32 %v3592, %v3592
    %v3897 = vmul.f32 %v3593, %v3593
    %v3898 = vmul.f32 %v3594, %v3594
    %v3899 = vmul.f32 %v3595, %v3595
    %v3900 = vmul.f32 %v3596, %v3596
    %v3901 = vmul.f32 %v3597, %v3597
    %v3902 = vmul.f32 %v3598, %v3598
    %v3903 = vmul.f32 %v3599, %v3599
    %v3904 = vmul.f32 %v3600, %v3600
    %v3905 = vmul.f32 %v3601, %v3601
    %v3906 = vmul.f32 %v3602, %v3602
    %v3907 = vmul.f32 %v3603, %v3603
    %v3908 = vmul.f32 %v3604, %v3604
    %v3909 = vmul.f32 %v3605, %v3605
    %v3910 = vmul.f32 %v3606, %v3606
    %v3911 = vmul.f32 %v3607, %v3607
    %v3912 = vmul.f32 %v3608, %v3608
    %v3913 = vmul.f32 %v3609, %v3609
    %v3914 = vmul.f32 %v3610, %v3610
    %v3915 = vmul.f32 %v3611, %v3611
    %v3916 = vmul.f32 %v3612, %v3612
    %v3917 = vmul.f32 %v3613, %v3613
    %v3918 = vmul.f32 %v3614, %v3614
    %v3919 = vmul.f32 %v3615, %v3615
    %v3920 = vmul.f32 %v3616, %v3616
    %v3921 = vmul.f32 %v3617, %v3617
    %v3922 = vmul.f32 %v3618, %v3618
    %v3923 = vmul.f32 %v3619, %v3619
    %v3924 = vmul.f32 %v3620, %v3620
    %v3925 = vmul.f32 %v3621, %v3621
    %v3926 = vmul.f32 %v3622, %v3622
    %v3927 = vmul.f32 %v3623, %v3623
    %v3928 = vmul.f32 %v3624, %v3624
    %v3929 = vmul.f32 %v3625, %v3625
    %v3930 = vmul.f32 %v3626, %v3626
    %v3931 = vmul.f32 %v3627, %v3627
    %v3932 = vmul.f32 %v3628, %v3628
    %v3933 = vmul.f32 %v3629, %v3629
    %v3934 = vmul.f32 %v3630, %v3630
    %v3935 = vmul.f32 %v3631, %v3631
    %v3936 = vmul.f32 %v3632, %v3632
    %v3937 = vmul.f32 %v3633, %v3633
    %v3938 = vmul.f32 %v3634, %v3634
    %v3939 = vmul.f32 %v3635, %v3635
    %v3940 = vmul.f32 %v3636, %v3636
    %v3941 = vmul.f32 %v3637, %v3637
    %v3942 = vmul.f32 %v3638, %v3638
    %v3943 = vmul.f32 %v3639, %v3639
    %v3944 = vmul.f32 %v3640, %v3640
    %v3945 = vmul.f32 %v3641, %v3641
    %v3946 = vmul.f32 %v3642, %v3642
    %v3947 = vmul.f32 %v3643, %v3643
    %v3948 = vmul.f32 %v3644, %v3644
    %v3949 = vmul.f32 %v3645, %v3645
    %v3950 = vmul.f32 %v3646, %v3646
    %v3951 = vmul.f32 %v3647, %v3647
    %v3952 = vmul.f32 %v3648, %v3648
    %v3953 = vmul.f32 %v3649, %v3649
    %v3954 = vmul.f32 %v3650, %v3650
    %v3955 = vmul.f32 %v3651, %v3651
    %v3956 = vmul.f32 %v3652, %v3652
    %v3957 = vmul.f32 %v3653, %v3653
    %v3958 = vmul.f32 %v3654, %v3654
    %v3959 = vmul.f32 %v3655, %v3655
    %v3960 = vmul.f32 %v3656, %v3656
    %v3961 = vmul.f32 %v3657, %v3657
    %v3962 = vmul.f32 %v3658, %v3658
    %v3963 = vmul.f32 %v3659, %v3659
    %v3964 = vmul.f32 %v3660, %v3660
    %v3965 = vmul.f32 %v3661, %v3661
    %v3966 = vmul.f32 %v3662, %v3662
    %v3967 = vmul.f32 %v3663, %v3663
    %v3968 = vmul.f32 %v3664, %v3664
    %v3969 = vmul.f32 %v3665, %v3665
    %v3970 = vmul.f32 %v3666, %v3666
    %v3971 = vmul.f32 %v3667, %v3667
    %v3972 = vmul.f32 %v3668, %v3668
    %v3973 = vmul.f32 %v3669, %v3669
    %v3974 = vmul.f32 %v3670, %v3670
    %v3975 = vmul.f32 %v3671, %v3671
    %v3976 = vmul.f32 %v3672, %v3672
    %v3977 = vmul.f32 %v3673, %v3673
    %v3978 = vmul.f32 %v3674, %v3674
    %v3979 = vmul.f32 %v3675, %v3675
    %v3980 = vmul.f32 %v3676, %v3676
    %v3981 = vmul.f32 %v3677, %v3677
    %v3982 = vmul.f32 %v3678, %v3678
    %v3983 = vmul.f32 %v3679, %v3679
    %v3984 = vmul.f32 %v3680, %v3680
    %v3985 = vmul.f32 %v3681, %v3681
    %v3986 = vadd.f32 %v3858, %v3866
    %v3987 = vadd.f32 %v3986, %v3874
    %v3988 = vadd.f32 %v3987, %v3882
    %v3989 = vadd.f32 %v3988, %v3890
    %v3990 = vadd.f32 %v3989, %v3898
    %v3991 = vadd.f32 %v3990, %v3906
    %v3992 = vadd.f32 %v3991, %v3914
    %v3993 = vadd.f32 %v3992, %v3922
    %v3994 = vadd.f32 %v3993, %v3930
    %v3995 = vadd.f32 %v3994, %v3938
    %v3996 = vadd.f32 %v3995, %v3946
    %v3997 = vadd.f32 %v3996, %v3954
    %v3998 = vadd.f32 %v3997, %v3962
    %v3999 = vadd.f32 %v3998, %v3970
    %v4000 = vadd.f32 %v3999, %v3978
    %v4001 = vrot.slane %v4000, 4
    %v4002 = vadd.f32 %v4000, %v4001
    %v4003 = vrot.slane %v4002, 2
    %v4004 = vadd.f32 %v4002, %v4003
    %v4005 = vrot.slane %v4004, 1
    %v4006 = vadd.f32 %v4004, %v4005
    %v4007 = vadd.f32 %v3859, %v3867
    %v4008 = vadd.f32 %v4007, %v3875
    %v4009 = vadd.f32 %v4008, %v3883
    %v4010 = vadd.f32 %v4009, %v3891
    %v4011 = vadd.f32 %v4010, %v3899
    %v4012 = vadd.f32 %v4011, %v3907
    %v4013 = vadd.f32 %v4012, %v3915
    %v4014 = vadd.f32 %v4013, %v3923
    %v4015 = vadd.f32 %v4014, %v3931
    %v4016 = vadd.f32 %v4015, %v3939
    %v4017 = vadd.f32 %v4016, %v3947
    %v4018 = vadd.f32 %v4017, %v3955
    %v4019 = vadd.f32 %v4018, %v3963
    %v4020 = vadd.f32 %v4019, %v3971
    %v4021 = vadd.f32 %v4020, %v3979
    %v4022 = vrot.slane %v4021, 4
    %v4023 = vadd.f32 %v4021, %v4022
    %v4024 = vrot.slane %v4023, 2
    %v4025 = vadd.f32 %v4023, %v4024
    %v4026 = vrot.slane %v4025, 1
    %v4027 = vadd.f32 %v4025, %v4026
    %v4028 = vadd.f32 %v3860, %v3868
    %v4029 = vadd.f32 %v4028, %v3876
    %v4030 = vadd.f32 %v4029, %v3884
    %v4031 = vadd.f32 %v4030, %v3892
    %v4032 = vadd.f32 %v4031, %v3900
    %v4033 = vadd.f32 %v4032, %v3908
    %v4034 = vadd.f32 %v4033, %v3916
    %v4035 = vadd.f32 %v4034, %v3924
    %v4036 = vadd.f32 %v4035, %v3932
    %v4037 = vadd.f32 %v4036, %v3940
    %v4038 = vadd.f32 %v4037, %v3948
    %v4039 = vadd.f32 %v4038, %v3956
    %v4040 = vadd.f32 %v4039, %v3964
    %v4041 = vadd.f32 %v4040, %v3972
    %v4042 = vadd.f32 %v4041, %v3980
    %v4043 = vrot.slane %v4042, 4
    %v4044 = vadd.f32 %v4042, %v4043
    %v4045 = vrot.slane %v4044, 2
    %v4046 = vadd.f32 %v4044, %v4045
    %v4047 = vrot.slane %v4046, 1
    %v4048 = vadd.f32 %v4046, %v4047
    %v4049 = vadd.f32 %v3861, %v3869
    %v4050 = vadd.f32 %v4049, %v3877
    %v4051 = vadd.f32 %v4050, %v3885
    %v4052 = vadd.f32 %v4051, %v3893
    %v4053 = vadd.f32 %v4052, %v3901
    %v4054 = vadd.f32 %v4053, %v3909
    %v4055 = vadd.f32 %v4054, %v3917
    %v4056 = vadd.f32 %v4055, %v3925
    %v4057 = vadd.f32 %v4056, %v3933
    %v4058 = vadd.f32 %v4057, %v3941
    %v4059 = vadd.f32 %v4058, %v3949
    %v4060 = vadd.f32 %v4059, %v3957
    %v4061 = vadd.f32 %v4060, %v3965
    %v4062 = vadd.f32 %v4061, %v3973
    %v4063 = vadd.f32 %v4062, %v3981
    %v4064 = vrot.slane %v4063, 4
    %v4065 = vadd.f32 %v4063, %v4064
    %v4066 = vrot.slane %v4065, 2
    %v4067 = vadd.f32 %v4065, %v4066
    %v4068 = vrot.slane %v4067, 1
    %v4069 = vadd.f32 %v4067, %v4068
    %v4070 = vadd.f32 %v3862, %v3870
    %v4071 = vadd.f32 %v4070, %v3878
    %v4072 = vadd.f32 %v4071, %v3886
    %v4073 = vadd.f32 %v4072, %v3894
    %v4074 = vadd.f32 %v4073, %v3902
    %v4075 = vadd.f32 %v4074, %v3910
    %v4076 = vadd.f32 %v4075, %v3918
    %v4077 = vadd.f32 %v4076, %v3926
    %v4078 = vadd.f32 %v4077, %v3934
    %v4079 = vadd.f32 %v4078, %v3942
    %v4080 = vadd.f32 %v4079, %v3950
    %v4081 = vadd.f32 %v4080, %v3958
    %v4082 = vadd.f32 %v4081, %v3966
    %v4083 = vadd.f32 %v4082, %v3974
    %v4084 = vadd.f32 %v4083, %v3982
    %v4085 = vrot.slane %v4084, 4
    %v4086 = vadd.f32 %v4084, %v4085
    %v4087 = vrot.slane %v4086, 2
    %v4088 = vadd.f32 %v4086, %v4087
    %v4089 = vrot.slane %v4088, 1
    %v4090 = vadd.f32 %v4088, %v4089
    %v4091 = vadd.f32 %v3863, %v3871
    %v4092 = vadd.f32 %v4091, %v3879
    %v4093 = vadd.f32 %v4092, %v3887
    %v4094 = vadd.f32 %v4093, %v3895
    %v4095 = vadd.f32 %v4094, %v3903
    %v4096 = vadd.f32 %v4095, %v3911
    %v4097 = vadd.f32 %v4096, %v3919
    %v4098 = vadd.f32 %v4097, %v3927
    %v4099 = vadd.f32 %v4098, %v3935
    %v4100 = vadd.f32 %v4099, %v3943
    %v4101 = vadd.f32 %v4100, %v3951
    %v4102 = vadd.f32 %v4101, %v3959
    %v4103 = vadd.f32 %v4102, %v3967
    %v4104 = vadd.f32 %v4103, %v3975
    %v4105 = vadd.f32 %v4104, %v3983
    %v4106 = vrot.slane %v4105, 4
    %v4107 = vadd.f32 %v4105, %v4106
    %v4108 = vrot.slane %v4107, 2
    %v4109 = vadd.f32 %v4107, %v4108
    %v4110 = vrot.slane %v4109, 1
    %v4111 = vadd.f32 %v4109, %v4110
    %v4112 = vadd.f32 %v3864, %v3872
    %v4113 = vadd.f32 %v4112, %v3880
    %v4114 = vadd.f32 %v4113, %v3888
    %v4115 = vadd.f32 %v4114, %v3896
    %v4116 = vadd.f32 %v4115, %v3904
    %v4117 = vadd.f32 %v4116, %v3912
    %v4118 = vadd.f32 %v4117, %v3920
    %v4119 = vadd.f32 %v4118, %v3928
    %v4120 = vadd.f32 %v4119, %v3936
    %v4121 = vadd.f32 %v4120, %v3944
    %v4122 = vadd.f32 %v4121, %v3952
    %v4123 = vadd.f32 %v4122, %v3960
    %v4124 = vadd.f32 %v4123, %v3968
    %v4125 = vadd.f32 %v4124, %v3976
    %v4126 = vadd.f32 %v4125, %v3984
    %v4127 = vrot.slane %v4126, 4
    %v4128 = vadd.f32 %v4126, %v4127
    %v4129 = vrot.slane %v4128, 2
    %v4130 = vadd.f32 %v4128, %v4129
    %v4131 = vrot.slane %v4130, 1
    %v4132 = vadd.f32 %v4130, %v4131
    %v4133 = vadd.f32 %v3865, %v3873
    %v4134 = vadd.f32 %v4133, %v3881
    %v4135 = vadd.f32 %v4134, %v3889
    %v4136 = vadd.f32 %v4135, %v3897
    %v4137 = vadd.f32 %v4136, %v3905
    %v4138 = vadd.f32 %v4137, %v3913
    %v4139 = vadd.f32 %v4138, %v3921
    %v4140 = vadd.f32 %v4139, %v3929
    %v4141 = vadd.f32 %v4140, %v3937
    %v4142 = vadd.f32 %v4141, %v3945
    %v4143 = vadd.f32 %v4142, %v3953
    %v4144 = vadd.f32 %v4143, %v3961
    %v4145 = vadd.f32 %v4144, %v3969
    %v4146 = vadd.f32 %v4145, %v3977
    %v4147 = vadd.f32 %v4146, %v3985
    %v4148 = vrot.slane %v4147, 4
    %v4149 = vadd.f32 %v4147, %v4148
    %v4150 = vrot.slane %v4149, 2
    %v4151 = vadd.f32 %v4149, %v4150
    %v4152 = vrot.slane %v4151, 1
    %v4153 = vadd.f32 %v4151, %v4152
    %v4154 = vmul.f32 %v4006, 0.0078125
    %v4155 = vmul.f32 %v4027, 0.0078125
    %v4156 = vmul.f32 %v4048, 0.0078125
    %v4157 = vmul.f32 %v4069, 0.0078125
    %v4158 = vmul.f32 %v4090, 0.0078125
    %v4159 = vmul.f32 %v4111, 0.0078125
    %v4160 = vmul.f32 %v4132, 0.0078125
    %v4161 = vmul.f32 %v4153, 0.0078125
    %v4162 = vmul.f32 %v3850, %v3850
    %v4163 = vmul.f32 %v3851, %v3851
    %v4164 = vmul.f32 %v3852, %v3852
    %v4165 = vmul.f32 %v3853, %v3853
    %v4166 = vmul.f32 %v3854, %v3854
    %v4167 = vmul.f32 %v3855, %v3855
    %v4168 = vmul.f32 %v3856, %v3856
    %v4169 = vmul.f32 %v3857, %v3857
    %v4170 = vsub.f32 %v4154, %v4162
    %v4171 = vsub.f32 %v4155, %v4163
    %v4172 = vsub.f32 %v4156, %v4164
    %v4173 = vsub.f32 %v4157, %v4165
    %v4174 = vsub.f32 %v4158, %v4166
    %v4175 = vsub.f32 %v4159, %v4167
    %v4176 = vsub.f32 %v4160, %v4168
    %v4177 = vsub.f32 %v4161, %v4169
    %v4178 = vadd.f32 %v4170, 1e-05
    %v4179 = vadd.f32 %v4171, 1e-05
    %v4180 = vadd.f32 %v4172, 1e-05
    %v4181 = vadd.f32 %v4173, 1e-05
    %v4182 = vadd.f32 %v4174, 1e-05
    %v4183 = vadd.f32 %v4175, 1e-05
    %v4184 = vadd.f32 %v4176, 1e-05
    %v4185 = vadd.f32 %v4177, 1e-05
    %v4186 = vrsqrt.pop %v4178
    %v4187 = vrsqrt.pop %v4179
    %v4188 = vrsqrt.pop %v4180
    %v4189 = vrsqrt.pop %v4181
    %v4190 = vrsqrt.pop %v4182
    %v4191 = vrsqrt.pop %v4183
    %v4192 = vrsqrt.pop %v4184
    %v4193 = vrsqrt.pop %v4185
    %v4194 = vld [vmem:[#allocation14] sm:$0xff]
    %v4196 = vlaneseq
    %v4197 = vshrl.u32 %v4196, 7
    %v4198 = vsub.s32 0, %v4197
    %v4199 = vrot.slane %v4194, %v4198
    %v4200 = vlaneseq
    %v4201 = vshrl.u32 %v4200, 7
    %v4202 = vsub.s32 1, %v4201
    %v4203 = vrot.slane %v4194, %v4202
    %v4204 = vlaneseq
    %v4205 = vshrl.u32 %v4204, 7
    %v4206 = vsub.s32 2, %v4205
    %v4207 = vrot.slane %v4194, %v4206
    %v4208 = vlaneseq
    %v4209 = vshrl.u32 %v4208, 7
    %v4210 = vsub.s32 3, %v4209
    %v4211 = vrot.slane %v4194, %v4210
    %v4212 = vlaneseq
    %v4213 = vshrl.u32 %v4212, 7
    %v4214 = vsub.s32 4, %v4213
    %v4215 = vrot.slane %v4194, %v4214
    %v4216 = vlaneseq
    %v4217 = vshrl.u32 %v4216, 7
    %v4218 = vsub.s32 5, %v4217
    %v4219 = vrot.slane %v4194, %v4218
    %v4220 = vlaneseq
    %v4221 = vshrl.u32 %v4220, 7
    %v4222 = vsub.s32 6, %v4221
    %v4223 = vrot.slane %v4194, %v4222
    %v4224 = vlaneseq
    %v4225 = vshrl.u32 %v4224, 7
    %v4226 = vsub.s32 7, %v4225
    %v4227 = vrot.slane %v4194, %v4226
    %v4236 = vmul.f32 %v4186, %v4199
    %v4237 = vmul.f32 %v4187, %v4203
    %v4238 = vmul.f32 %v4188, %v4207
    %v4239 = vmul.f32 %v4189, %v4211
    %v4240 = vmul.f32 %v4190, %v4215
    %v4241 = vmul.f32 %v4191, %v4219
    %v4242 = vmul.f32 %v4192, %v4223
    %v4243 = vmul.f32 %v4193, %v4227
    %v4244 = vld [vmem:[#allocation16] sm:$0xff]
    %v4245 = vmul.f32 %v3850, %v4236
    %v4246 = vmul.f32 %v3851, %v4237
    %v4247 = vmul.f32 %v3852, %v4238
    %v4248 = vmul.f32 %v3853, %v4239
    %v4249 = vmul.f32 %v3854, %v4240
    %v4250 = vmul.f32 %v3855, %v4241
    %v4251 = vmul.f32 %v3856, %v4242
    %v4252 = vmul.f32 %v3857, %v4243
    %v4261 = vcombine.low %v4245, %v4246
    %v4262 = vcombine.low %v4247, %v4248
    %v4263 = vcombine.low %v4249, %v4250
    %v4264 = vcombine.low %v4251, %v4252
    %v4266 = vunpack.c.l.s4 1966171168
    %v4267 = vunpack.c.0.s8 %v4266
    %v4268 = vlaneseq
    %v4269 = vshrl.u32 %v4268, 7
    %v4270 = vsub.s32 %v4267, %v4269
    %v4271 = vrot.slane %v4261, %v4270
    %v4273 = vunpack.c.l.s4 1966171168
    %v4274 = vunpack.c.0.s8 %v4273
    %v4275 = vlaneseq
    %v4276 = vshrl.u32 %v4275, 7
    %v4277 = vsub.s32 %v4274, %v4276
    %v4278 = vrot.slane %v4262, %v4277
    %v4280 = vunpack.c.l.s4 1966171168
    %v4281 = vunpack.c.0.s8 %v4280
    %v4282 = vlaneseq
    %v4283 = vshrl.u32 %v4282, 7
    %v4284 = vsub.s32 %v4281, %v4283
    %v4285 = vrot.slane %v4263, %v4284
    %v4287 = vunpack.c.l.s4 1966171168
    %v4288 = vunpack.c.0.s8 %v4287
    %v4289 = vlaneseq
    %v4290 = vshrl.u32 %v4289, 7
    %v4291 = vsub.s32 %v4288, %v4290
    %v4292 = vrot.slane %v4264, %v4291
    %v4293 = vcombine.low %v4271, %v4278
    %v4294 = vcombine.low %v4285, %v4292
    %v4296 = vunpack.c.l.s4 1966171168
    %v4297 = vunpack.c.0.s8 %v4296
    %v4298 = vlaneseq
    %v4299 = vshrl.u32 %v4298, 7
    %v4300 = vsub.s32 %v4297, %v4299
    %v4301 = vrot.slane %v4293, %v4300
    %v4303 = vunpack.c.l.s4 1966171168
    %v4304 = vunpack.c.0.s8 %v4303
    %v4305 = vlaneseq
    %v4306 = vshrl.u32 %v4305, 7
    %v4307 = vsub.s32 %v4304, %v4306
    %v4308 = vrot.slane %v4294, %v4307
    %v4309 = vcombine.low %v4301, %v4308
    %v4311 = vsub.f32 %v4244, %v4309
    %v4312 = vlaneseq
    %v4313 = vshrl.u32 %v4312, 7
    %v4314 = vsub.s32 0, %v4313
    %v4315 = vrot.slane %v4236, %v4314
    %v4316 = vlaneseq
    %v4317 = vshrl.u32 %v4316, 7
    %v4318 = vsub.s32 0, %v4317
    %v4319 = vrot.slane %v4237, %v4318
    %v4320 = vlaneseq
    %v4321 = vshrl.u32 %v4320, 7
    %v4322 = vsub.s32 0, %v4321
    %v4323 = vrot.slane %v4238, %v4322
    %v4324 = vlaneseq
    %v4325 = vshrl.u32 %v4324, 7
    %v4326 = vsub.s32 0, %v4325
    %v4327 = vrot.slane %v4239, %v4326
    %v4328 = vlaneseq
    %v4329 = vshrl.u32 %v4328, 7
    %v4330 = vsub.s32 0, %v4329
    %v4331 = vrot.slane %v4240, %v4330
    %v4332 = vlaneseq
    %v4333 = vshrl.u32 %v4332, 7
    %v4334 = vsub.s32 0, %v4333
    %v4335 = vrot.slane %v4241, %v4334
    %v4336 = vlaneseq
    %v4337 = vshrl.u32 %v4336, 7
    %v4338 = vsub.s32 0, %v4337
    %v4339 = vrot.slane %v4242, %v4338
    %v4340 = vlaneseq
    %v4341 = vshrl.u32 %v4340, 7
    %v4342 = vsub.s32 0, %v4341
    %v4343 = vrot.slane %v4243, %v4342
    %v4344 = vmul.f32 %v3554, %v4315
    %v4345 = vmul.f32 %v3555, %v4319
    %v4346 = vmul.f32 %v3556, %v4323
    %v4347 = vmul.f32 %v3557, %v4327
    %v4348 = vmul.f32 %v3558, %v4331
    %v4349 = vmul.f32 %v3559, %v4335
    %v4350 = vmul.f32 %v3560, %v4339
    %v4351 = vmul.f32 %v3561, %v4343
    %v4352 = vmul.f32 %v3562, %v4315
    %v4353 = vmul.f32 %v3563, %v4319
    %v4354 = vmul.f32 %v3564, %v4323
    %v4355 = vmul.f32 %v3565, %v4327
    %v4356 = vmul.f32 %v3566, %v4331
    %v4357 = vmul.f32 %v3567, %v4335
    %v4358 = vmul.f32 %v3568, %v4339
    %v4359 = vmul.f32 %v3569, %v4343
    %v4360 = vmul.f32 %v3570, %v4315
    %v4361 = vmul.f32 %v3571, %v4319
    %v4362 = vmul.f32 %v3572, %v4323
    %v4363 = vmul.f32 %v3573, %v4327
    %v4364 = vmul.f32 %v3574, %v4331
    %v4365 = vmul.f32 %v3575, %v4335
    %v4366 = vmul.f32 %v3576, %v4339
    %v4367 = vmul.f32 %v3577, %v4343
    %v4368 = vmul.f32 %v3578, %v4315
    %v4369 = vmul.f32 %v3579, %v4319
    %v4370 = vmul.f32 %v3580, %v4323
    %v4371 = vmul.f32 %v3581, %v4327
    %v4372 = vmul.f32 %v3582, %v4331
    %v4373 = vmul.f32 %v3583, %v4335
    %v4374 = vmul.f32 %v3584, %v4339
    %v4375 = vmul.f32 %v3585, %v4343
    %v4376 = vmul.f32 %v3586, %v4315
    %v4377 = vmul.f32 %v3587, %v4319
    %v4378 = vmul.f32 %v3588, %v4323
    %v4379 = vmul.f32 %v3589, %v4327
    %v4380 = vmul.f32 %v3590, %v4331
    %v4381 = vmul.f32 %v3591, %v4335
    %v4382 = vmul.f32 %v3592, %v4339
    %v4383 = vmul.f32 %v3593, %v4343
    %v4384 = vmul.f32 %v3594, %v4315
    %v4385 = vmul.f32 %v3595, %v4319
    %v4386 = vmul.f32 %v3596, %v4323
    %v4387 = vmul.f32 %v3597, %v4327
    %v4388 = vmul.f32 %v3598, %v4331
    %v4389 = vmul.f32 %v3599, %v4335
    %v4390 = vmul.f32 %v3600, %v4339
    %v4391 = vmul.f32 %v3601, %v4343
    %v4392 = vmul.f32 %v3602, %v4315
    %v4393 = vmul.f32 %v3603, %v4319
    %v4394 = vmul.f32 %v3604, %v4323
    %v4395 = vmul.f32 %v3605, %v4327
    %v4396 = vmul.f32 %v3606, %v4331
    %v4397 = vmul.f32 %v3607, %v4335
    %v4398 = vmul.f32 %v3608, %v4339
    %v4399 = vmul.f32 %v3609, %v4343
    %v4400 = vmul.f32 %v3610, %v4315
    %v4401 = vmul.f32 %v3611, %v4319
    %v4402 = vmul.f32 %v3612, %v4323
    %v4403 = vmul.f32 %v3613, %v4327
    %v4404 = vmul.f32 %v3614, %v4331
    %v4405 = vmul.f32 %v3615, %v4335
    %v4406 = vmul.f32 %v3616, %v4339
    %v4407 = vmul.f32 %v3617, %v4343
    %v4408 = vmul.f32 %v3618, %v4315
    %v4409 = vmul.f32 %v3619, %v4319
    %v4410 = vmul.f32 %v3620, %v4323
    %v4411 = vmul.f32 %v3621, %v4327
    %v4412 = vmul.f32 %v3622, %v4331
    %v4413 = vmul.f32 %v3623, %v4335
    %v4414 = vmul.f32 %v3624, %v4339
    %v4415 = vmul.f32 %v3625, %v4343
    %v4416 = vmul.f32 %v3626, %v4315
    %v4417 = vmul.f32 %v3627, %v4319
    %v4418 = vmul.f32 %v3628, %v4323
    %v4419 = vmul.f32 %v3629, %v4327
    %v4420 = vmul.f32 %v3630, %v4331
    %v4421 = vmul.f32 %v3631, %v4335
    %v4422 = vmul.f32 %v3632, %v4339
    %v4423 = vmul.f32 %v3633, %v4343
    %v4424 = vmul.f32 %v3634, %v4315
    %v4425 = vmul.f32 %v3635, %v4319
    %v4426 = vmul.f32 %v3636, %v4323
    %v4427 = vmul.f32 %v3637, %v4327
    %v4428 = vmul.f32 %v3638, %v4331
    %v4429 = vmul.f32 %v3639, %v4335
    %v4430 = vmul.f32 %v3640, %v4339
    %v4431 = vmul.f32 %v3641, %v4343
    %v4432 = vmul.f32 %v3642, %v4315
    %v4433 = vmul.f32 %v3643, %v4319
    %v4434 = vmul.f32 %v3644, %v4323
    %v4435 = vmul.f32 %v3645, %v4327
    %v4436 = vmul.f32 %v3646, %v4331
    %v4437 = vmul.f32 %v3647, %v4335
    %v4438 = vmul.f32 %v3648, %v4339
    %v4439 = vmul.f32 %v3649, %v4343
    %v4440 = vmul.f32 %v3650, %v4315
    %v4441 = vmul.f32 %v3651, %v4319
    %v4442 = vmul.f32 %v3652, %v4323
    %v4443 = vmul.f32 %v3653, %v4327
    %v4444 = vmul.f32 %v3654, %v4331
    %v4445 = vmul.f32 %v3655, %v4335
    %v4446 = vmul.f32 %v3656, %v4339
    %v4447 = vmul.f32 %v3657, %v4343
    %v4448 = vmul.f32 %v3658, %v4315
    %v4449 = vmul.f32 %v3659, %v4319
    %v4450 = vmul.f32 %v3660, %v4323
    %v4451 = vmul.f32 %v3661, %v4327
    %v4452 = vmul.f32 %v3662, %v4331
    %v4453 = vmul.f32 %v3663, %v4335
    %v4454 = vmul.f32 %v3664, %v4339
    %v4455 = vmul.f32 %v3665, %v4343
    %v4456 = vmul.f32 %v3666, %v4315
    %v4457 = vmul.f32 %v3667, %v4319
    %v4458 = vmul.f32 %v3668, %v4323
    %v4459 = vmul.f32 %v3669, %v4327
    %v4460 = vmul.f32 %v3670, %v4331
    %v4461 = vmul.f32 %v3671, %v4335
    %v4462 = vmul.f32 %v3672, %v4339
    %v4463 = vmul.f32 %v3673, %v4343
    %v4464 = vmul.f32 %v3674, %v4315
    %v4465 = vmul.f32 %v3675, %v4319
    %v4466 = vmul.f32 %v3676, %v4323
    %v4467 = vmul.f32 %v3677, %v4327
    %v4468 = vmul.f32 %v3678, %v4331
    %v4469 = vmul.f32 %v3679, %v4335
    %v4470 = vmul.f32 %v3680, %v4339
    %v4471 = vmul.f32 %v3681, %v4343
    %v4473 = vlaneseq
    %v4474 = vshrl.u32 %v4473, 7
    %v4475 = vsub.s32 0, %v4474
    %v4476 = vrot.slane %v4311, %v4475
    %v4477 = vlaneseq
    %v4478 = vshrl.u32 %v4477, 7
    %v4479 = vsub.s32 1, %v4478
    %v4480 = vrot.slane %v4311, %v4479
    %v4481 = vlaneseq
    %v4482 = vshrl.u32 %v4481, 7
    %v4483 = vsub.s32 2, %v4482
    %v4484 = vrot.slane %v4311, %v4483
    %v4485 = vlaneseq
    %v4486 = vshrl.u32 %v4485, 7
    %v4487 = vsub.s32 3, %v4486
    %v4488 = vrot.slane %v4311, %v4487
    %v4489 = vlaneseq
    %v4490 = vshrl.u32 %v4489, 7
    %v4491 = vsub.s32 4, %v4490
    %v4492 = vrot.slane %v4311, %v4491
    %v4493 = vlaneseq
    %v4494 = vshrl.u32 %v4493, 7
    %v4495 = vsub.s32 5, %v4494
    %v4496 = vrot.slane %v4311, %v4495
    %v4497 = vlaneseq
    %v4498 = vshrl.u32 %v4497, 7
    %v4499 = vsub.s32 6, %v4498
    %v4500 = vrot.slane %v4311, %v4499
    %v4501 = vlaneseq
    %v4502 = vshrl.u32 %v4501, 7
    %v4503 = vsub.s32 7, %v4502
    %v4504 = vrot.slane %v4311, %v4503
    %v4513 = vadd.f32 %v4344, %v4476
    %v4514 = vadd.f32 %v4345, %v4480
    %v4515 = vadd.f32 %v4346, %v4484
    %v4516 = vadd.f32 %v4347, %v4488
    %v4517 = vadd.f32 %v4348, %v4492
    %v4518 = vadd.f32 %v4349, %v4496
    %v4519 = vadd.f32 %v4350, %v4500
    %v4520 = vadd.f32 %v4351, %v4504
    %v4521 = vadd.f32 %v4352, %v4476
    %v4522 = vadd.f32 %v4353, %v4480
    %v4523 = vadd.f32 %v4354, %v4484
    %v4524 = vadd.f32 %v4355, %v4488
    %v4525 = vadd.f32 %v4356, %v4492
    %v4526 = vadd.f32 %v4357, %v4496
    %v4527 = vadd.f32 %v4358, %v4500
    %v4528 = vadd.f32 %v4359, %v4504
    %v4529 = vadd.f32 %v4360, %v4476
    %v4530 = vadd.f32 %v4361, %v4480
    %v4531 = vadd.f32 %v4362, %v4484
    %v4532 = vadd.f32 %v4363, %v4488
    %v4533 = vadd.f32 %v4364, %v4492
    %v4534 = vadd.f32 %v4365, %v4496
    %v4535 = vadd.f32 %v4366, %v4500
    %v4536 = vadd.f32 %v4367, %v4504
    %v4537 = vadd.f32 %v4368, %v4476
    %v4538 = vadd.f32 %v4369, %v4480
    %v4539 = vadd.f32 %v4370, %v4484
    %v4540 = vadd.f32 %v4371, %v4488
    %v4541 = vadd.f32 %v4372, %v4492
    %v4542 = vadd.f32 %v4373, %v4496
    %v4543 = vadd.f32 %v4374, %v4500
    %v4544 = vadd.f32 %v4375, %v4504
    %v4545 = vadd.f32 %v4376, %v4476
    %v4546 = vadd.f32 %v4377, %v4480
    %v4547 = vadd.f32 %v4378, %v4484
    %v4548 = vadd.f32 %v4379, %v4488
    %v4549 = vadd.f32 %v4380, %v4492
    %v4550 = vadd.f32 %v4381, %v4496
    %v4551 = vadd.f32 %v4382, %v4500
    %v4552 = vadd.f32 %v4383, %v4504
    %v4553 = vadd.f32 %v4384, %v4476
    %v4554 = vadd.f32 %v4385, %v4480
    %v4555 = vadd.f32 %v4386, %v4484
    %v4556 = vadd.f32 %v4387, %v4488
    %v4557 = vadd.f32 %v4388, %v4492
    %v4558 = vadd.f32 %v4389, %v4496
    %v4559 = vadd.f32 %v4390, %v4500
    %v4560 = vadd.f32 %v4391, %v4504
    %v4561 = vadd.f32 %v4392, %v4476
    %v4562 = vadd.f32 %v4393, %v4480
    %v4563 = vadd.f32 %v4394, %v4484
    %v4564 = vadd.f32 %v4395, %v4488
    %v4565 = vadd.f32 %v4396, %v4492
    %v4566 = vadd.f32 %v4397, %v4496
    %v4567 = vadd.f32 %v4398, %v4500
    %v4568 = vadd.f32 %v4399, %v4504
    %v4569 = vadd.f32 %v4400, %v4476
    %v4570 = vadd.f32 %v4401, %v4480
    %v4571 = vadd.f32 %v4402, %v4484
    %v4572 = vadd.f32 %v4403, %v4488
    %v4573 = vadd.f32 %v4404, %v4492
    %v4574 = vadd.f32 %v4405, %v4496
    %v4575 = vadd.f32 %v4406, %v4500
    %v4576 = vadd.f32 %v4407, %v4504
    %v4577 = vadd.f32 %v4408, %v4476
    %v4578 = vadd.f32 %v4409, %v4480
    %v4579 = vadd.f32 %v4410, %v4484
    %v4580 = vadd.f32 %v4411, %v4488
    %v4581 = vadd.f32 %v4412, %v4492
    %v4582 = vadd.f32 %v4413, %v4496
    %v4583 = vadd.f32 %v4414, %v4500
    %v4584 = vadd.f32 %v4415, %v4504
    %v4585 = vadd.f32 %v4416, %v4476
    %v4586 = vadd.f32 %v4417, %v4480
    %v4587 = vadd.f32 %v4418, %v4484
    %v4588 = vadd.f32 %v4419, %v4488
    %v4589 = vadd.f32 %v4420, %v4492
    %v4590 = vadd.f32 %v4421, %v4496
    %v4591 = vadd.f32 %v4422, %v4500
    %v4592 = vadd.f32 %v4423, %v4504
    %v4593 = vadd.f32 %v4424, %v4476
    %v4594 = vadd.f32 %v4425, %v4480
    %v4595 = vadd.f32 %v4426, %v4484
    %v4596 = vadd.f32 %v4427, %v4488
    %v4597 = vadd.f32 %v4428, %v4492
    %v4598 = vadd.f32 %v4429, %v4496
    %v4599 = vadd.f32 %v4430, %v4500
    %v4600 = vadd.f32 %v4431, %v4504
    %v4601 = vadd.f32 %v4432, %v4476
    %v4602 = vadd.f32 %v4433, %v4480
    %v4603 = vadd.f32 %v4434, %v4484
    %v4604 = vadd.f32 %v4435, %v4488
    %v4605 = vadd.f32 %v4436, %v4492
    %v4606 = vadd.f32 %v4437, %v4496
    %v4607 = vadd.f32 %v4438, %v4500
    %v4608 = vadd.f32 %v4439, %v4504
    %v4609 = vadd.f32 %v4440, %v4476
    %v4610 = vadd.f32 %v4441, %v4480
    %v4611 = vadd.f32 %v4442, %v4484
    %v4612 = vadd.f32 %v4443, %v4488
    %v4613 = vadd.f32 %v4444, %v4492
    %v4614 = vadd.f32 %v4445, %v4496
    %v4615 = vadd.f32 %v4446, %v4500
    %v4616 = vadd.f32 %v4447, %v4504
    %v4617 = vadd.f32 %v4448, %v4476
    %v4618 = vadd.f32 %v4449, %v4480
    %v4619 = vadd.f32 %v4450, %v4484
    %v4620 = vadd.f32 %v4451, %v4488
    %v4621 = vadd.f32 %v4452, %v4492
    %v4622 = vadd.f32 %v4453, %v4496
    %v4623 = vadd.f32 %v4454, %v4500
    %v4624 = vadd.f32 %v4455, %v4504
    %v4625 = vadd.f32 %v4456, %v4476
    %v4626 = vadd.f32 %v4457, %v4480
    %v4627 = vadd.f32 %v4458, %v4484
    %v4628 = vadd.f32 %v4459, %v4488
    %v4629 = vadd.f32 %v4460, %v4492
    %v4630 = vadd.f32 %v4461, %v4496
    %v4631 = vadd.f32 %v4462, %v4500
    %v4632 = vadd.f32 %v4463, %v4504
    %v4633 = vadd.f32 %v4464, %v4476
    %v4634 = vadd.f32 %v4465, %v4480
    %v4635 = vadd.f32 %v4466, %v4484
    %v4636 = vadd.f32 %v4467, %v4488
    %v4637 = vadd.f32 %v4468, %v4492
    %v4638 = vadd.f32 %v4469, %v4496
    %v4639 = vadd.f32 %v4470, %v4500
    %v4640 = vadd.f32 %v4471, %v4504
    %v4641 = vld [vmem:[#allocation17] sm:$0xff]
    %v4642 = vld [vmem:[#allocation17 + $0x8] sm:$0xff]
    %v4643 = vld [vmem:[#allocation17 + $0x10] sm:$0xff]
    %v4644 = vld [vmem:[#allocation17 + $0x18] sm:$0xff]
    %v4645 = vld [vmem:[#allocation17 + $0x20] sm:$0xff]
    %v4646 = vld [vmem:[#allocation17 + $0x28] sm:$0xff]
    %v4647 = vld [vmem:[#allocation17 + $0x30] sm:$0xff]
    %v4648 = vld [vmem:[#allocation17 + $0x38] sm:$0xff]
    %v4649 = vld [vmem:[#allocation17 + $0x40] sm:$0xff]
    %v4650 = vld [vmem:[#allocation17 + $0x48] sm:$0xff]
    %v4651 = vld [vmem:[#allocation17 + $0x50] sm:$0xff]
    %v4652 = vld [vmem:[#allocation17 + $0x58] sm:$0xff]
    %v4653 = vld [vmem:[#allocation17 + $0x60] sm:$0xff]
    %v4654 = vld [vmem:[#allocation17 + $0x68] sm:$0xff]
    %v4655 = vld [vmem:[#allocation17 + $0x70] sm:$0xff]
    %v4656 = vld [vmem:[#allocation17 + $0x78] sm:$0xff]
    %v4657 = vld [vmem:[#allocation17 + $0x80] sm:$0xff]
    %v4658 = vld [vmem:[#allocation17 + $0x88] sm:$0xff]
    %v4659 = vld [vmem:[#allocation17 + $0x90] sm:$0xff]
    %v4660 = vld [vmem:[#allocation17 + $0x98] sm:$0xff]
    %v4661 = vld [vmem:[#allocation17 + $0xa0] sm:$0xff]
    %v4662 = vld [vmem:[#allocation17 + $0xa8] sm:$0xff]
    %v4663 = vld [vmem:[#allocation17 + $0xb0] sm:$0xff]
    %v4664 = vld [vmem:[#allocation17 + $0xb8] sm:$0xff]
    %v4665 = vld [vmem:[#allocation17 + $0xc0] sm:$0xff]
    %v4666 = vld [vmem:[#allocation17 + $0xc8] sm:$0xff]
    %v4667 = vld [vmem:[#allocation17 + $0xd0] sm:$0xff]
    %v4668 = vld [vmem:[#allocation17 + $0xd8] sm:$0xff]
    %v4669 = vld [vmem:[#allocation17 + $0xe0] sm:$0xff]
    %v4670 = vld [vmem:[#allocation17 + $0xe8] sm:$0xff]
    %v4671 = vld [vmem:[#allocation17 + $0xf0] sm:$0xff]
    %v4672 = vld [vmem:[#allocation17 + $0xf8] sm:$0xff]
    %v4673 = vld [vmem:[#allocation17 + $0x100] sm:$0xff]
    %v4674 = vld [vmem:[#allocation17 + $0x108] sm:$0xff]
    %v4675 = vld [vmem:[#allocation17 + $0x110] sm:$0xff]
    %v4676 = vld [vmem:[#allocation17 + $0x118] sm:$0xff]
    %v4677 = vld [vmem:[#allocation17 + $0x120] sm:$0xff]
    %v4678 = vld [vmem:[#allocation17 + $0x128] sm:$0xff]
    %v4679 = vld [vmem:[#allocation17 + $0x130] sm:$0xff]
    %v4680 = vld [vmem:[#allocation17 + $0x138] sm:$0xff]
    %v4681 = vld [vmem:[#allocation17 + $0x140] sm:$0xff]
    %v4682 = vld [vmem:[#allocation17 + $0x148] sm:$0xff]
    %v4683 = vld [vmem:[#allocation17 + $0x150] sm:$0xff]
    %v4684 = vld [vmem:[#allocation17 + $0x158] sm:$0xff]
    %v4685 = vld [vmem:[#allocation17 + $0x160] sm:$0xff]
    %v4686 = vld [vmem:[#allocation17 + $0x168] sm:$0xff]
    %v4687 = vld [vmem:[#allocation17 + $0x170] sm:$0xff]
    %v4688 = vld [vmem:[#allocation17 + $0x178] sm:$0xff]
    %v4689 = vld [vmem:[#allocation17 + $0x180] sm:$0xff]
    %v4690 = vld [vmem:[#allocation17 + $0x188] sm:$0xff]
    %v4691 = vld [vmem:[#allocation17 + $0x190] sm:$0xff]
    %v4692 = vld [vmem:[#allocation17 + $0x198] sm:$0xff]
    %v4693 = vld [vmem:[#allocation17 + $0x1a0] sm:$0xff]
    %v4694 = vld [vmem:[#allocation17 + $0x1a8] sm:$0xff]
    %v4695 = vld [vmem:[#allocation17 + $0x1b0] sm:$0xff]
    %v4696 = vld [vmem:[#allocation17 + $0x1b8] sm:$0xff]
    %v4697 = vld [vmem:[#allocation17 + $0x1c0] sm:$0xff]
    %v4698 = vld [vmem:[#allocation17 + $0x1c8] sm:$0xff]
    %v4699 = vld [vmem:[#allocation17 + $0x1d0] sm:$0xff]
    %v4700 = vld [vmem:[#allocation17 + $0x1d8] sm:$0xff]
    %v4701 = vld [vmem:[#allocation17 + $0x1e0] sm:$0xff]
    %v4702 = vld [vmem:[#allocation17 + $0x1e8] sm:$0xff]
    %v4703 = vld [vmem:[#allocation17 + $0x1f0] sm:$0xff]
    %v4704 = vld [vmem:[#allocation17 + $0x1f8] sm:$0xff]
    %v4705 = vld [vmem:[#allocation17 + $0x200] sm:$0xff]
    %v4706 = vld [vmem:[#allocation17 + $0x208] sm:$0xff]
    %v4707 = vld [vmem:[#allocation17 + $0x210] sm:$0xff]
    %v4708 = vld [vmem:[#allocation17 + $0x218] sm:$0xff]
    %v4709 = vld [vmem:[#allocation17 + $0x220] sm:$0xff]
    %v4710 = vld [vmem:[#allocation17 + $0x228] sm:$0xff]
    %v4711 = vld [vmem:[#allocation17 + $0x230] sm:$0xff]
    %v4712 = vld [vmem:[#allocation17 + $0x238] sm:$0xff]
    %v4713 = vld [vmem:[#allocation17 + $0x240] sm:$0xff]
    %v4714 = vld [vmem:[#allocation17 + $0x248] sm:$0xff]
    %v4715 = vld [vmem:[#allocation17 + $0x250] sm:$0xff]
    %v4716 = vld [vmem:[#allocation17 + $0x258] sm:$0xff]
    %v4717 = vld [vmem:[#allocation17 + $0x260] sm:$0xff]
    %v4718 = vld [vmem:[#allocation17 + $0x268] sm:$0xff]
    %v4719 = vld [vmem:[#allocation17 + $0x270] sm:$0xff]
    %v4720 = vld [vmem:[#allocation17 + $0x278] sm:$0xff]
    %v4721 = vld [vmem:[#allocation17 + $0x280] sm:$0xff]
    %v4722 = vld [vmem:[#allocation17 + $0x288] sm:$0xff]
    %v4723 = vld [vmem:[#allocation17 + $0x290] sm:$0xff]
    %v4724 = vld [vmem:[#allocation17 + $0x298] sm:$0xff]
    %v4725 = vld [vmem:[#allocation17 + $0x2a0] sm:$0xff]
    %v4726 = vld [vmem:[#allocation17 + $0x2a8] sm:$0xff]
    %v4727 = vld [vmem:[#allocation17 + $0x2b0] sm:$0xff]
    %v4728 = vld [vmem:[#allocation17 + $0x2b8] sm:$0xff]
    %v4729 = vld [vmem:[#allocation17 + $0x2c0] sm:$0xff]
    %v4730 = vld [vmem:[#allocation17 + $0x2c8] sm:$0xff]
    %v4731 = vld [vmem:[#allocation17 + $0x2d0] sm:$0xff]
    %v4732 = vld [vmem:[#allocation17 + $0x2d8] sm:$0xff]
    %v4733 = vld [vmem:[#allocation17 + $0x2e0] sm:$0xff]
    %v4734 = vld [vmem:[#allocation17 + $0x2e8] sm:$0xff]
    %v4735 = vld [vmem:[#allocation17 + $0x2f0] sm:$0xff]
    %v4736 = vld [vmem:[#allocation17 + $0x2f8] sm:$0xff]
    %v4737 = vld [vmem:[#allocation17 + $0x300] sm:$0xff]
    %v4738 = vld [vmem:[#allocation17 + $0x308] sm:$0xff]
    %v4739 = vld [vmem:[#allocation17 + $0x310] sm:$0xff]
    %v4740 = vld [vmem:[#allocation17 + $0x318] sm:$0xff]
    %v4741 = vld [vmem:[#allocation17 + $0x320] sm:$0xff]
    %v4742 = vld [vmem:[#allocation17 + $0x328] sm:$0xff]
    %v4743 = vld [vmem:[#allocation17 + $0x330] sm:$0xff]
    %v4744 = vld [vmem:[#allocation17 + $0x338] sm:$0xff]
    %v4745 = vld [vmem:[#allocation17 + $0x340] sm:$0xff]
    %v4746 = vld [vmem:[#allocation17 + $0x348] sm:$0xff]
    %v4747 = vld [vmem:[#allocation17 + $0x350] sm:$0xff]
    %v4748 = vld [vmem:[#allocation17 + $0x358] sm:$0xff]
    %v4749 = vld [vmem:[#allocation17 + $0x360] sm:$0xff]
    %v4750 = vld [vmem:[#allocation17 + $0x368] sm:$0xff]
    %v4751 = vld [vmem:[#allocation17 + $0x370] sm:$0xff]
    %v4752 = vld [vmem:[#allocation17 + $0x378] sm:$0xff]
    %v4753 = vld [vmem:[#allocation17 + $0x380] sm:$0xff]
    %v4754 = vld [vmem:[#allocation17 + $0x388] sm:$0xff]
    %v4755 = vld [vmem:[#allocation17 + $0x390] sm:$0xff]
    %v4756 = vld [vmem:[#allocation17 + $0x398] sm:$0xff]
    %v4757 = vld [vmem:[#allocation17 + $0x3a0] sm:$0xff]
    %v4758 = vld [vmem:[#allocation17 + $0x3a8] sm:$0xff]
    %v4759 = vld [vmem:[#allocation17 + $0x3b0] sm:$0xff]
    %v4760 = vld [vmem:[#allocation17 + $0x3b8] sm:$0xff]
    %v4761 = vld [vmem:[#allocation17 + $0x3c0] sm:$0xff]
    %v4762 = vld [vmem:[#allocation17 + $0x3c8] sm:$0xff]
    %v4763 = vld [vmem:[#allocation17 + $0x3d0] sm:$0xff]
    %v4764 = vld [vmem:[#allocation17 + $0x3d8] sm:$0xff]
    %v4765 = vld [vmem:[#allocation17 + $0x3e0] sm:$0xff]
    %v4766 = vld [vmem:[#allocation17 + $0x3e8] sm:$0xff]
    %v4767 = vld [vmem:[#allocation17 + $0x3f0] sm:$0xff]
    %v4768 = vld [vmem:[#allocation17 + $0x3f8] sm:$0xff]
    %v4769 = vld [vmem:[#allocation19] sm:$0x1]
    %v4771 = vlaneseq
    %v4772 = vshrl.u32 %v4771, 7
    %v4773 = vsub.s32 0, %v4772
    %v4774 = vrot.slane %v4769, %v4773
    %4776 = vmatprep.subr.mxu0 0.0
    %4777 = vmatpush1.msra.mxu0 %v4656
    %4778 = vmatprep.subr.mxu0 0.0
    %4779 = vmatpush1.msra.mxu0 %v4655
    %4780 = vmatprep.subr.mxu0 0.0
    %4781 = vmatpush1.msra.mxu0 %v4654
    %4782 = vmatprep.subr.mxu0 0.0
    %4783 = vmatpush1.msra.mxu0 %v4653
    %4784 = vmatprep.subr.mxu0 0.0
    %4785 = vmatpush1.msra.mxu0 %v4652
    %4786 = vmatprep.subr.mxu0 0.0
    %4787 = vmatpush1.msra.mxu0 %v4651
    %4788 = vmatprep.subr.mxu0 0.0
    %4789 = vmatpush1.msra.mxu0 %v4650
    %4790 = vmatprep.subr.mxu0 0.0
    %4791 = vmatpush1.msra.mxu0 %v4649
    %4792 = vmatprep.subr.mxu0 0.0
    %4793 = vmatpush1.msra.mxu0 %v4648
    %4794 = vmatprep.subr.mxu0 0.0
    %4795 = vmatpush1.msra.mxu0 %v4647
    %4796 = vmatprep.subr.mxu0 0.0
    %4797 = vmatpush1.msra.mxu0 %v4646
    %4798 = vmatprep.subr.mxu0 0.0
    %4799 = vmatpush1.msra.mxu0 %v4645
    %4800 = vmatprep.subr.mxu0 0.0
    %4801 = vmatpush1.msra.mxu0 %v4644
    %4802 = vmatprep.subr.mxu0 0.0
    %4803 = vmatpush1.msra.mxu0 %v4643
    %4804 = vmatprep.subr.mxu0 0.0
    %4805 = vmatpush1.msra.mxu0 %v4642
    %4806 = vmatprep.subr.mxu0 0.0
    %4807 = vmatpush1.msra.mxu0 %v4641
    %4808 = vmatprep.subr.mxu0 0.0
    %4809 = vmatpush2.msra.mxu0 %v4672
    %4810 = vmatprep.subr.mxu0 0.0
    %4811 = vmatpush2.msra.mxu0 %v4671
    %4812 = vmatprep.subr.mxu0 0.0
    %4813 = vmatpush2.msra.mxu0 %v4670
    %4814 = vmatprep.subr.mxu0 0.0
    %4815 = vmatpush2.msra.mxu0 %v4669
    %4816 = vmatprep.subr.mxu0 0.0
    %4817 = vmatpush2.msra.mxu0 %v4668
    %4818 = vmatprep.subr.mxu0 0.0
    %4819 = vmatpush2.msra.mxu0 %v4667
    %4820 = vmatprep.subr.mxu0 0.0
    %4821 = vmatpush2.msra.mxu0 %v4666
    %4822 = vmatprep.subr.mxu0 0.0
    %4823 = vmatpush2.msra.mxu0 %v4665
    %4824 = vmatprep.subr.mxu0 0.0
    %4825 = vmatpush2.msra.mxu0 %v4664
    %4826 = vmatprep.subr.mxu0 0.0
    %4827 = vmatpush2.msra.mxu0 %v4663
    %4828 = vmatprep.subr.mxu0 0.0
    %4829 = vmatpush2.msra.mxu0 %v4662
    %4830 = vmatprep.subr.mxu0 0.0
    %4831 = vmatpush2.msra.mxu0 %v4661
    %4832 = vmatprep.subr.mxu0 0.0
    %4833 = vmatpush2.msra.mxu0 %v4660
    %4834 = vmatprep.subr.mxu0 0.0
    %4835 = vmatpush2.msra.mxu0 %v4659
    %4836 = vmatprep.subr.mxu0 0.0
    %4837 = vmatpush2.msra.mxu0 %v4658
    %4838 = vmatprep.subr.mxu0 0.0
    %4839 = vmatpush2.msra.mxu0 %v4657
    %4840 = vmatprep.mubr.f32.mxu0 %v4514
    %4841 = vmatmul.mubr.f32.gmra.mxu0 %v4513
    %v4842 = vpop.f32.mrf.mxu0
    %v4843 = vadd.f32 %v4774, %v4842
    %v4844 = vpop.f32.mrf.mxu0
    %4845 = vmatprep.mubr.f32.mxu0 %v4522
    %4846 = vmatmul.mubr.f32.gmra.mxu0 %v4521
    %v4847 = vpop.f32.mrf.mxu0
    %v4848 = vadd.f32 %v4774, %v4847
    %v4849 = vpop.f32.mrf.mxu0
    %4850 = vmatprep.mubr.f32.mxu0 %v4530
    %4851 = vmatmul.mubr.f32.gmra.mxu0 %v4529
    %v4852 = vpop.f32.mrf.mxu0
    %v4853 = vadd.f32 %v4774, %v4852
    %v4854 = vpop.f32.mrf.mxu0
    %4855 = vmatprep.mubr.f32.mxu0 %v4538
    %4856 = vmatmul.mubr.f32.gmra.mxu0 %v4537
    %v4857 = vpop.f32.mrf.mxu0
    %v4858 = vadd.f32 %v4774, %v4857
    %v4859 = vpop.f32.mrf.mxu0
    %4860 = vmatprep.mubr.f32.mxu0 %v4546
    %4861 = vmatmul.mubr.f32.gmra.mxu0 %v4545
    %v4862 = vpop.f32.mrf.mxu0
    %v4863 = vadd.f32 %v4774, %v4862
    %v4864 = vpop.f32.mrf.mxu0
    %4865 = vmatprep.mubr.f32.mxu0 %v4554
    %4866 = vmatmul.mubr.f32.gmra.mxu0 %v4553
    %v4867 = vpop.f32.mrf.mxu0
    %v4868 = vadd.f32 %v4774, %v4867
    %v4869 = vpop.f32.mrf.mxu0
    %4870 = vmatprep.mubr.f32.mxu0 %v4562
    %4871 = vmatmul.mubr.f32.gmra.mxu0 %v4561
    %v4872 = vpop.f32.mrf.mxu0
    %v4873 = vadd.f32 %v4774, %v4872
    %v4874 = vpop.f32.mrf.mxu0
    %4875 = vmatprep.mubr.f32.mxu0 %v4570
    %4876 = vmatmul.mubr.f32.gmra.mxu0 %v4569
    %v4877 = vpop.f32.mrf.mxu0
    %v4878 = vadd.f32 %v4774, %v4877
    %v4879 = vpop.f32.mrf.mxu0
    %4880 = vmatprep.mubr.f32.mxu0 %v4578
    %4881 = vmatmul.mubr.f32.gmra.mxu0 %v4577
    %v4882 = vpop.f32.mrf.mxu0
    %v4883 = vadd.f32 %v4774, %v4882
    %v4884 = vpop.f32.mrf.mxu0
    %4885 = vmatprep.mubr.f32.mxu0 %v4586
    %4886 = vmatmul.mubr.f32.gmra.mxu0 %v4585
    %v4887 = vpop.f32.mrf.mxu0
    %v4888 = vadd.f32 %v4774, %v4887
    %v4889 = vpop.f32.mrf.mxu0
    %4890 = vmatprep.mubr.f32.mxu0 %v4594
    %4891 = vmatmul.mubr.f32.gmra.mxu0 %v4593
    %v4892 = vpop.f32.mrf.mxu0
    %v4893 = vadd.f32 %v4774, %v4892
    %v4894 = vpop.f32.mrf.mxu0
    %4895 = vmatprep.mubr.f32.mxu0 %v4602
    %4896 = vmatmul.mubr.f32.gmra.mxu0 %v4601
    %v4897 = vpop.f32.mrf.mxu0
    %v4898 = vadd.f32 %v4774, %v4897
    %v4899 = vpop.f32.mrf.mxu0
    %4900 = vmatprep.mubr.f32.mxu0 %v4610
    %4901 = vmatmul.mubr.f32.gmra.mxu0 %v4609
    %v4902 = vpop.f32.mrf.mxu0
    %v4903 = vadd.f32 %v4774, %v4902
    %v4904 = vpop.f32.mrf.mxu0
    %4905 = vmatprep.mubr.f32.mxu0 %v4618
    %4906 = vmatmul.mubr.f32.gmra.mxu0 %v4617
    %v4907 = vpop.f32.mrf.mxu0
    %v4908 = vadd.f32 %v4774, %v4907
    %v4909 = vpop.f32.mrf.mxu0
    %4910 = vmatprep.mubr.f32.mxu0 %v4626
    %4911 = vmatmul.mubr.f32.gmra.mxu0 %v4625
    %v4912 = vpop.f32.mrf.mxu0
    %v4913 = vadd.f32 %v4774, %v4912
    %v4914 = vpop.f32.mrf.mxu0
    %4915 = vmatprep.mubr.f32.mxu0 %v4634
    %4916 = vmatmul.mubr.f32.gmra.mxu0 %v4633
    %v4917 = vpop.f32.mrf.mxu0
    %v4918 = vadd.f32 %v4774, %v4917
    %v4919 = vpop.f32.mrf.mxu0
    %4920 = vdwg.mxu0
    %4921 = vmatprep.subr.mxu0 0.0
    %4922 = vmatpush1.msra.mxu0 %v4688
    %4923 = vmatprep.subr.mxu0 0.0
    %4924 = vmatpush1.msra.mxu0 %v4687
    %4925 = vmatprep.subr.mxu0 0.0
    %4926 = vmatpush1.msra.mxu0 %v4686
    %4927 = vmatprep.subr.mxu0 0.0
    %4928 = vmatpush1.msra.mxu0 %v4685
    %4929 = vmatprep.subr.mxu0 0.0
    %4930 = vmatpush1.msra.mxu0 %v4684
    %4931 = vmatprep.subr.mxu0 0.0
    %4932 = vmatpush1.msra.mxu0 %v4683
    %4933 = vmatprep.subr.mxu0 0.0
    %4934 = vmatpush1.msra.mxu0 %v4682
    %4935 = vmatprep.subr.mxu0 0.0
    %4936 = vmatpush1.msra.mxu0 %v4681
    %4937 = vmatprep.subr.mxu0 0.0
    %4938 = vmatpush1.msra.mxu0 %v4680
    %4939 = vmatprep.subr.mxu0 0.0
    %4940 = vmatpush1.msra.mxu0 %v4679
    %4941 = vmatprep.subr.mxu0 0.0
    %4942 = vmatpush1.msra.mxu0 %v4678
    %4943 = vmatprep.subr.mxu0 0.0
    %4944 = vmatpush1.msra.mxu0 %v4677
    %4945 = vmatprep.subr.mxu0 0.0
    %4946 = vmatpush1.msra.mxu0 %v4676
    %4947 = vmatprep.subr.mxu0 0.0
    %4948 = vmatpush1.msra.mxu0 %v4675
    %4949 = vmatprep.subr.mxu0 0.0
    %4950 = vmatpush1.msra.mxu0 %v4674
    %4951 = vmatprep.subr.mxu0 0.0
    %4952 = vmatpush1.msra.mxu0 %v4673
    %4953 = vmatprep.subr.mxu0 0.0
    %4954 = vmatpush2.msra.mxu0 %v4704
    %4955 = vmatprep.subr.mxu0 0.0
    %4956 = vmatpush2.msra.mxu0 %v4703
    %4957 = vmatprep.subr.mxu0 0.0
    %4958 = vmatpush2.msra.mxu0 %v4702
    %4959 = vmatprep.subr.mxu0 0.0
    %4960 = vmatpush2.msra.mxu0 %v4701
    %4961 = vmatprep.subr.mxu0 0.0
    %4962 = vmatpush2.msra.mxu0 %v4700
    %4963 = vmatprep.subr.mxu0 0.0
    %4964 = vmatpush2.msra.mxu0 %v4699
    %4965 = vmatprep.subr.mxu0 0.0
    %4966 = vmatpush2.msra.mxu0 %v4698
    %4967 = vmatprep.subr.mxu0 0.0
    %4968 = vmatpush2.msra.mxu0 %v4697
    %4969 = vmatprep.subr.mxu0 0.0
    %4970 = vmatpush2.msra.mxu0 %v4696
    %4971 = vmatprep.subr.mxu0 0.0
    %4972 = vmatpush2.msra.mxu0 %v4695
    %4973 = vmatprep.subr.mxu0 0.0
    %4974 = vmatpush2.msra.mxu0 %v4694
    %4975 = vmatprep.subr.mxu0 0.0
    %4976 = vmatpush2.msra.mxu0 %v4693
    %4977 = vmatprep.subr.mxu0 0.0
    %4978 = vmatpush2.msra.mxu0 %v4692
    %4979 = vmatprep.subr.mxu0 0.0
    %4980 = vmatpush2.msra.mxu0 %v4691
    %4981 = vmatprep.subr.mxu0 0.0
    %4982 = vmatpush2.msra.mxu0 %v4690
    %4983 = vmatprep.subr.mxu0 0.0
    %4984 = vmatpush2.msra.mxu0 %v4689
    %4985 = vmatprep.mubr.f32.mxu0 %v4516
    %4986 = vmatmul.mubr.f32.gmra.mxu0 %v4515
    %v4987 = vpop.f32.mrf.mxu0
    %v4988 = vadd.f32 %v4843, %v4987
    %v4989 = vpop.f32.mrf.mxu0
    %4990 = vmatprep.mubr.f32.mxu0 %v4524
    %4991 = vmatmul.mubr.f32.gmra.mxu0 %v4523
    %v4992 = vpop.f32.mrf.mxu0
    %v4993 = vadd.f32 %v4848, %v4992
    %v4994 = vpop.f32.mrf.mxu0
    %4995 = vmatprep.mubr.f32.mxu0 %v4532
    %4996 = vmatmul.mubr.f32.gmra.mxu0 %v4531
    %v4997 = vpop.f32.mrf.mxu0
    %v4998 = vadd.f32 %v4853, %v4997
    %v4999 = vpop.f32.mrf.mxu0
    %5000 = vmatprep.mubr.f32.mxu0 %v4540
    %5001 = vmatmul.mubr.f32.gmra.mxu0 %v4539
    %v5002 = vpop.f32.mrf.mxu0
    %v5003 = vadd.f32 %v4858, %v5002
    %v5004 = vpop.f32.mrf.mxu0
    %5005 = vmatprep.mubr.f32.mxu0 %v4548
    %5006 = vmatmul.mubr.f32.gmra.mxu0 %v4547
    %v5007 = vpop.f32.mrf.mxu0
    %v5008 = vadd.f32 %v4863, %v5007
    %v5009 = vpop.f32.mrf.mxu0
    %5010 = vmatprep.mubr.f32.mxu0 %v4556
    %5011 = vmatmul.mubr.f32.gmra.mxu0 %v4555
    %v5012 = vpop.f32.mrf.mxu0
    %v5013 = vadd.f32 %v4868, %v5012
    %v5014 = vpop.f32.mrf.mxu0
    %5015 = vmatprep.mubr.f32.mxu0 %v4564
    %5016 = vmatmul.mubr.f32.gmra.mxu0 %v4563
    %v5017 = vpop.f32.mrf.mxu0
    %v5018 = vadd.f32 %v4873, %v5017
    %v5019 = vpop.f32.mrf.mxu0
    %5020 = vmatprep.mubr.f32.mxu0 %v4572
    %5021 = vmatmul.mubr.f32.gmra.mxu0 %v4571
    %v5022 = vpop.f32.mrf.mxu0
    %v5023 = vadd.f32 %v4878, %v5022
    %v5024 = vpop.f32.mrf.mxu0
    %5025 = vmatprep.mubr.f32.mxu0 %v4580
    %5026 = vmatmul.mubr.f32.gmra.mxu0 %v4579
    %v5027 = vpop.f32.mrf.mxu0
    %v5028 = vadd.f32 %v4883, %v5027
    %v5029 = vpop.f32.mrf.mxu0
    %5030 = vmatprep.mubr.f32.mxu0 %v4588
    %5031 = vmatmul.mubr.f32.gmra.mxu0 %v4587
    %v5032 = vpop.f32.mrf.mxu0
    %v5033 = vadd.f32 %v4888, %v5032
    %v5034 = vpop.f32.mrf.mxu0
    %5035 = vmatprep.mubr.f32.mxu0 %v4596
    %5036 = vmatmul.mubr.f32.gmra.mxu0 %v4595
    %v5037 = vpop.f32.mrf.mxu0
    %v5038 = vadd.f32 %v4893, %v5037
    %v5039 = vpop.f32.mrf.mxu0
    %5040 = vmatprep.mubr.f32.mxu0 %v4604
    %5041 = vmatmul.mubr.f32.gmra.mxu0 %v4603
    %v5042 = vpop.f32.mrf.mxu0
    %v5043 = vadd.f32 %v4898, %v5042
    %v5044 = vpop.f32.mrf.mxu0
    %5045 = vmatprep.mubr.f32.mxu0 %v4612
    %5046 = vmatmul.mubr.f32.gmra.mxu0 %v4611
    %v5047 = vpop.f32.mrf.mxu0
    %v5048 = vadd.f32 %v4903, %v5047
    %v5049 = vpop.f32.mrf.mxu0
    %5050 = vmatprep.mubr.f32.mxu0 %v4620
    %5051 = vmatmul.mubr.f32.gmra.mxu0 %v4619
    %v5052 = vpop.f32.mrf.mxu0
    %v5053 = vadd.f32 %v4908, %v5052
    %v5054 = vpop.f32.mrf.mxu0
    %5055 = vmatprep.mubr.f32.mxu0 %v4628
    %5056 = vmatmul.mubr.f32.gmra.mxu0 %v4627
    %v5057 = vpop.f32.mrf.mxu0
    %v5058 = vadd.f32 %v4913, %v5057
    %v5059 = vpop.f32.mrf.mxu0
    %5060 = vmatprep.mubr.f32.mxu0 %v4636
    %5061 = vmatmul.mubr.f32.gmra.mxu0 %v4635
    %v5062 = vpop.f32.mrf.mxu0
    %v5063 = vadd.f32 %v4918, %v5062
    %v5064 = vpop.f32.mrf.mxu0
    %5065 = vdwg.mxu0
    %5066 = vmatprep.subr.mxu0 0.0
    %5067 = vmatpush1.msra.mxu0 %v4720
    %5068 = vmatprep.subr.mxu0 0.0
    %5069 = vmatpush1.msra.mxu0 %v4719
    %5070 = vmatprep.subr.mxu0 0.0
    %5071 = vmatpush1.msra.mxu0 %v4718
    %5072 = vmatprep.subr.mxu0 0.0
    %5073 = vmatpush1.msra.mxu0 %v4717
    %5074 = vmatprep.subr.mxu0 0.0
    %5075 = vmatpush1.msra.mxu0 %v4716
    %5076 = vmatprep.subr.mxu0 0.0
    %5077 = vmatpush1.msra.mxu0 %v4715
    %5078 = vmatprep.subr.mxu0 0.0
    %5079 = vmatpush1.msra.mxu0 %v4714
    %5080 = vmatprep.subr.mxu0 0.0
    %5081 = vmatpush1.msra.mxu0 %v4713
    %5082 = vmatprep.subr.mxu0 0.0
    %5083 = vmatpush1.msra.mxu0 %v4712
    %5084 = vmatprep.subr.mxu0 0.0
    %5085 = vmatpush1.msra.mxu0 %v4711
    %5086 = vmatprep.subr.mxu0 0.0
    %5087 = vmatpush1.msra.mxu0 %v4710
    %5088 = vmatprep.subr.mxu0 0.0
    %5089 = vmatpush1.msra.mxu0 %v4709
    %5090 = vmatprep.subr.mxu0 0.0
    %5091 = vmatpush1.msra.mxu0 %v4708
    %5092 = vmatprep.subr.mxu0 0.0
    %5093 = vmatpush1.msra.mxu0 %v4707
    %5094 = vmatprep.subr.mxu0 0.0
    %5095 = vmatpush1.msra.mxu0 %v4706
    %5096 = vmatprep.subr.mxu0 0.0
    %5097 = vmatpush1.msra.mxu0 %v4705
    %5098 = vmatprep.subr.mxu0 0.0
    %5099 = vmatpush2.msra.mxu0 %v4736
    %5100 = vmatprep.subr.mxu0 0.0
    %5101 = vmatpush2.msra.mxu0 %v4735
    %5102 = vmatprep.subr.mxu0 0.0
    %5103 = vmatpush2.msra.mxu0 %v4734
    %5104 = vmatprep.subr.mxu0 0.0
    %5105 = vmatpush2.msra.mxu0 %v4733
    %5106 = vmatprep.subr.mxu0 0.0
    %5107 = vmatpush2.msra.mxu0 %v4732
    %5108 = vmatprep.subr.mxu0 0.0
    %5109 = vmatpush2.msra.mxu0 %v4731
    %5110 = vmatprep.subr.mxu0 0.0
    %5111 = vmatpush2.msra.mxu0 %v4730
    %5112 = vmatprep.subr.mxu0 0.0
    %5113 = vmatpush2.msra.mxu0 %v4729
    %5114 = vmatprep.subr.mxu0 0.0
    %5115 = vmatpush2.msra.mxu0 %v4728
    %5116 = vmatprep.subr.mxu0 0.0
    %5117 = vmatpush2.msra.mxu0 %v4727
    %5118 = vmatprep.subr.mxu0 0.0
    %5119 = vmatpush2.msra.mxu0 %v4726
    %5120 = vmatprep.subr.mxu0 0.0
    %5121 = vmatpush2.msra.mxu0 %v4725
    %5122 = vmatprep.subr.mxu0 0.0
    %5123 = vmatpush2.msra.mxu0 %v4724
    %5124 = vmatprep.subr.mxu0 0.0
    %5125 = vmatpush2.msra.mxu0 %v4723
    %5126 = vmatprep.subr.mxu0 0.0
    %5127 = vmatpush2.msra.mxu0 %v4722
    %5128 = vmatprep.subr.mxu0 0.0
    %5129 = vmatpush2.msra.mxu0 %v4721
    %5130 = vmatprep.mubr.f32.mxu0 %v4518
    %5131 = vmatmul.mubr.f32.gmra.mxu0 %v4517
    %v5132 = vpop.f32.mrf.mxu0
    %v5133 = vadd.f32 %v4988, %v5132
    %v5134 = vpop.f32.mrf.mxu0
    %5135 = vmatprep.mubr.f32.mxu0 %v4526
    %5136 = vmatmul.mubr.f32.gmra.mxu0 %v4525
    %v5137 = vpop.f32.mrf.mxu0
    %v5138 = vadd.f32 %v4993, %v5137
    %v5139 = vpop.f32.mrf.mxu0
    %5140 = vmatprep.mubr.f32.mxu0 %v4534
    %5141 = vmatmul.mubr.f32.gmra.mxu0 %v4533
    %v5142 = vpop.f32.mrf.mxu0
    %v5143 = vadd.f32 %v4998, %v5142
    %v5144 = vpop.f32.mrf.mxu0
    %5145 = vmatprep.mubr.f32.mxu0 %v4542
    %5146 = vmatmul.mubr.f32.gmra.mxu0 %v4541
    %v5147 = vpop.f32.mrf.mxu0
    %v5148 = vadd.f32 %v5003, %v5147
    %v5149 = vpop.f32.mrf.mxu0
    %5150 = vmatprep.mubr.f32.mxu0 %v4550
    %5151 = vmatmul.mubr.f32.gmra.mxu0 %v4549
    %v5152 = vpop.f32.mrf.mxu0
    %v5153 = vadd.f32 %v5008, %v5152
    %v5154 = vpop.f32.mrf.mxu0
    %5155 = vmatprep.mubr.f32.mxu0 %v4558
    %5156 = vmatmul.mubr.f32.gmra.mxu0 %v4557
    %v5157 = vpop.f32.mrf.mxu0
    %v5158 = vadd.f32 %v5013, %v5157
    %v5159 = vpop.f32.mrf.mxu0
    %5160 = vmatprep.mubr.f32.mxu0 %v4566
    %5161 = vmatmul.mubr.f32.gmra.mxu0 %v4565
    %v5162 = vpop.f32.mrf.mxu0
    %v5163 = vadd.f32 %v5018, %v5162
    %v5164 = vpop.f32.mrf.mxu0
    %5165 = vmatprep.mubr.f32.mxu0 %v4574
    %5166 = vmatmul.mubr.f32.gmra.mxu0 %v4573
    %v5167 = vpop.f32.mrf.mxu0
    %v5168 = vadd.f32 %v5023, %v5167
    %v5169 = vpop.f32.mrf.mxu0
    %5170 = vmatprep.mubr.f32.mxu0 %v4582
    %5171 = vmatmul.mubr.f32.gmra.mxu0 %v4581
    %v5172 = vpop.f32.mrf.mxu0
    %v5173 = vadd.f32 %v5028, %v5172
    %v5174 = vpop.f32.mrf.mxu0
    %5175 = vmatprep.mubr.f32.mxu0 %v4590
    %5176 = vmatmul.mubr.f32.gmra.mxu0 %v4589
    %v5177 = vpop.f32.mrf.mxu0
    %v5178 = vadd.f32 %v5033, %v5177
    %v5179 = vpop.f32.mrf.mxu0
    %5180 = vmatprep.mubr.f32.mxu0 %v4598
    %5181 = vmatmul.mubr.f32.gmra.mxu0 %v4597
    %v5182 = vpop.f32.mrf.mxu0
    %v5183 = vadd.f32 %v5038, %v5182
    %v5184 = vpop.f32.mrf.mxu0
    %5185 = vmatprep.mubr.f32.mxu0 %v4606
    %5186 = vmatmul.mubr.f32.gmra.mxu0 %v4605
    %v5187 = vpop.f32.mrf.mxu0
    %v5188 = vadd.f32 %v5043, %v5187
    %v5189 = vpop.f32.mrf.mxu0
    %5190 = vmatprep.mubr.f32.mxu0 %v4614
    %5191 = vmatmul.mubr.f32.gmra.mxu0 %v4613
    %v5192 = vpop.f32.mrf.mxu0
    %v5193 = vadd.f32 %v5048, %v5192
    %v5194 = vpop.f32.mrf.mxu0
    %5195 = vmatprep.mubr.f32.mxu0 %v4622
    %5196 = vmatmul.mubr.f32.gmra.mxu0 %v4621
    %v5197 = vpop.f32.mrf.mxu0
    %v5198 = vadd.f32 %v5053, %v5197
    %v5199 = vpop.f32.mrf.mxu0
    %5200 = vmatprep.mubr.f32.mxu0 %v4630
    %5201 = vmatmul.mubr.f32.gmra.mxu0 %v4629
    %v5202 = vpop.f32.mrf.mxu0
    %v5203 = vadd.f32 %v5058, %v5202
    %v5204 = vpop.f32.mrf.mxu0
    %5205 = vmatprep.mubr.f32.mxu0 %v4638
    %5206 = vmatmul.mubr.f32.gmra.mxu0 %v4637
    %v5207 = vpop.f32.mrf.mxu0
    %v5208 = vadd.f32 %v5063, %v5207
    %v5209 = vpop.f32.mrf.mxu0
    %5210 = vdwg.mxu0
    %5211 = vmatprep.subr.mxu0 0.0
    %5212 = vmatpush1.msra.mxu0 %v4752
    %5213 = vmatprep.subr.mxu0 0.0
    %5214 = vmatpush1.msra.mxu0 %v4751
    %5215 = vmatprep.subr.mxu0 0.0
    %5216 = vmatpush1.msra.mxu0 %v4750
    %5217 = vmatprep.subr.mxu0 0.0
    %5218 = vmatpush1.msra.mxu0 %v4749
    %5219 = vmatprep.subr.mxu0 0.0
    %5220 = vmatpush1.msra.mxu0 %v4748
    %5221 = vmatprep.subr.mxu0 0.0
    %5222 = vmatpush1.msra.mxu0 %v4747
    %5223 = vmatprep.subr.mxu0 0.0
    %5224 = vmatpush1.msra.mxu0 %v4746
    %5225 = vmatprep.subr.mxu0 0.0
    %5226 = vmatpush1.msra.mxu0 %v4745
    %5227 = vmatprep.subr.mxu0 0.0
    %5228 = vmatpush1.msra.mxu0 %v4744
    %5229 = vmatprep.subr.mxu0 0.0
    %5230 = vmatpush1.msra.mxu0 %v4743
    %5231 = vmatprep.subr.mxu0 0.0
    %5232 = vmatpush1.msra.mxu0 %v4742
    %5233 = vmatprep.subr.mxu0 0.0
    %5234 = vmatpush1.msra.mxu0 %v4741
    %5235 = vmatprep.subr.mxu0 0.0
    %5236 = vmatpush1.msra.mxu0 %v4740
    %5237 = vmatprep.subr.mxu0 0.0
    %5238 = vmatpush1.msra.mxu0 %v4739
    %5239 = vmatprep.subr.mxu0 0.0
    %5240 = vmatpush1.msra.mxu0 %v4738
    %5241 = vmatprep.subr.mxu0 0.0
    %5242 = vmatpush1.msra.mxu0 %v4737
    %5243 = vmatprep.subr.mxu0 0.0
    %5244 = vmatpush2.msra.mxu0 %v4768
    %5245 = vmatprep.subr.mxu0 0.0
    %5246 = vmatpush2.msra.mxu0 %v4767
    %5247 = vmatprep.subr.mxu0 0.0
    %5248 = vmatpush2.msra.mxu0 %v4766
    %5249 = vmatprep.subr.mxu0 0.0
    %5250 = vmatpush2.msra.mxu0 %v4765
    %5251 = vmatprep.subr.mxu0 0.0
    %5252 = vmatpush2.msra.mxu0 %v4764
    %5253 = vmatprep.subr.mxu0 0.0
    %5254 = vmatpush2.msra.mxu0 %v4763
    %5255 = vmatprep.subr.mxu0 0.0
    %5256 = vmatpush2.msra.mxu0 %v4762
    %5257 = vmatprep.subr.mxu0 0.0
    %5258 = vmatpush2.msra.mxu0 %v4761
    %5259 = vmatprep.subr.mxu0 0.0
    %5260 = vmatpush2.msra.mxu0 %v4760
    %5261 = vmatprep.subr.mxu0 0.0
    %5262 = vmatpush2.msra.mxu0 %v4759
    %5263 = vmatprep.subr.mxu0 0.0
    %5264 = vmatpush2.msra.mxu0 %v4758
    %5265 = vmatprep.subr.mxu0 0.0
    %5266 = vmatpush2.msra.mxu0 %v4757
    %5267 = vmatprep.subr.mxu0 0.0
    %5268 = vmatpush2.msra.mxu0 %v4756
    %5269 = vmatprep.subr.mxu0 0.0
    %5270 = vmatpush2.msra.mxu0 %v4755
    %5271 = vmatprep.subr.mxu0 0.0
    %5272 = vmatpush2.msra.mxu0 %v4754
    %5273 = vmatprep.subr.mxu0 0.0
    %5274 = vmatpush2.msra.mxu0 %v4753
    %5275 = vmatprep.mubr.f32.mxu0 %v4520
    %5276 = vmatmul.mubr.f32.gmra.mxu0 %v4519
    %v5277 = vpop.f32.mrf.mxu0
    %v5278 = vadd.f32 %v5133, %v5277
    %v5279 = vpop.f32.mrf.mxu0
    %5280 = vmatprep.mubr.f32.mxu0 %v4528
    %5281 = vmatmul.mubr.f32.gmra.mxu0 %v4527
    %v5282 = vpop.f32.mrf.mxu0
    %v5283 = vadd.f32 %v5138, %v5282
    %v5284 = vpop.f32.mrf.mxu0
    %5285 = vmatprep.mubr.f32.mxu0 %v4536
    %5286 = vmatmul.mubr.f32.gmra.mxu0 %v4535
    %v5287 = vpop.f32.mrf.mxu0
    %v5288 = vadd.f32 %v5143, %v5287
    %v5289 = vpop.f32.mrf.mxu0
    %5290 = vmatprep.mubr.f32.mxu0 %v4544
    %5291 = vmatmul.mubr.f32.gmra.mxu0 %v4543
    %v5292 = vpop.f32.mrf.mxu0
    %v5293 = vadd.f32 %v5148, %v5292
    %v5294 = vpop.f32.mrf.mxu0
    %5295 = vmatprep.mubr.f32.mxu0 %v4552
    %5296 = vmatmul.mubr.f32.gmra.mxu0 %v4551
    %v5297 = vpop.f32.mrf.mxu0
    %v5298 = vadd.f32 %v5153, %v5297
    %v5299 = vpop.f32.mrf.mxu0
    %5300 = vmatprep.mubr.f32.mxu0 %v4560
    %5301 = vmatmul.mubr.f32.gmra.mxu0 %v4559
    %v5302 = vpop.f32.mrf.mxu0
    %v5303 = vadd.f32 %v5158, %v5302
    %v5304 = vpop.f32.mrf.mxu0
    %5305 = vmatprep.mubr.f32.mxu0 %v4568
    %5306 = vmatmul.mubr.f32.gmra.mxu0 %v4567
    %v5307 = vpop.f32.mrf.mxu0
    %v5308 = vadd.f32 %v5163, %v5307
    %v5309 = vpop.f32.mrf.mxu0
    %5310 = vmatprep.mubr.f32.mxu0 %v4576
    %5311 = vmatmul.mubr.f32.gmra.mxu0 %v4575
    %v5312 = vpop.f32.mrf.mxu0
    %v5313 = vadd.f32 %v5168, %v5312
    %v5314 = vpop.f32.mrf.mxu0
    %5315 = vmatprep.mubr.f32.mxu0 %v4584
    %5316 = vmatmul.mubr.f32.gmra.mxu0 %v4583
    %v5317 = vpop.f32.mrf.mxu0
    %v5318 = vadd.f32 %v5173, %v5317
    %v5319 = vpop.f32.mrf.mxu0
    %5320 = vmatprep.mubr.f32.mxu0 %v4592
    %5321 = vmatmul.mubr.f32.gmra.mxu0 %v4591
    %v5322 = vpop.f32.mrf.mxu0
    %v5323 = vadd.f32 %v5178, %v5322
    %v5324 = vpop.f32.mrf.mxu0
    %5325 = vmatprep.mubr.f32.mxu0 %v4600
    %5326 = vmatmul.mubr.f32.gmra.mxu0 %v4599
    %v5327 = vpop.f32.mrf.mxu0
    %v5328 = vadd.f32 %v5183, %v5327
    %v5329 = vpop.f32.mrf.mxu0
    %5330 = vmatprep.mubr.f32.mxu0 %v4608
    %5331 = vmatmul.mubr.f32.gmra.mxu0 %v4607
    %v5332 = vpop.f32.mrf.mxu0
    %v5333 = vadd.f32 %v5188, %v5332
    %v5334 = vpop.f32.mrf.mxu0
    %5335 = vmatprep.mubr.f32.mxu0 %v4616
    %5336 = vmatmul.mubr.f32.gmra.mxu0 %v4615
    %v5337 = vpop.f32.mrf.mxu0
    %v5338 = vadd.f32 %v5193, %v5337
    %v5339 = vpop.f32.mrf.mxu0
    %5340 = vmatprep.mubr.f32.mxu0 %v4624
    %5341 = vmatmul.mubr.f32.gmra.mxu0 %v4623
    %v5342 = vpop.f32.mrf.mxu0
    %v5343 = vadd.f32 %v5198, %v5342
    %v5344 = vpop.f32.mrf.mxu0
    %5345 = vmatprep.mubr.f32.mxu0 %v4632
    %5346 = vmatmul.mubr.f32.gmra.mxu0 %v4631
    %v5347 = vpop.f32.mrf.mxu0
    %v5348 = vadd.f32 %v5203, %v5347
    %v5349 = vpop.f32.mrf.mxu0
    %5350 = vmatprep.mubr.f32.mxu0 %v4640
    %5351 = vmatmul.mubr.f32.gmra.mxu0 %v4639
    %v5352 = vpop.f32.mrf.mxu0
    %v5353 = vadd.f32 %v5208, %v5352
    %v5354 = vpop.f32.mrf.mxu0
    %5355 = vdwg.mxu0
    %v5356 = vmax.f32 %v5278, 0.0
    %v5357 = vmax.f32 %v5283, 0.0
    %v5358 = vmax.f32 %v5288, 0.0
    %v5359 = vmax.f32 %v5293, 0.0
    %v5360 = vmax.f32 %v5298, 0.0
    %v5361 = vmax.f32 %v5303, 0.0
    %v5362 = vmax.f32 %v5308, 0.0
    %v5363 = vmax.f32 %v5313, 0.0
    %v5364 = vmax.f32 %v5318, 0.0
    %v5365 = vmax.f32 %v5323, 0.0
    %v5366 = vmax.f32 %v5328, 0.0
    %v5367 = vmax.f32 %v5333, 0.0
    %v5368 = vmax.f32 %v5338, 0.0
    %v5369 = vmax.f32 %v5343, 0.0
    %v5370 = vmax.f32 %v5348, 0.0
    %v5371 = vmax.f32 %v5353, 0.0
    %5372 = vst [vmem:[#allocation20] sm:$0xff] %v5356
    %5373 = vst [vmem:[#allocation20 + $0x8] sm:$0xff] %v5357
    %5374 = vst [vmem:[#allocation20 + $0x10] sm:$0xff] %v5358
    %5375 = vst [vmem:[#allocation20 + $0x18] sm:$0xff] %v5359
    %5376 = vst [vmem:[#allocation20 + $0x20] sm:$0xff] %v5360
    %5377 = vst [vmem:[#allocation20 + $0x28] sm:$0xff] %v5361
    %5378 = vst [vmem:[#allocation20 + $0x30] sm:$0xff] %v5362
    %5379 = vst [vmem:[#allocation20 + $0x38] sm:$0xff] %v5363
    %5380 = vst [vmem:[#allocation20 + $0x40] sm:$0xff] %v5364
    %5381 = vst [vmem:[#allocation20 + $0x48] sm:$0xff] %v5365
    %5382 = vst [vmem:[#allocation20 + $0x50] sm:$0xff] %v5366
    %5383 = vst [vmem:[#allocation20 + $0x58] sm:$0xff] %v5367
    %5384 = vst [vmem:[#allocation20 + $0x60] sm:$0xff] %v5368
    %5385 = vst [vmem:[#allocation20 + $0x68] sm:$0xff] %v5369
    %5386 = vst [vmem:[#allocation20 + $0x70] sm:$0xff] %v5370
    %5387 = vst [vmem:[#allocation20 + $0x78] sm:$0xff] %v5371
    // Predicated region
    $region98: #{tpu_custom_call.1} parent=1 // pred_check
      _
    $region99: #{tpu_custom_call.1} parent=1 // pred_check_branch
      %5389 = sbr.rel (0) target = $region101
    $region100: #{tpu_custom_call.1} parent=1 // pred_region
      %s5391 = ssub.s32 2048, 2048
      %5392 = vsyncadd [#allocation4], %s5391
      %s5393 = sshll.u32 [#allocation20], 4
      %s5394 = int_to_ptr.vmem [resolvable:$true] %s5393
      %5399 = dma.vmem_to_hbm [thread:$0]  %s5394, 2048, %s13, [#allocation4], 128, 128, 8
    $region101: #{tpu_custom_call.1} parent=1 // pred_fallthru
      _
    // Predicated region
    $region102: #{tpu_custom_call.1} parent=1 // pred_check
      _
    $region103: #{tpu_custom_call.1} parent=1 // pred_check_branch
      %5401 = sbr.rel (0) target = $region105
    $region104: #{tpu_custom_call.1} parent=1 // pred_region
      %5402 = dma.done [#allocation4], 2048
    $region105: #{tpu_custom_call.1} parent=1 // pred_fallthru
      _
    %5403 = vsyncpa [#allocation3], 1
    %5404 = vsyncpa [#allocation6], 1
    %5405 = vsyncpa [#allocation9], 1
    %5406 = vsyncpa [#allocation12], 1
    %5407 = vsyncpa [#allocation15], 1
    %5408 = vsyncpa [#allocation18], 1
    %5409 = vsyncpa [#allocation4], 1

</llo_original>
